<compile_context>
chip_gen: v6e
topology: v6e:2x2x1
jax: 0.10.0
libtpu: 0.0.40
codegen_flags: <defaults>
</compile_context>

<pallas_src>
import jax
import jax.numpy as jnp
from jax import lax
from jax.experimental import pallas as pl
from jax.experimental.pallas import tpu as pltpu

D_STATE = 256     # state (LSTM hidden) feature size
D_REPLY = 300     # reply embedding feature size
H1, H2, H3 = 256, 256, 128
N_FLAG = 10       # first 10 candidates get feature-0 := 1.0, the rest := 0.0


def _policy_kernel(state_c_ref, reply_ref, b1f_ref, w1r_ref,
                   w2_ref, b2_ref, w3_ref, b3_ref, w4_ref, b4_ref,
                   out_ref):
    f32 = jnp.float32
    bf16 = jnp.bfloat16
    TB, R = out_ref.shape[1], out_ref.shape[2]

    # Layer 1: reply part on the MXU with M = TB*R rows.  The state@W1s
    # contribution (state_c) and the flag-adjusted bias (b1f) were hoisted to
    # the wrapper; here they are just broadcast-adds.
    h = jnp.dot(reply_ref[...], w1r_ref[...], preferred_element_type=f32)   # (TB*R, H1) f32
    h = h.reshape(TB, R, H1)
    h = h + state_c_ref[...][:, None, :] + b1f_ref[...][None, :, :]
    h = jnp.maximum(h, 0.0).reshape(TB * R, H1)

    # Layers 2 and 3: cast to bf16 only at the MXU boundary, accumulate f32.
    h = jnp.dot(h.astype(bf16), w2_ref[...], preferred_element_type=f32) + b2_ref[...]
    h = jnp.maximum(h, 0.0)
    h = jnp.dot(h.astype(bf16), w3_ref[...], preferred_element_type=f32) + b3_ref[...]
    h = jnp.maximum(h, 0.0)                                                  # (TB*R, H3)

    # Layer 4 (128 -> 1): elementwise mul + lane reduction (XLU slot).
    h = h.reshape(TB, R, H3)
    score = jnp.sum(h * w4_ref[...][None, :, :], axis=-1) + b4_ref[...]      # (TB, R)

    # log_softmax over the candidate axis (torch dim=-2).
    m = jnp.max(score, axis=-1, keepdims=True)
    lse = jnp.log(jnp.sum(jnp.exp(score - m), axis=-1, keepdims=True)) + m
    out_ref[0] = (score - lse).astype(out_ref.dtype)


def _pick_tb(bt, r, max_rows=1024):
    """Largest divisor of bt keeping the per-step matmul M = tb*r <= max_rows."""
    best = 1
    for d in range(1, bt + 1):
        if bt % d == 0 and d * r <= max_rows:
            best = d
    return best


def rnn_model_forward(state, reply, params):
    """state: [B, T, 256] f32, reply: [B, T, R, 300] f32 -> [B, T, R, 1] f32."""
    B, T, H = state.shape
    _, _, R, DR = reply.shape
    assert H == D_STATE and DR == D_REPLY
    w1s, w1r, b1, w2, b2, w3, b3, w4, b4 = params

    BT = B * T
    TB = _pick_tb(BT, R)
    NB = BT // TB
    rows = TB * R
    hp = lax.Precision.HIGHEST

    # Hoisted work (one batched XLA GEMM + tiny elementwise ops):
    # torch overwrites feature 0 of [state|reply] with (r<10 ? 1 : 0).  So the
    # layer-1 result is (state with feat-0 zeroed)@W1s + reply@W1r + b1 +
    # flag(r)*W1s[0,:].
    state_f = state.reshape(BT, H).astype(jnp.float32)
    state_z = state_f.at[:, 0].set(0.0)
    state_c = jnp.dot(state_z, w1s, precision=hp)                  # (BT, H1) f32
    flag = (jnp.arange(R) < N_FLAG).astype(jnp.float32)
    b1f = b1 + flag[:, None] * w1s[0:1, :]                         # (R, H1) f32

    # bf16 operands for the MXU (accumulation stays f32 inside the kernel).
    reply2 = reply.reshape(BT * R, DR).astype(jnp.bfloat16)
    w1r_b = w1r.astype(jnp.bfloat16)
    w2_b = w2.astype(jnp.bfloat16)
    w3_b = w3.astype(jnp.bfloat16)
    b4_2d = b4.reshape(1, 1)

    out = pl.pallas_call(
        _policy_kernel,
        out_shape=jax.ShapeDtypeStruct((NB, TB, R), jnp.float32),
        grid_spec=pltpu.PrefetchScalarGridSpec(
            num_scalar_prefetch=0,
            grid=(NB,),
            in_specs=[
                pl.BlockSpec((TB, H1), lambda i: (i, 0)),      # state_c  (per step)
                pl.BlockSpec((rows, DR), lambda i: (i, 0)),    # reply    (per step, bf16)
                pl.BlockSpec((R, H1), lambda i: (0, 0)),       # b1 + flag*W1[0,:]
                pl.BlockSpec((DR, H1), lambda i: (0, 0)),      # W1 reply part (bf16)
                pl.BlockSpec((H1, H2), lambda i: (0, 0)),      # W2 (bf16)
                pl.BlockSpec((1, H2), lambda i: (0, 0)),       # b2
                pl.BlockSpec((H2, H3), lambda i: (0, 0)),      # W3 (bf16)
                pl.BlockSpec((1, H3), lambda i: (0, 0)),       # b3
                pl.BlockSpec((1, H3), lambda i: (0, 0)),       # W4 (row vector, f32)
                pl.BlockSpec((1, 1), lambda i: (0, 0)),        # b4
            ],
            out_specs=pl.BlockSpec((1, TB, R), lambda i: (i, 0, 0)),
        ),
        compiler_params=pltpu.CompilerParams(
            dimension_semantics=("parallel",)),
    )(state_c, reply2, b1f, w1r_b, w2_b, b2, w3_b, b3, w4, b4_2d)

    return out.reshape(B, T, R, 1)


def init_params(key):
    """Deterministic synthetic weights, PyTorch-Linear-style uniform(-1/sqrt(fan_in))."""
    ks = jax.random.split(key, 4)

    def lin(k, fan_in, fan_out):
        bound = 1.0 / float(fan_in) ** 0.5
        kw, kb = jax.random.split(k)
        w = jax.random.uniform(kw, (fan_in, fan_out), jnp.float32, -bound, bound)
        b = jax.random.uniform(kb, (1, fan_out), jnp.float32, -bound, bound)
        return w, b

    w1, b1 = lin(ks[0], D_STATE + D_REPLY, H1)        # (556, 256): [state | reply] features
    w1s, w1r = w1[:D_STATE], w1[D_STATE:]             # (256,256), (300,256)
    w2, b2 = lin(ks[1], H1, H2)                       # (256, 256)
    w3, b3 = lin(ks[2], H2, H3)                       # (256, 128)
    w4, b4 = lin(ks[3], H3, 1)                        # (128, 1)
    w4 = jnp.transpose(w4).reshape(1, H3)             # row vector for lane reduce
    return (w1s, w1r, b1, w2, b2, w3, b3, w4, b4)


def reference_forward(state, reply, params):
    """Pure-JAX f32 reference of RnnModel.forward for validation."""
    w1s, w1r, b1, w2, b2, w3, b3, w4, b4 = params
    B, T, R, DR = reply.shape
    x_state = jnp.broadcast_to(state[:, :, None, :], (B, T, R, D_STATE))
    x = jnp.concatenate([x_state, reply], axis=-1)
    flag = (jnp.arange(R) < N_FLAG).astype(jnp.float32)
    x = x.at[..., 0].set(jnp.broadcast_to(flag[None, None, :], (B, T, R)))
    w1 = jnp.concatenate([w1s, w1r], axis=0)
    hp = lax.Precision.HIGHEST
    h = jax.nn.relu(jnp.einsum("btrd,dh->btrh", x, w1, precision=hp) + b1[0])
    h = jax.nn.relu(jnp.einsum("btrd,dh->btrh", h, w2, precision=hp) + b2[0])
    h = jax.nn.relu(jnp.einsum("btrd,dh->btrh", h, w3, precision=hp) + b3[0])
    score = jnp.sum(h * w4[0], axis=-1, keepdims=True) + b4[0]
    return jax.nn.log_softmax(score, axis=-2)


if __name__ == "__main__":
    key = jax.random.PRNGKey(0)
    k_param, k_state, k_reply = jax.random.split(key, 3)

    B, T, R = 2, 8, 16
    params = init_params(k_param)
    state = jax.random.normal(k_state, (B, T, D_STATE), jnp.float32)
    reply = jax.random.normal(k_reply, (B, T, R, D_REPLY), jnp.float32)

    out = jax.block_until_ready(rnn_model_forward(state, reply, params))
    assert out.shape == (B, T, R, 1), out.shape

    ref = jax.block_until_ready(reference_forward(state, reply, params))
    if not jnp.allclose(out, ref, atol=5e-2, rtol=5e-2):
        max_err = jnp.max(jnp.abs(out - ref))
        raise AssertionError(f"Pallas kernel mismatch vs reference, max |err| = {max_err}")

    print("KERNEL_OK")
</pallas_src>

<mosaic_0001>
module attributes {stable_mosaic.version = 11 : i64} {
  func.func @_policy_kernel(%arg0: i32, %arg1: memref<16x256xf32, #tpu.memory_space<vmem>>, %arg2: memref<256x300xbf16, #tpu.memory_space<vmem>>, %arg3: memref<16x256xf32, #tpu.memory_space<vmem>>, %arg4: memref<300x256xbf16, #tpu.memory_space<vmem>>, %arg5: memref<256x256xbf16, #tpu.memory_space<vmem>>, %arg6: memref<1x256xf32, #tpu.memory_space<vmem>>, %arg7: memref<256x128xbf16, #tpu.memory_space<vmem>>, %arg8: memref<1x128xf32, #tpu.memory_space<vmem>>, %arg9: memref<1x128xf32, #tpu.memory_space<vmem>>, %arg10: memref<1x1xf32, #tpu.memory_space<vmem>>, %arg11: memref<1x16x16xf32, #tpu.memory_space<vmem>>) attributes {dimension_semantics = [#tpu.dimension_semantics<parallel>], iteration_bounds = array<i64: 1>, scalar_prefetch = 0 : i64, scratch_operands = 0 : i64, tpu.core_type = #tpu.core_type<tc>, window_params = [{transform_indices = @transform_0, window_bounds = array<i64: 16, 256>}, {transform_indices = @transform_1, window_bounds = array<i64: 256, 300>}, {pipeline_mode = #tpu.pipeline_mode<synchronous>, transform_indices = @transform_2, window_bounds = array<i64: 16, 256>}, {pipeline_mode = #tpu.pipeline_mode<synchronous>, transform_indices = @transform_3, window_bounds = array<i64: 300, 256>}, {pipeline_mode = #tpu.pipeline_mode<synchronous>, transform_indices = @transform_4, window_bounds = array<i64: 256, 256>}, {pipeline_mode = #tpu.pipeline_mode<synchronous>, transform_indices = @transform_5, window_bounds = array<i64: 1, 256>}, {pipeline_mode = #tpu.pipeline_mode<synchronous>, transform_indices = @transform_6, window_bounds = array<i64: 256, 128>}, {pipeline_mode = #tpu.pipeline_mode<synchronous>, transform_indices = @transform_7, window_bounds = array<i64: 1, 128>}, {pipeline_mode = #tpu.pipeline_mode<synchronous>, transform_indices = @transform_8, window_bounds = array<i64: 1, 128>}, {pipeline_mode = #tpu.pipeline_mode<synchronous>, transform_indices = @transform_9, window_bounds = array<i64: 1, 1>}, {transform_indices = @transform_10, window_bounds = array<i64: 1, 16, 16>}]} {
    %c0 = arith.constant 0 : index
    %c0_0 = arith.constant 0 : index
    %0 = vector.load %arg2[%c0, %c0_0] : memref<256x300xbf16, #tpu.memory_space<vmem>>, vector<256x300xbf16>
    %c0_1 = arith.constant 0 : index
    %c0_2 = arith.constant 0 : index
    %1 = vector.load %arg4[%c0_1, %c0_2] : memref<300x256xbf16, #tpu.memory_space<vmem>>, vector<300x256xbf16>
    %cst = arith.constant dense<0.000000e+00> : vector<256x256xf32>
    %2 = tpu.matmul %0, %1, %cst {dimension_numbers = #tpu.dot_dimension_numbers<[1], [0], [0], [1], [0, 0, 1, 1], [], []>} : vector<256x300xbf16>, vector<300x256xbf16>, vector<256x256xf32> -> vector<256x256xf32>
    %3 = vector.shape_cast %2 : vector<256x256xf32> to vector<16x16x256xf32>
    %c0_3 = arith.constant 0 : index
    %c0_4 = arith.constant 0 : index
    %4 = vector.load %arg1[%c0_3, %c0_4] : memref<16x256xf32, #tpu.memory_space<vmem>>, vector<16x256xf32>
    %5 = vector.shape_cast %4 : vector<16x256xf32> to vector<16x1x256xf32>
    %6 = vector.broadcast %5 : vector<16x1x256xf32> to vector<16x16x256xf32>
    %7 = arith.addf %3, %6 : vector<16x16x256xf32>
    %c0_5 = arith.constant 0 : index
    %c0_6 = arith.constant 0 : index
    %8 = vector.load %arg3[%c0_5, %c0_6] : memref<16x256xf32, #tpu.memory_space<vmem>>, vector<16x256xf32>
    %9 = vector.shape_cast %8 : vector<16x256xf32> to vector<1x16x256xf32>
    %10 = vector.broadcast %9 : vector<1x16x256xf32> to vector<16x16x256xf32>
    %11 = arith.addf %7, %10 : vector<16x16x256xf32>
    %cst_7 = arith.constant 0.000000e+00 : f32
    %12 = vector.broadcast %cst_7 : f32 to vector<16x16x256xf32>
    %13 = arith.maximumf %11, %12 : vector<16x16x256xf32>
    %14 = vector.shape_cast %13 : vector<16x16x256xf32> to vector<256x256xf32>
    %15 = arith.truncf %14 : vector<256x256xf32> to vector<256x256xbf16>
    %c0_8 = arith.constant 0 : index
    %c0_9 = arith.constant 0 : index
    %16 = vector.load %arg5[%c0_8, %c0_9] : memref<256x256xbf16, #tpu.memory_space<vmem>>, vector<256x256xbf16>
    %cst_10 = arith.constant dense<0.000000e+00> : vector<256x256xf32>
    %17 = tpu.matmul %15, %16, %cst_10 {dimension_numbers = #tpu.dot_dimension_numbers<[1], [0], [0], [1], [0, 0, 1, 1], [], []>} : vector<256x256xbf16>, vector<256x256xbf16>, vector<256x256xf32> -> vector<256x256xf32>
    %c0_11 = arith.constant 0 : index
    %c0_12 = arith.constant 0 : index
    %18 = vector.load %arg6[%c0_11, %c0_12] : memref<1x256xf32, #tpu.memory_space<vmem>>, vector<1x256xf32>
    %19 = vector.broadcast %18 : vector<1x256xf32> to vector<256x256xf32>
    %20 = arith.addf %17, %19 : vector<256x256xf32>
    %cst_13 = arith.constant 0.000000e+00 : f32
    %21 = vector.broadcast %cst_13 : f32 to vector<256x256xf32>
    %22 = arith.maximumf %20, %21 : vector<256x256xf32>
    %23 = arith.truncf %22 : vector<256x256xf32> to vector<256x256xbf16>
    %c0_14 = arith.constant 0 : index
    %c0_15 = arith.constant 0 : index
    %24 = vector.load %arg7[%c0_14, %c0_15] : memref<256x128xbf16, #tpu.memory_space<vmem>>, vector<256x128xbf16>
    %cst_16 = arith.constant dense<0.000000e+00> : vector<256x128xf32>
    %25 = tpu.matmul %23, %24, %cst_16 {dimension_numbers = #tpu.dot_dimension_numbers<[1], [0], [0], [1], [0, 0, 1, 1], [], []>} : vector<256x256xbf16>, vector<256x128xbf16>, vector<256x128xf32> -> vector<256x128xf32>
    %c0_17 = arith.constant 0 : index
    %c0_18 = arith.constant 0 : index
    %26 = vector.load %arg8[%c0_17, %c0_18] : memref<1x128xf32, #tpu.memory_space<vmem>>, vector<1x128xf32>
    %27 = vector.broadcast %26 : vector<1x128xf32> to vector<256x128xf32>
    %28 = arith.addf %25, %27 : vector<256x128xf32>
    %cst_19 = arith.constant 0.000000e+00 : f32
    %29 = vector.broadcast %cst_19 : f32 to vector<256x128xf32>
    %30 = arith.maximumf %28, %29 : vector<256x128xf32>
    %31 = vector.shape_cast %30 : vector<256x128xf32> to vector<16x16x128xf32>
    %c0_20 = arith.constant 0 : index
    %c0_21 = arith.constant 0 : index
    %32 = vector.load %arg9[%c0_20, %c0_21] : memref<1x128xf32, #tpu.memory_space<vmem>>, vector<1x128xf32>
    %33 = vector.shape_cast %32 : vector<1x128xf32> to vector<1x1x128xf32>
    %34 = vector.broadcast %33 : vector<1x1x128xf32> to vector<16x16x128xf32>
    %35 = arith.mulf %31, %34 : vector<16x16x128xf32>
    %cst_22 = arith.constant dense<0.000000e+00> : vector<16x16xf32>
    %36 = vector.multi_reduction <add>, %35, %cst_22 [2] : vector<16x16x128xf32> to vector<16x16xf32>
    %c0_23 = arith.constant 0 : index
    %c0_24 = arith.constant 0 : index
    %37 = vector.load %arg10[%c0_23, %c0_24] : memref<1x1xf32, #tpu.memory_space<vmem>>, vector<1x1xf32>
    %38 = vector.broadcast %37 : vector<1x1xf32> to vector<16x16xf32>
    %39 = arith.addf %36, %38 : vector<16x16xf32>
    %cst_25 = arith.constant dense<0xFF800000> : vector<16xf32>
    %40 = vector.multi_reduction <maximumf>, %39, %cst_25 [1] : vector<16x16xf32> to vector<16xf32>
    %41 = vector.shape_cast %40 : vector<16xf32> to vector<16x1xf32>
    %42 = vector.broadcast %41 : vector<16x1xf32> to vector<16x16xf32>
    %43 = arith.subf %39, %42 : vector<16x16xf32>
    %44 = math.exp %43 : vector<16x16xf32>
    %cst_26 = arith.constant dense<0.000000e+00> : vector<16xf32>
    %45 = vector.multi_reduction <add>, %44, %cst_26 [1] : vector<16x16xf32> to vector<16xf32>
    %46 = vector.shape_cast %45 : vector<16xf32> to vector<16x1xf32>
    %47 = math.log %46 : vector<16x1xf32>
    %48 = arith.addf %47, %41 : vector<16x1xf32>
    %49 = vector.broadcast %48 : vector<16x1xf32> to vector<16x16xf32>
    %50 = arith.subf %39, %49 : vector<16x16xf32>
    %c0_27 = arith.constant 0 : index
    %c0_28 = arith.constant 0 : index
    %c0_29 = arith.constant 0 : index
    %51 = vector.load %arg11[%c0_27, %c0_28, %c0_29] : memref<1x16x16xf32, #tpu.memory_space<vmem>>, vector<1x16x16xf32>
    %52 = vector.shape_cast %51 : vector<1x16x16xf32> to vector<16x16xf32>
    %53 = vector.shape_cast %50 : vector<16x16xf32> to vector<1x16x16xf32>
    tpu.vector_store %arg11[%c0_27, %c0_28, %c0_29], %53 {strides = array<i32>} : memref<1x16x16xf32, #tpu.memory_space<vmem>>, vector<1x16x16xf32>,
    return
  }
  func.func @transform_0(%arg0: i32) -> (i32, i32) {
    %c0_i32 = arith.constant 0 : i32
    %c0_i32_0 = arith.constant 0 : i32
    return %arg0, %c0_i32 : i32, i32
  }
  func.func @transform_1(%arg0: i32) -> (i32, i32) {
    %c0_i32 = arith.constant 0 : i32
    %c0_i32_0 = arith.constant 0 : i32
    return %arg0, %c0_i32 : i32, i32
  }
  func.func @transform_2(%arg0: i32) -> (i32, i32) {
    %c0_i32 = arith.constant 0 : i32
    %c0_i32_0 = arith.constant 0 : i32
    %c0_i32_1 = arith.constant 0 : i32
    return %c0_i32, %c0_i32_0 : i32, i32
  }
  func.func @transform_3(%arg0: i32) -> (i32, i32) {
    %c0_i32 = arith.constant 0 : i32
    %c0_i32_0 = arith.constant 0 : i32
    %c0_i32_1 = arith.constant 0 : i32
    return %c0_i32, %c0_i32_0 : i32, i32
  }
  func.func @transform_4(%arg0: i32) -> (i32, i32) {
    %c0_i32 = arith.constant 0 : i32
    %c0_i32_0 = arith.constant 0 : i32
    %c0_i32_1 = arith.constant 0 : i32
    return %c0_i32, %c0_i32_0 : i32, i32
  }
  func.func @transform_5(%arg0: i32) -> (i32, i32) {
    %c0_i32 = arith.constant 0 : i32
    %c0_i32_0 = arith.constant 0 : i32
    %c0_i32_1 = arith.constant 0 : i32
    return %c0_i32, %c0_i32_0 : i32, i32
  }
  func.func @transform_6(%arg0: i32) -> (i32, i32) {
    %c0_i32 = arith.constant 0 : i32
    %c0_i32_0 = arith.constant 0 : i32
    %c0_i32_1 = arith.constant 0 : i32
    return %c0_i32, %c0_i32_0 : i32, i32
  }
  func.func @transform_7(%arg0: i32) -> (i32, i32) {
    %c0_i32 = arith.constant 0 : i32
    %c0_i32_0 = arith.constant 0 : i32
    %c0_i32_1 = arith.constant 0 : i32
    return %c0_i32, %c0_i32_0 : i32, i32
  }
  func.func @transform_8(%arg0: i32) -> (i32, i32) {
    %c0_i32 = arith.constant 0 : i32
    %c0_i32_0 = arith.constant 0 : i32
    %c0_i32_1 = arith.constant 0 : i32
    return %c0_i32, %c0_i32_0 : i32, i32
  }
  func.func @transform_9(%arg0: i32) -> (i32, i32) {
    %c0_i32 = arith.constant 0 : i32
    %c0_i32_0 = arith.constant 0 : i32
    %c0_i32_1 = arith.constant 0 : i32
    return %c0_i32, %c0_i32_0 : i32, i32
  }
  func.func @transform_10(%arg0: i32) -> (i32, i32, i32) {
    %c0_i32 = arith.constant 0 : i32
    %c0_i32_0 = arith.constant 0 : i32
    %c0_i32_1 = arith.constant 0 : i32
    return %arg0, %c0_i32, %c0_i32_0 : i32, i32, i32
  }
}

</mosaic_0001>

<llo_original>
// kernel: tpu_custom_call.1
$region0: #{tpu_custom_call.1}
  #allocation0 [shape = 'u32[]', space=smem, size = 0x4, offset = 0x4, fixed_abs, tag = 'smem constant byte address 0x4 - core index']
  #allocation1 [shape = 'u32[144,128]{1,0:T(1,128)}', space=vmem, size = 0x12000, scoped, tag = 'internal scratch']
  #allocation2 [shape = 'f32[1,1]{1,0:T(1,128)S(1)}', space=vmem, size = 0x200, scoped, tag = 'scoped memory for tpu_custom_call.1']
  %s0 = inlined_call_operand.hbm [shape: f32[16,256], index: 0, kind: input, shape index: {}]
  %s1 = inlined_call_operand.vmem [shape: bf16[256,300], index: 1, kind: input, shape index: {}]
  %s2 = inlined_call_operand.hbm [shape: f32[16,256], index: 2, kind: input, shape index: {}]
  %s3 = inlined_call_operand.vmem [shape: bf16[300,256], index: 3, kind: input, shape index: {}]
  %s4 = inlined_call_operand.vmem [shape: bf16[256,256], index: 4, kind: input, shape index: {}]
  %s5 = inlined_call_operand.vmem [shape: f32[1,256], index: 5, kind: input, shape index: {}]
  %s6 = inlined_call_operand.vmem [shape: bf16[256,128], index: 6, kind: input, shape index: {}]
  %s7 = inlined_call_operand.vmem [shape: f32[1,128], index: 7, kind: input, shape index: {}]
  %s8 = inlined_call_operand.vmem [shape: f32[1,128], index: 8, kind: input, shape index: {}]
  %s9 = inlined_call_operand.<no memory space> [shape: f32[1,1], index: 9, kind: input, shape index: {}]
  %s10 = inlined_call_operand.hbm [shape: f32[1,16,16], index: 10, kind: output, shape index: {}]
  %s11 = sld [smem:[#allocation0]]
  $region58: #{tpu_custom_call.1} parent=0
    _
  %s13 = ssub.s32 1, %s11
  %s14 = scalar_select 0, %s13, %s11
  %v15 = vstv %s9
  %16 = vst [vmem:[#allocation2] sm:$0x1] %v15
  $region1: #{tpu_custom_call.1} parent=0
    #allocation3 [shape = 'u8[16384]{0}', space=vmem, size = 0x4000, scoped, tag = 'input window, operand 0, single buffered']
    #allocation4 [shape = 's32[1]{0}', space=sflag, size = 0x4, scoped, tag = 'scoped memory for tpu_custom_call.1']
    #allocation5 [shape = 's32[1]{0}', space=sflag, size = 0x4, scoped, tag = 'scoped memory for tpu_custom_call.1']
    #allocation6 [shape = 'u8[16384]{0}', space=vmem, size = 0x4000, scoped, tag = 'input window, operand 2, single buffered']
    #allocation7 [shape = 's32[1]{0}', space=sflag, size = 0x4, scoped, tag = 'scoped memory for tpu_custom_call.1']
    #allocation8 [shape = 'u8[8192]{0}', space=vmem, size = 0x2000, scoped, tag = 'output window, operand 0, single buffered']
    %17 = vsyncpa [#allocation4], 0
    %18 = vsyncpa [#allocation7], 0
    %19 = vsyncpa [#allocation5], 0
    // Predicated region
    $region2: #{tpu_custom_call.1} parent=1 // pred_check
      _
    $region3: #{tpu_custom_call.1} parent=1 // pred_check_branch
      %21 = sbr.rel (0) target = $region5
    $region4: #{tpu_custom_call.1} parent=1 // pred_region
      %s23 = ssub.s32 512, 512
      %24 = vsyncadd [#allocation4], %s23
      %s25 = sshll.u32 [#allocation3], 4
      %s26 = int_to_ptr.vmem [resolvable:$true] %s25
      %31 = dma.hbm_to_vmem [thread:$0]  %s0, 512, %s26, [#allocation4], 256, 256, 16
    $region5: #{tpu_custom_call.1} parent=1 // pred_fallthru
      _
    // Predicated region
    $region6: #{tpu_custom_call.1} parent=1 // pred_check
      _
    $region7: #{tpu_custom_call.1} parent=1 // pred_check_branch
      %33 = sbr.rel (0) target = $region9
    $region8: #{tpu_custom_call.1} parent=1 // pred_region
      _
    $region9: #{tpu_custom_call.1} parent=1 // pred_fallthru
      _
    // Predicated region
    $region10: #{tpu_custom_call.1} parent=1 // pred_check
      _
    $region11: #{tpu_custom_call.1} parent=1 // pred_check_branch
      %35 = sbr.rel (0) target = $region13
    $region12: #{tpu_custom_call.1} parent=1 // pred_region
      %s37 = ssub.s32 512, 512
      %38 = vsyncadd [#allocation7], %s37
      %s39 = sshll.u32 [#allocation6], 4
      %s40 = int_to_ptr.vmem [resolvable:$true] %s39
      %45 = dma.hbm_to_vmem [thread:$0]  %s2, 512, %s40, [#allocation7], 256, 256, 16
    $region13: #{tpu_custom_call.1} parent=1 // pred_fallthru
      _
    // Predicated region
    $region14: #{tpu_custom_call.1} parent=1 // pred_check
      _
    $region15: #{tpu_custom_call.1} parent=1 // pred_check_branch
      %47 = sbr.rel (0) target = $region17
    $region16: #{tpu_custom_call.1} parent=1 // pred_region
      _
    $region17: #{tpu_custom_call.1} parent=1 // pred_fallthru
      _
    // Predicated region
    $region18: #{tpu_custom_call.1} parent=1 // pred_check
      _
    $region19: #{tpu_custom_call.1} parent=1 // pred_check_branch
      %49 = sbr.rel (0) target = $region21
    $region20: #{tpu_custom_call.1} parent=1 // pred_region
      _
    $region21: #{tpu_custom_call.1} parent=1 // pred_fallthru
      _
    // Predicated region
    $region22: #{tpu_custom_call.1} parent=1 // pred_check
      _
    $region23: #{tpu_custom_call.1} parent=1 // pred_check_branch
      %51 = sbr.rel (0) target = $region25
    $region24: #{tpu_custom_call.1} parent=1 // pred_region
      _
    $region25: #{tpu_custom_call.1} parent=1 // pred_fallthru
      _
    // Predicated region
    $region26: #{tpu_custom_call.1} parent=1 // pred_check
      _
    $region27: #{tpu_custom_call.1} parent=1 // pred_check_branch
      %53 = sbr.rel (0) target = $region29
    $region28: #{tpu_custom_call.1} parent=1 // pred_region
      _
    $region29: #{tpu_custom_call.1} parent=1 // pred_fallthru
      _
    // Predicated region
    $region30: #{tpu_custom_call.1} parent=1 // pred_check
      _
    $region31: #{tpu_custom_call.1} parent=1 // pred_check_branch
      %55 = sbr.rel (0) target = $region33
    $region32: #{tpu_custom_call.1} parent=1 // pred_region
      _
    $region33: #{tpu_custom_call.1} parent=1 // pred_fallthru
      _
    // Predicated region
    $region34: #{tpu_custom_call.1} parent=1 // pred_check
      _
    $region35: #{tpu_custom_call.1} parent=1 // pred_check_branch
      %57 = sbr.rel (0) target = $region37
    $region36: #{tpu_custom_call.1} parent=1 // pred_region
      _
    $region37: #{tpu_custom_call.1} parent=1 // pred_fallthru
      _
    // Predicated region
    $region38: #{tpu_custom_call.1} parent=1 // pred_check
      _
    $region39: #{tpu_custom_call.1} parent=1 // pred_check_branch
      %59 = sbr.rel (0) target = $region41
    $region40: #{tpu_custom_call.1} parent=1 // pred_region
      _
    $region41: #{tpu_custom_call.1} parent=1 // pred_fallthru
      _
    // Predicated region
    $region42: #{tpu_custom_call.1} parent=1 // pred_check
      _
    $region43: #{tpu_custom_call.1} parent=1 // pred_check_branch
      %61 = sbr.rel (0) target = $region45
    $region44: #{tpu_custom_call.1} parent=1 // pred_region
      %62 = dma.done [#allocation4], 512
    $region45: #{tpu_custom_call.1} parent=1 // pred_fallthru
      _
    // Predicated region
    $region46: #{tpu_custom_call.1} parent=1 // pred_check
      _
    $region47: #{tpu_custom_call.1} parent=1 // pred_check_branch
      %64 = sbr.rel (0) target = $region49
    $region48: #{tpu_custom_call.1} parent=1 // pred_region
      %65 = dma.done [#allocation7], 512
    $region49: #{tpu_custom_call.1} parent=1 // pred_fallthru
      _
    %v67 = vld [vmem:[%s1] sm:$0xff]
    %v68 = vld [vmem:[%s1 + $0x8] sm:$0xf]
    %v69 = vld [vmem:[%s1 + $0xc] sm:$0xff]
    %v70 = vld [vmem:[%s1 + $0x14] sm:$0xf]
    %v71 = vld [vmem:[%s1 + $0x18] sm:$0xff]
    %v72 = vld [vmem:[%s1 + $0x20] sm:$0xf]
    %v73 = vld [vmem:[%s1 + $0x24] sm:$0xff]
    %v74 = vld [vmem:[%s1 + $0x2c] sm:$0xf]
    %v75 = vld [vmem:[%s1 + $0x30] sm:$0xff]
    %v76 = vld [vmem:[%s1 + $0x38] sm:$0xf]
    %v77 = vld [vmem:[%s1 + $0x3c] sm:$0xff]
    %v78 = vld [vmem:[%s1 + $0x44] sm:$0xf]
    %v79 = vld [vmem:[%s1 + $0x48] sm:$0xff]
    %v80 = vld [vmem:[%s1 + $0x50] sm:$0xf]
    %v81 = vld [vmem:[%s1 + $0x54] sm:$0xff]
    %v82 = vld [vmem:[%s1 + $0x5c] sm:$0xf]
    %v83 = vld [vmem:[%s1 + $0x60] sm:$0xff]
    %v84 = vld [vmem:[%s1 + $0x68] sm:$0xf]
    %v85 = vld [vmem:[%s1 + $0x6c] sm:$0xff]
    %v86 = vld [vmem:[%s1 + $0x74] sm:$0xf]
    %v87 = vld [vmem:[%s1 + $0x78] sm:$0xff]
    %v88 = vld [vmem:[%s1 + $0x80] sm:$0xf]
    %v89 = vld [vmem:[%s1 + $0x84] sm:$0xff]
    %v90 = vld [vmem:[%s1 + $0x8c] sm:$0xf]
    %v91 = vld [vmem:[%s1 + $0x90] sm:$0xff]
    %v92 = vld [vmem:[%s1 + $0x98] sm:$0xf]
    %v93 = vld [vmem:[%s1 + $0x9c] sm:$0xff]
    %v94 = vld [vmem:[%s1 + $0xa4] sm:$0xf]
    %v95 = vld [vmem:[%s1 + $0xa8] sm:$0xff]
    %v96 = vld [vmem:[%s1 + $0xb0] sm:$0xf]
    %v97 = vld [vmem:[%s1 + $0xb4] sm:$0xff]
    %v98 = vld [vmem:[%s1 + $0xbc] sm:$0xf]
    %v99 = vld [vmem:[%s1 + $0xc0] sm:$0xff]
    %v100 = vld [vmem:[%s1 + $0xc8] sm:$0xf]
    %v101 = vld [vmem:[%s1 + $0xcc] sm:$0xff]
    %v102 = vld [vmem:[%s1 + $0xd4] sm:$0xf]
    %v103 = vld [vmem:[%s1 + $0xd8] sm:$0xff]
    %v104 = vld [vmem:[%s1 + $0xe0] sm:$0xf]
    %v105 = vld [vmem:[%s1 + $0xe4] sm:$0xff]
    %v106 = vld [vmem:[%s1 + $0xec] sm:$0xf]
    %v107 = vld [vmem:[%s1 + $0xf0] sm:$0xff]
    %v108 = vld [vmem:[%s1 + $0xf8] sm:$0xf]
    %v109 = vld [vmem:[%s1 + $0xfc] sm:$0xff]
    %v110 = vld [vmem:[%s1 + $0x104] sm:$0xf]
    %v111 = vld [vmem:[%s1 + $0x108] sm:$0xff]
    %v112 = vld [vmem:[%s1 + $0x110] sm:$0xf]
    %v113 = vld [vmem:[%s1 + $0x114] sm:$0xff]
    %v114 = vld [vmem:[%s1 + $0x11c] sm:$0xf]
    %v115 = vld [vmem:[%s1 + $0x120] sm:$0xff]
    %v116 = vld [vmem:[%s1 + $0x128] sm:$0xf]
    %v117 = vld [vmem:[%s1 + $0x12c] sm:$0xff]
    %v118 = vld [vmem:[%s1 + $0x134] sm:$0xf]
    %v119 = vld [vmem:[%s1 + $0x138] sm:$0xff]
    %v120 = vld [vmem:[%s1 + $0x140] sm:$0xf]
    %v121 = vld [vmem:[%s1 + $0x144] sm:$0xff]
    %v122 = vld [vmem:[%s1 + $0x14c] sm:$0xf]
    %v123 = vld [vmem:[%s1 + $0x150] sm:$0xff]
    %v124 = vld [vmem:[%s1 + $0x158] sm:$0xf]
    %v125 = vld [vmem:[%s1 + $0x15c] sm:$0xff]
    %v126 = vld [vmem:[%s1 + $0x164] sm:$0xf]
    %v127 = vld [vmem:[%s1 + $0x168] sm:$0xff]
    %v128 = vld [vmem:[%s1 + $0x170] sm:$0xf]
    %v129 = vld [vmem:[%s1 + $0x174] sm:$0xff]
    %v130 = vld [vmem:[%s1 + $0x17c] sm:$0xf]
    %v131 = vld [vmem:[%s3] sm:$0xff]
    %v132 = vld [vmem:[%s3 + $0x8] sm:$0xff]
    %v133 = vld [vmem:[%s3 + $0x10] sm:$0xff]
    %v134 = vld [vmem:[%s3 + $0x18] sm:$0xff]
    %v135 = vld [vmem:[%s3 + $0x20] sm:$0xff]
    %v136 = vld [vmem:[%s3 + $0x28] sm:$0xff]
    %v137 = vld [vmem:[%s3 + $0x30] sm:$0xff]
    %v138 = vld [vmem:[%s3 + $0x38] sm:$0xff]
    %v139 = vld [vmem:[%s3 + $0x40] sm:$0xff]
    %v140 = vld [vmem:[%s3 + $0x48] sm:$0xff]
    %v141 = vld [vmem:[%s3 + $0x50] sm:$0xff]
    %v142 = vld [vmem:[%s3 + $0x58] sm:$0xff]
    %v143 = vld [vmem:[%s3 + $0x60] sm:$0xff]
    %v144 = vld [vmem:[%s3 + $0x68] sm:$0xff]
    %v145 = vld [vmem:[%s3 + $0x70] sm:$0xff]
    %v146 = vld [vmem:[%s3 + $0x78] sm:$0xff]
    %v147 = vld [vmem:[%s3 + $0x80] sm:$0xff]
    %v148 = vld [vmem:[%s3 + $0x88] sm:$0xff]
    %v149 = vld [vmem:[%s3 + $0x90] sm:$0xff]
    %v150 = vld [vmem:[%s3 + $0x98] sm:$0xff]
    %v151 = vld [vmem:[%s3 + $0xa0] sm:$0xff]
    %v152 = vld [vmem:[%s3 + $0xa8] sm:$0xff]
    %v153 = vld [vmem:[%s3 + $0xb0] sm:$0xff]
    %v154 = vld [vmem:[%s3 + $0xb8] sm:$0xff]
    %v155 = vld [vmem:[%s3 + $0xc0] sm:$0xff]
    %v156 = vld [vmem:[%s3 + $0xc8] sm:$0xff]
    %v157 = vld [vmem:[%s3 + $0xd0] sm:$0xff]
    %v158 = vld [vmem:[%s3 + $0xd8] sm:$0xff]
    %v159 = vld [vmem:[%s3 + $0xe0] sm:$0xff]
    %v160 = vld [vmem:[%s3 + $0xe8] sm:$0xff]
    %v161 = vld [vmem:[%s3 + $0xf0] sm:$0xff]
    %v162 = vld [vmem:[%s3 + $0xf8] sm:$0xff]
    %v163 = vld [vmem:[%s3 + $0x100] sm:$0xff]
    %v164 = vld [vmem:[%s3 + $0x108] sm:$0xff]
    %v165 = vld [vmem:[%s3 + $0x110] sm:$0xff]
    %v166 = vld [vmem:[%s3 + $0x118] sm:$0xff]
    %v167 = vld [vmem:[%s3 + $0x120] sm:$0xff]
    %v168 = vld [vmem:[%s3 + $0x128] sm:$0x33]
    %v233 = vunpack.c.l.b16 %v67
    %v234 = vunpack.c.h.b16 %v67
    %v235 = vunpack.c.l.b16 %v68
    %v236 = vunpack.c.l.b16 %v69
    %v237 = vunpack.c.h.b16 %v69
    %v238 = vunpack.c.l.b16 %v70
    %v239 = vunpack.c.l.b16 %v71
    %v240 = vunpack.c.h.b16 %v71
    %v241 = vunpack.c.l.b16 %v72
    %v242 = vunpack.c.l.b16 %v73
    %v243 = vunpack.c.h.b16 %v73
    %v244 = vunpack.c.l.b16 %v74
    %v245 = vunpack.c.l.b16 %v75
    %v246 = vunpack.c.h.b16 %v75
    %v247 = vunpack.c.l.b16 %v76
    %v248 = vunpack.c.l.b16 %v77
    %v249 = vunpack.c.h.b16 %v77
    %v250 = vunpack.c.l.b16 %v78
    %v251 = vunpack.c.l.b16 %v79
    %v252 = vunpack.c.h.b16 %v79
    %v253 = vunpack.c.l.b16 %v80
    %v254 = vunpack.c.l.b16 %v81
    %v255 = vunpack.c.h.b16 %v81
    %v256 = vunpack.c.l.b16 %v82
    %v257 = vunpack.c.l.b16 %v83
    %v258 = vunpack.c.h.b16 %v83
    %v259 = vunpack.c.l.b16 %v84
    %v260 = vunpack.c.l.b16 %v85
    %v261 = vunpack.c.h.b16 %v85
    %v262 = vunpack.c.l.b16 %v86
    %v263 = vunpack.c.l.b16 %v87
    %v264 = vunpack.c.h.b16 %v87
    %v265 = vunpack.c.l.b16 %v88
    %v266 = vunpack.c.l.b16 %v89
    %v267 = vunpack.c.h.b16 %v89
    %v268 = vunpack.c.l.b16 %v90
    %v269 = vunpack.c.l.b16 %v91
    %v270 = vunpack.c.h.b16 %v91
    %v271 = vunpack.c.l.b16 %v92
    %v272 = vunpack.c.l.b16 %v93
    %v273 = vunpack.c.h.b16 %v93
    %v274 = vunpack.c.l.b16 %v94
    %v275 = vunpack.c.l.b16 %v95
    %v276 = vunpack.c.h.b16 %v95
    %v277 = vunpack.c.l.b16 %v96
    %v278 = vunpack.c.l.b16 %v97
    %v279 = vunpack.c.h.b16 %v97
    %v280 = vunpack.c.l.b16 %v98
    %v281 = vunpack.c.l.b16 %v99
    %v282 = vunpack.c.h.b16 %v99
    %v283 = vunpack.c.l.b16 %v100
    %v284 = vunpack.c.l.b16 %v101
    %v285 = vunpack.c.h.b16 %v101
    %v286 = vunpack.c.l.b16 %v102
    %v287 = vunpack.c.l.b16 %v103
    %v288 = vunpack.c.h.b16 %v103
    %v289 = vunpack.c.l.b16 %v104
    %v290 = vunpack.c.l.b16 %v105
    %v291 = vunpack.c.h.b16 %v105
    %v292 = vunpack.c.l.b16 %v106
    %v293 = vunpack.c.l.b16 %v107
    %v294 = vunpack.c.h.b16 %v107
    %v295 = vunpack.c.l.b16 %v108
    %v296 = vunpack.c.l.b16 %v109
    %v297 = vunpack.c.h.b16 %v109
    %v298 = vunpack.c.l.b16 %v110
    %v299 = vunpack.c.l.b16 %v111
    %v300 = vunpack.c.h.b16 %v111
    %v301 = vunpack.c.l.b16 %v112
    %v302 = vunpack.c.l.b16 %v113
    %v303 = vunpack.c.h.b16 %v113
    %v304 = vunpack.c.l.b16 %v114
    %v305 = vunpack.c.l.b16 %v115
    %v306 = vunpack.c.h.b16 %v115
    %v307 = vunpack.c.l.b16 %v116
    %v308 = vunpack.c.l.b16 %v117
    %v309 = vunpack.c.h.b16 %v117
    %v310 = vunpack.c.l.b16 %v118
    %v311 = vunpack.c.l.b16 %v119
    %v312 = vunpack.c.h.b16 %v119
    %v313 = vunpack.c.l.b16 %v120
    %v314 = vunpack.c.l.b16 %v121
    %v315 = vunpack.c.h.b16 %v121
    %v316 = vunpack.c.l.b16 %v122
    %v317 = vunpack.c.l.b16 %v123
    %v318 = vunpack.c.h.b16 %v123
    %v319 = vunpack.c.l.b16 %v124
    %v320 = vunpack.c.l.b16 %v125
    %v321 = vunpack.c.h.b16 %v125
    %v322 = vunpack.c.l.b16 %v126
    %v323 = vunpack.c.l.b16 %v127
    %v324 = vunpack.c.h.b16 %v127
    %v325 = vunpack.c.l.b16 %v128
    %v326 = vunpack.c.l.b16 %v129
    %v327 = vunpack.c.h.b16 %v129
    %v328 = vunpack.c.l.b16 %v130
    %v329 = vpack.c.b16 %v236, %v233
    %v330 = vpack.c.b16 %v237, %v234
    %v331 = vpack.c.b16 %v238, %v235
    %v332 = vpack.c.b16 %v242, %v239
    %v333 = vpack.c.b16 %v243, %v240
    %v334 = vpack.c.b16 %v244, %v241
    %v335 = vpack.c.b16 %v248, %v245
    %v336 = vpack.c.b16 %v249, %v246
    %v337 = vpack.c.b16 %v250, %v247
    %v338 = vpack.c.b16 %v254, %v251
    %v339 = vpack.c.b16 %v255, %v252
    %v340 = vpack.c.b16 %v256, %v253
    %v341 = vpack.c.b16 %v260, %v257
    %v342 = vpack.c.b16 %v261, %v258
    %v343 = vpack.c.b16 %v262, %v259
    %v344 = vpack.c.b16 %v266, %v263
    %v345 = vpack.c.b16 %v267, %v264
    %v346 = vpack.c.b16 %v268, %v265
    %v347 = vpack.c.b16 %v272, %v269
    %v348 = vpack.c.b16 %v273, %v270
    %v349 = vpack.c.b16 %v274, %v271
    %v350 = vpack.c.b16 %v278, %v275
    %v351 = vpack.c.b16 %v279, %v276
    %v352 = vpack.c.b16 %v280, %v277
    %v353 = vpack.c.b16 %v284, %v281
    %v354 = vpack.c.b16 %v285, %v282
    %v355 = vpack.c.b16 %v286, %v283
    %v356 = vpack.c.b16 %v290, %v287
    %v357 = vpack.c.b16 %v291, %v288
    %v358 = vpack.c.b16 %v292, %v289
    %v359 = vpack.c.b16 %v296, %v293
    %v360 = vpack.c.b16 %v297, %v294
    %v361 = vpack.c.b16 %v298, %v295
    %v362 = vpack.c.b16 %v302, %v299
    %v363 = vpack.c.b16 %v303, %v300
    %v364 = vpack.c.b16 %v304, %v301
    %v365 = vpack.c.b16 %v308, %v305
    %v366 = vpack.c.b16 %v309, %v306
    %v367 = vpack.c.b16 %v310, %v307
    %v368 = vpack.c.b16 %v314, %v311
    %v369 = vpack.c.b16 %v315, %v312
    %v370 = vpack.c.b16 %v316, %v313
    %v371 = vpack.c.b16 %v320, %v317
    %v372 = vpack.c.b16 %v321, %v318
    %v373 = vpack.c.b16 %v322, %v319
    %v374 = vpack.c.b16 %v326, %v323
    %v375 = vpack.c.b16 %v327, %v324
    %v376 = vpack.c.b16 %v328, %v325
    %v447 = vunpack.c.l.b16 %v131
    %v448 = vunpack.c.h.b16 %v131
    %v449 = vunpack.c.l.b16 %v132
    %v450 = vunpack.c.h.b16 %v132
    %v451 = vunpack.c.l.b16 %v133
    %v452 = vunpack.c.h.b16 %v133
    %v453 = vunpack.c.l.b16 %v134
    %v454 = vunpack.c.h.b16 %v134
    %v455 = vunpack.c.l.b16 %v135
    %v456 = vunpack.c.h.b16 %v135
    %v457 = vunpack.c.l.b16 %v136
    %v458 = vunpack.c.h.b16 %v136
    %v459 = vunpack.c.l.b16 %v137
    %v460 = vunpack.c.h.b16 %v137
    %v461 = vunpack.c.l.b16 %v138
    %v462 = vunpack.c.h.b16 %v138
    %v463 = vunpack.c.l.b16 %v139
    %v464 = vunpack.c.h.b16 %v139
    %v465 = vunpack.c.l.b16 %v140
    %v466 = vunpack.c.h.b16 %v140
    %v467 = vunpack.c.l.b16 %v141
    %v468 = vunpack.c.h.b16 %v141
    %v469 = vunpack.c.l.b16 %v142
    %v470 = vunpack.c.h.b16 %v142
    %v471 = vunpack.c.l.b16 %v143
    %v472 = vunpack.c.h.b16 %v143
    %v473 = vunpack.c.l.b16 %v144
    %v474 = vunpack.c.h.b16 %v144
    %v475 = vunpack.c.l.b16 %v145
    %v476 = vunpack.c.h.b16 %v145
    %v477 = vunpack.c.l.b16 %v146
    %v478 = vunpack.c.h.b16 %v146
    %v479 = vunpack.c.l.b16 %v147
    %v480 = vunpack.c.h.b16 %v147
    %v481 = vunpack.c.l.b16 %v148
    %v482 = vunpack.c.h.b16 %v148
    %v483 = vunpack.c.l.b16 %v149
    %v484 = vunpack.c.h.b16 %v149
    %v485 = vunpack.c.l.b16 %v150
    %v486 = vunpack.c.h.b16 %v150
    %v487 = vunpack.c.l.b16 %v151
    %v488 = vunpack.c.h.b16 %v151
    %v489 = vunpack.c.l.b16 %v152
    %v490 = vunpack.c.h.b16 %v152
    %v491 = vunpack.c.l.b16 %v153
    %v492 = vunpack.c.h.b16 %v153
    %v493 = vunpack.c.l.b16 %v154
    %v494 = vunpack.c.h.b16 %v154
    %v495 = vunpack.c.l.b16 %v155
    %v496 = vunpack.c.h.b16 %v155
    %v497 = vunpack.c.l.b16 %v156
    %v498 = vunpack.c.h.b16 %v156
    %v499 = vunpack.c.l.b16 %v157
    %v500 = vunpack.c.h.b16 %v157
    %v501 = vunpack.c.l.b16 %v158
    %v502 = vunpack.c.h.b16 %v158
    %v503 = vunpack.c.l.b16 %v159
    %v504 = vunpack.c.h.b16 %v159
    %v505 = vunpack.c.l.b16 %v160
    %v506 = vunpack.c.h.b16 %v160
    %v507 = vunpack.c.l.b16 %v161
    %v508 = vunpack.c.h.b16 %v161
    %v509 = vunpack.c.l.b16 %v162
    %v510 = vunpack.c.h.b16 %v162
    %v511 = vunpack.c.l.b16 %v163
    %v512 = vunpack.c.h.b16 %v163
    %v513 = vunpack.c.l.b16 %v164
    %v514 = vunpack.c.h.b16 %v164
    %v515 = vunpack.c.l.b16 %v165
    %v516 = vunpack.c.h.b16 %v165
    %v517 = vunpack.c.l.b16 %v166
    %v518 = vunpack.c.h.b16 %v166
    %v519 = vunpack.c.l.b16 %v167
    %v520 = vunpack.c.h.b16 %v167
    %v521 = vunpack.c.l.b16 %v168
    %v522 = vunpack.c.h.b16 %v168
    %v523 = vpack.c.b16 %v449, %v447
    %v524 = vpack.c.b16 %v450, %v448
    %v525 = vpack.c.b16 %v453, %v451
    %v526 = vpack.c.b16 %v454, %v452
    %v527 = vpack.c.b16 %v457, %v455
    %v528 = vpack.c.b16 %v458, %v456
    %v529 = vpack.c.b16 %v461, %v459
    %v530 = vpack.c.b16 %v462, %v460
    %v531 = vpack.c.b16 %v465, %v463
    %v532 = vpack.c.b16 %v466, %v464
    %v533 = vpack.c.b16 %v469, %v467
    %v534 = vpack.c.b16 %v470, %v468
    %v535 = vpack.c.b16 %v473, %v471
    %v536 = vpack.c.b16 %v474, %v472
    %v537 = vpack.c.b16 %v477, %v475
    %v538 = vpack.c.b16 %v478, %v476
    %v539 = vpack.c.b16 %v481, %v479
    %v540 = vpack.c.b16 %v482, %v480
    %v541 = vpack.c.b16 %v485, %v483
    %v542 = vpack.c.b16 %v486, %v484
    %v543 = vpack.c.b16 %v489, %v487
    %v544 = vpack.c.b16 %v490, %v488
    %v545 = vpack.c.b16 %v493, %v491
    %v546 = vpack.c.b16 %v494, %v492
    %v547 = vpack.c.b16 %v497, %v495
    %v548 = vpack.c.b16 %v498, %v496
    %v549 = vpack.c.b16 %v501, %v499
    %v550 = vpack.c.b16 %v502, %v500
    %v551 = vpack.c.b16 %v505, %v503
    %v552 = vpack.c.b16 %v506, %v504
    %v553 = vpack.c.b16 %v509, %v507
    %v554 = vpack.c.b16 %v510, %v508
    %v555 = vpack.c.b16 %v513, %v511
    %v556 = vpack.c.b16 %v514, %v512
    %v557 = vpack.c.b16 %v517, %v515
    %v558 = vpack.c.b16 %v518, %v516
    %v559 = vpack.c.b16 %v521, %v519
    %v560 = vpack.c.b16 %v522, %v520
    %vm597 = vcmask 359424
    %v599 = vsel %vm597, %v331, 0
    %v602 = vsel %vm597, %v334, 0
    %v605 = vsel %vm597, %v337, 0
    %v608 = vsel %vm597, %v340, 0
    %v611 = vsel %vm597, %v343, 0
    %v614 = vsel %vm597, %v346, 0
    %v617 = vsel %vm597, %v349, 0
    %v620 = vsel %vm597, %v352, 0
    %v623 = vsel %vm597, %v355, 0
    %v626 = vsel %vm597, %v358, 0
    %v629 = vsel %vm597, %v361, 0
    %v632 = vsel %vm597, %v364, 0
    %v635 = vsel %vm597, %v367, 0
    %v638 = vsel %vm597, %v370, 0
    %v641 = vsel %vm597, %v373, 0
    %v644 = vsel %vm597, %v376, 0
    %vm646 = vcmask 1045504
    %v648 = vsel %vm646, %v559, 0
    %v651 = vsel %vm646, %v560, 0
    %653 = vmatprep.subr.bf16.mxu0 %v538
    %654 = vmatpush1.bf16.msra.mxu0 %v537
    %655 = vmatprep.subr.bf16.mxu0 %v536
    %656 = vmatpush1.bf16.msra.mxu0 %v535
    %657 = vmatprep.subr.bf16.mxu0 %v534
    %658 = vmatpush1.bf16.msra.mxu0 %v533
    %659 = vmatprep.subr.bf16.mxu0 %v532
    %660 = vmatpush1.bf16.msra.mxu0 %v531
    %661 = vmatprep.subr.bf16.mxu0 %v530
    %662 = vmatpush1.bf16.msra.mxu0 %v529
    %663 = vmatprep.subr.bf16.mxu0 %v528
    %664 = vmatpush1.bf16.msra.mxu0 %v527
    %665 = vmatprep.subr.bf16.mxu0 %v526
    %666 = vmatpush1.bf16.msra.mxu0 %v525
    %667 = vmatprep.subr.bf16.mxu0 %v524
    %668 = vmatpush1.bf16.msra.mxu0 %v523
    %669 = vmatprep.subr.bf16.mxu0 %v554
    %670 = vmatpush2.bf16.msra.mxu0 %v553
    %671 = vmatprep.subr.bf16.mxu0 %v552
    %672 = vmatpush2.bf16.msra.mxu0 %v551
    %673 = vmatprep.subr.bf16.mxu0 %v550
    %674 = vmatpush2.bf16.msra.mxu0 %v549
    %675 = vmatprep.subr.bf16.mxu0 %v548
    %676 = vmatpush2.bf16.msra.mxu0 %v547
    %677 = vmatprep.subr.bf16.mxu0 %v546
    %678 = vmatpush2.bf16.msra.mxu0 %v545
    %679 = vmatprep.subr.bf16.mxu0 %v544
    %680 = vmatpush2.bf16.msra.mxu0 %v543
    %681 = vmatprep.subr.bf16.mxu0 %v542
    %682 = vmatpush2.bf16.msra.mxu0 %v541
    %683 = vmatprep.subr.bf16.mxu0 %v540
    %684 = vmatpush2.bf16.msra.mxu0 %v539
    %685 = vmatprep.mubr.bf16.mxu0 %v330
    %686 = vmatmul.mubr.bf16.gmra.mxu0 %v329
    %v687 = vpop.f32.mrf.mxu0
    %v688 = vadd.f32 0.0, %v687
    %v689 = vpop.f32.mrf.mxu0
    %v690 = vadd.f32 0.0, %v689
    %v691 = vpop.f32.mrf.mxu0
    %v692 = vadd.f32 0.0, %v691
    %v693 = vpop.f32.mrf.mxu0
    %v694 = vadd.f32 0.0, %v693
    %695 = vmatprep.mubr.bf16.mxu0 %v333
    %696 = vmatmul.mubr.bf16.gmra.mxu0 %v332
    %v697 = vpop.f32.mrf.mxu0
    %v698 = vadd.f32 0.0, %v697
    %v699 = vpop.f32.mrf.mxu0
    %v700 = vadd.f32 0.0, %v699
    %v701 = vpop.f32.mrf.mxu0
    %v702 = vadd.f32 0.0, %v701
    %v703 = vpop.f32.mrf.mxu0
    %v704 = vadd.f32 0.0, %v703
    %705 = vmatprep.mubr.bf16.mxu0 %v336
    %706 = vmatmul.mubr.bf16.gmra.mxu0 %v335
    %v707 = vpop.f32.mrf.mxu0
    %v708 = vadd.f32 0.0, %v707
    %v709 = vpop.f32.mrf.mxu0
    %v710 = vadd.f32 0.0, %v709
    %v711 = vpop.f32.mrf.mxu0
    %v712 = vadd.f32 0.0, %v711
    %v713 = vpop.f32.mrf.mxu0
    %v714 = vadd.f32 0.0, %v713
    %715 = vmatprep.mubr.bf16.mxu0 %v339
    %716 = vmatmul.mubr.bf16.gmra.mxu0 %v338
    %v717 = vpop.f32.mrf.mxu0
    %v718 = vadd.f32 0.0, %v717
    %v719 = vpop.f32.mrf.mxu0
    %v720 = vadd.f32 0.0, %v719
    %v721 = vpop.f32.mrf.mxu0
    %v722 = vadd.f32 0.0, %v721
    %v723 = vpop.f32.mrf.mxu0
    %v724 = vadd.f32 0.0, %v723
    %725 = vmatprep.mubr.bf16.mxu0 %v342
    %726 = vmatmul.mubr.bf16.gmra.mxu0 %v341
    %v727 = vpop.f32.mrf.mxu0
    %v728 = vadd.f32 0.0, %v727
    %v729 = vpop.f32.mrf.mxu0
    %v730 = vadd.f32 0.0, %v729
    %v731 = vpop.f32.mrf.mxu0
    %v732 = vadd.f32 0.0, %v731
    %v733 = vpop.f32.mrf.mxu0
    %v734 = vadd.f32 0.0, %v733
    %735 = vmatprep.mubr.bf16.mxu0 %v345
    %736 = vmatmul.mubr.bf16.gmra.mxu0 %v344
    %v737 = vpop.f32.mrf.mxu0
    %v738 = vadd.f32 0.0, %v737
    %v739 = vpop.f32.mrf.mxu0
    %v740 = vadd.f32 0.0, %v739
    %v741 = vpop.f32.mrf.mxu0
    %v742 = vadd.f32 0.0, %v741
    %v743 = vpop.f32.mrf.mxu0
    %v744 = vadd.f32 0.0, %v743
    %745 = vmatprep.mubr.bf16.mxu0 %v348
    %746 = vmatmul.mubr.bf16.gmra.mxu0 %v347
    %v747 = vpop.f32.mrf.mxu0
    %v748 = vadd.f32 0.0, %v747
    %v749 = vpop.f32.mrf.mxu0
    %v750 = vadd.f32 0.0, %v749
    %v751 = vpop.f32.mrf.mxu0
    %v752 = vadd.f32 0.0, %v751
    %v753 = vpop.f32.mrf.mxu0
    %v754 = vadd.f32 0.0, %v753
    %755 = vmatprep.mubr.bf16.mxu0 %v351
    %756 = vmatmul.mubr.bf16.gmra.mxu0 %v350
    %v757 = vpop.f32.mrf.mxu0
    %v758 = vadd.f32 0.0, %v757
    %v759 = vpop.f32.mrf.mxu0
    %v760 = vadd.f32 0.0, %v759
    %v761 = vpop.f32.mrf.mxu0
    %v762 = vadd.f32 0.0, %v761
    %v763 = vpop.f32.mrf.mxu0
    %v764 = vadd.f32 0.0, %v763
    %765 = vmatprep.mubr.bf16.mxu0 %v354
    %766 = vmatmul.mubr.bf16.gmra.mxu0 %v353
    %v767 = vpop.f32.mrf.mxu0
    %v768 = vadd.f32 0.0, %v767
    %v769 = vpop.f32.mrf.mxu0
    %v770 = vadd.f32 0.0, %v769
    %v771 = vpop.f32.mrf.mxu0
    %v772 = vadd.f32 0.0, %v771
    %v773 = vpop.f32.mrf.mxu0
    %v774 = vadd.f32 0.0, %v773
    %775 = vmatprep.mubr.bf16.mxu0 %v357
    %776 = vmatmul.mubr.bf16.gmra.mxu0 %v356
    %v777 = vpop.f32.mrf.mxu0
    %v778 = vadd.f32 0.0, %v777
    %v779 = vpop.f32.mrf.mxu0
    %v780 = vadd.f32 0.0, %v779
    %v781 = vpop.f32.mrf.mxu0
    %v782 = vadd.f32 0.0, %v781
    %v783 = vpop.f32.mrf.mxu0
    %v784 = vadd.f32 0.0, %v783
    %785 = vmatprep.mubr.bf16.mxu0 %v360
    %786 = vmatmul.mubr.bf16.gmra.mxu0 %v359
    %v787 = vpop.f32.mrf.mxu0
    %v788 = vadd.f32 0.0, %v787
    %v789 = vpop.f32.mrf.mxu0
    %v790 = vadd.f32 0.0, %v789
    %v791 = vpop.f32.mrf.mxu0
    %v792 = vadd.f32 0.0, %v791
    %v793 = vpop.f32.mrf.mxu0
    %v794 = vadd.f32 0.0, %v793
    %795 = vmatprep.mubr.bf16.mxu0 %v363
    %796 = vmatmul.mubr.bf16.gmra.mxu0 %v362
    %v797 = vpop.f32.mrf.mxu0
    %v798 = vadd.f32 0.0, %v797
    %v799 = vpop.f32.mrf.mxu0
    %v800 = vadd.f32 0.0, %v799
    %v801 = vpop.f32.mrf.mxu0
    %v802 = vadd.f32 0.0, %v801
    %v803 = vpop.f32.mrf.mxu0
    %v804 = vadd.f32 0.0, %v803
    %805 = vmatprep.mubr.bf16.mxu0 %v366
    %806 = vmatmul.mubr.bf16.gmra.mxu0 %v365
    %v807 = vpop.f32.mrf.mxu0
    %v808 = vadd.f32 0.0, %v807
    %v809 = vpop.f32.mrf.mxu0
    %v810 = vadd.f32 0.0, %v809
    %v811 = vpop.f32.mrf.mxu0
    %v812 = vadd.f32 0.0, %v811
    %v813 = vpop.f32.mrf.mxu0
    %v814 = vadd.f32 0.0, %v813
    %815 = vmatprep.mubr.bf16.mxu0 %v369
    %816 = vmatmul.mubr.bf16.gmra.mxu0 %v368
    %v817 = vpop.f32.mrf.mxu0
    %v818 = vadd.f32 0.0, %v817
    %v819 = vpop.f32.mrf.mxu0
    %v820 = vadd.f32 0.0, %v819
    %v821 = vpop.f32.mrf.mxu0
    %v822 = vadd.f32 0.0, %v821
    %v823 = vpop.f32.mrf.mxu0
    %v824 = vadd.f32 0.0, %v823
    %825 = vmatprep.mubr.bf16.mxu0 %v372
    %826 = vmatmul.mubr.bf16.gmra.mxu0 %v371
    %v827 = vpop.f32.mrf.mxu0
    %v828 = vadd.f32 0.0, %v827
    %v829 = vpop.f32.mrf.mxu0
    %v830 = vadd.f32 0.0, %v829
    %v831 = vpop.f32.mrf.mxu0
    %v832 = vadd.f32 0.0, %v831
    %v833 = vpop.f32.mrf.mxu0
    %v834 = vadd.f32 0.0, %v833
    %835 = vmatprep.mubr.bf16.mxu0 %v375
    %836 = vmatmul.mubr.bf16.gmra.mxu0 %v374
    %v837 = vpop.f32.mrf.mxu0
    %v838 = vadd.f32 0.0, %v837
    %v839 = vpop.f32.mrf.mxu0
    %v840 = vadd.f32 0.0, %v839
    %v841 = vpop.f32.mrf.mxu0
    %v842 = vadd.f32 0.0, %v841
    %v843 = vpop.f32.mrf.mxu0
    %v844 = vadd.f32 0.0, %v843
    %845 = vdwg.mxu0
    %846 = vmatprep.subr.bf16.mxu0 0
    %847 = vmatpush1.bf16.msra.mxu0 0
    %848 = vmatprep.subr.bf16.mxu0 0
    %849 = vmatpush1.bf16.msra.mxu0 0
    %850 = vmatprep.subr.bf16.mxu0 0
    %851 = vmatpush1.bf16.msra.mxu0 0
    %852 = vmatprep.subr.bf16.mxu0 0
    %853 = vmatpush1.bf16.msra.mxu0 0
    %854 = vmatprep.subr.bf16.mxu0 0
    %855 = vmatpush1.bf16.msra.mxu0 0
    %856 = vmatprep.subr.bf16.mxu0 %v651
    %857 = vmatpush1.bf16.msra.mxu0 %v648
    %858 = vmatprep.subr.bf16.mxu0 %v558
    %859 = vmatpush1.bf16.msra.mxu0 %v557
    %860 = vmatprep.subr.bf16.mxu0 %v556
    %861 = vmatpush1.bf16.msra.mxu0 %v555
    %862 = vmatprep.subr.bf16.mxu0 0
    %863 = vmatpush2.bf16.msra.mxu0 0
    %864 = vmatprep.subr.bf16.mxu0 0
    %865 = vmatpush2.bf16.msra.mxu0 0
    %866 = vmatprep.subr.bf16.mxu0 0
    %867 = vmatpush2.bf16.msra.mxu0 0
    %868 = vmatprep.subr.bf16.mxu0 0
    %869 = vmatpush2.bf16.msra.mxu0 0
    %870 = vmatprep.subr.bf16.mxu0 0
    %871 = vmatpush2.bf16.msra.mxu0 0
    %872 = vmatprep.subr.bf16.mxu0 0
    %873 = vmatpush2.bf16.msra.mxu0 0
    %874 = vmatprep.subr.bf16.mxu0 0
    %875 = vmatpush2.bf16.msra.mxu0 0
    %876 = vmatprep.subr.bf16.mxu0 0
    %877 = vmatpush2.bf16.msra.mxu0 0
    %878 = vmatprep.mubr.bf16.mxu0 0
    %879 = vmatmul.mubr.bf16.gmra.mxu0 %v599
    %v880 = vpop.f32.mrf.mxu0
    %v881 = vadd.f32 %v688, %v880
    %v882 = vpop.f32.mrf.mxu0
    %v883 = vadd.f32 %v690, %v882
    %v884 = vpop.f32.mrf.mxu0
    %v885 = vadd.f32 %v692, %v884
    %v886 = vpop.f32.mrf.mxu0
    %v887 = vadd.f32 %v694, %v886
    %888 = vmatprep.mubr.bf16.mxu0 0
    %889 = vmatmul.mubr.bf16.gmra.mxu0 %v602
    %v890 = vpop.f32.mrf.mxu0
    %v891 = vadd.f32 %v698, %v890
    %v892 = vpop.f32.mrf.mxu0
    %v893 = vadd.f32 %v700, %v892
    %v894 = vpop.f32.mrf.mxu0
    %v895 = vadd.f32 %v702, %v894
    %v896 = vpop.f32.mrf.mxu0
    %v897 = vadd.f32 %v704, %v896
    %898 = vmatprep.mubr.bf16.mxu0 0
    %899 = vmatmul.mubr.bf16.gmra.mxu0 %v605
    %v900 = vpop.f32.mrf.mxu0
    %v901 = vadd.f32 %v708, %v900
    %v902 = vpop.f32.mrf.mxu0
    %v903 = vadd.f32 %v710, %v902
    %v904 = vpop.f32.mrf.mxu0
    %v905 = vadd.f32 %v712, %v904
    %v906 = vpop.f32.mrf.mxu0
    %v907 = vadd.f32 %v714, %v906
    %908 = vmatprep.mubr.bf16.mxu0 0
    %909 = vmatmul.mubr.bf16.gmra.mxu0 %v608
    %v910 = vpop.f32.mrf.mxu0
    %v911 = vadd.f32 %v718, %v910
    %v912 = vpop.f32.mrf.mxu0
    %v913 = vadd.f32 %v720, %v912
    %v914 = vpop.f32.mrf.mxu0
    %v915 = vadd.f32 %v722, %v914
    %v916 = vpop.f32.mrf.mxu0
    %v917 = vadd.f32 %v724, %v916
    %918 = vmatprep.mubr.bf16.mxu0 0
    %919 = vmatmul.mubr.bf16.gmra.mxu0 %v611
    %v920 = vpop.f32.mrf.mxu0
    %v921 = vadd.f32 %v728, %v920
    %v922 = vpop.f32.mrf.mxu0
    %v923 = vadd.f32 %v730, %v922
    %v924 = vpop.f32.mrf.mxu0
    %v925 = vadd.f32 %v732, %v924
    %v926 = vpop.f32.mrf.mxu0
    %v927 = vadd.f32 %v734, %v926
    %928 = vmatprep.mubr.bf16.mxu0 0
    %929 = vmatmul.mubr.bf16.gmra.mxu0 %v614
    %v930 = vpop.f32.mrf.mxu0
    %v931 = vadd.f32 %v738, %v930
    %v932 = vpop.f32.mrf.mxu0
    %v933 = vadd.f32 %v740, %v932
    %v934 = vpop.f32.mrf.mxu0
    %v935 = vadd.f32 %v742, %v934
    %v936 = vpop.f32.mrf.mxu0
    %v937 = vadd.f32 %v744, %v936
    %938 = vmatprep.mubr.bf16.mxu0 0
    %939 = vmatmul.mubr.bf16.gmra.mxu0 %v617
    %v940 = vpop.f32.mrf.mxu0
    %v941 = vadd.f32 %v748, %v940
    %v942 = vpop.f32.mrf.mxu0
    %v943 = vadd.f32 %v750, %v942
    %v944 = vpop.f32.mrf.mxu0
    %v945 = vadd.f32 %v752, %v944
    %v946 = vpop.f32.mrf.mxu0
    %v947 = vadd.f32 %v754, %v946
    %948 = vmatprep.mubr.bf16.mxu0 0
    %949 = vmatmul.mubr.bf16.gmra.mxu0 %v620
    %v950 = vpop.f32.mrf.mxu0
    %v951 = vadd.f32 %v758, %v950
    %v952 = vpop.f32.mrf.mxu0
    %v953 = vadd.f32 %v760, %v952
    %v954 = vpop.f32.mrf.mxu0
    %v955 = vadd.f32 %v762, %v954
    %v956 = vpop.f32.mrf.mxu0
    %v957 = vadd.f32 %v764, %v956
    %958 = vmatprep.mubr.bf16.mxu0 0
    %959 = vmatmul.mubr.bf16.gmra.mxu0 %v623
    %v960 = vpop.f32.mrf.mxu0
    %v961 = vadd.f32 %v768, %v960
    %v962 = vpop.f32.mrf.mxu0
    %v963 = vadd.f32 %v770, %v962
    %v964 = vpop.f32.mrf.mxu0
    %v965 = vadd.f32 %v772, %v964
    %v966 = vpop.f32.mrf.mxu0
    %v967 = vadd.f32 %v774, %v966
    %968 = vmatprep.mubr.bf16.mxu0 0
    %969 = vmatmul.mubr.bf16.gmra.mxu0 %v626
    %v970 = vpop.f32.mrf.mxu0
    %v971 = vadd.f32 %v778, %v970
    %v972 = vpop.f32.mrf.mxu0
    %v973 = vadd.f32 %v780, %v972
    %v974 = vpop.f32.mrf.mxu0
    %v975 = vadd.f32 %v782, %v974
    %v976 = vpop.f32.mrf.mxu0
    %v977 = vadd.f32 %v784, %v976
    %978 = vmatprep.mubr.bf16.mxu0 0
    %979 = vmatmul.mubr.bf16.gmra.mxu0 %v629
    %v980 = vpop.f32.mrf.mxu0
    %v981 = vadd.f32 %v788, %v980
    %v982 = vpop.f32.mrf.mxu0
    %v983 = vadd.f32 %v790, %v982
    %v984 = vpop.f32.mrf.mxu0
    %v985 = vadd.f32 %v792, %v984
    %v986 = vpop.f32.mrf.mxu0
    %v987 = vadd.f32 %v794, %v986
    %988 = vmatprep.mubr.bf16.mxu0 0
    %989 = vmatmul.mubr.bf16.gmra.mxu0 %v632
    %v990 = vpop.f32.mrf.mxu0
    %v991 = vadd.f32 %v798, %v990
    %v992 = vpop.f32.mrf.mxu0
    %v993 = vadd.f32 %v800, %v992
    %v994 = vpop.f32.mrf.mxu0
    %v995 = vadd.f32 %v802, %v994
    %v996 = vpop.f32.mrf.mxu0
    %v997 = vadd.f32 %v804, %v996
    %998 = vmatprep.mubr.bf16.mxu0 0
    %999 = vmatmul.mubr.bf16.gmra.mxu0 %v635
    %v1000 = vpop.f32.mrf.mxu0
    %v1001 = vadd.f32 %v808, %v1000
    %v1002 = vpop.f32.mrf.mxu0
    %v1003 = vadd.f32 %v810, %v1002
    %v1004 = vpop.f32.mrf.mxu0
    %v1005 = vadd.f32 %v812, %v1004
    %v1006 = vpop.f32.mrf.mxu0
    %v1007 = vadd.f32 %v814, %v1006
    %1008 = vmatprep.mubr.bf16.mxu0 0
    %1009 = vmatmul.mubr.bf16.gmra.mxu0 %v638
    %v1010 = vpop.f32.mrf.mxu0
    %v1011 = vadd.f32 %v818, %v1010
    %v1012 = vpop.f32.mrf.mxu0
    %v1013 = vadd.f32 %v820, %v1012
    %v1014 = vpop.f32.mrf.mxu0
    %v1015 = vadd.f32 %v822, %v1014
    %v1016 = vpop.f32.mrf.mxu0
    %v1017 = vadd.f32 %v824, %v1016
    %1018 = vmatprep.mubr.bf16.mxu0 0
    %1019 = vmatmul.mubr.bf16.gmra.mxu0 %v641
    %v1020 = vpop.f32.mrf.mxu0
    %v1021 = vadd.f32 %v828, %v1020
    %v1022 = vpop.f32.mrf.mxu0
    %v1023 = vadd.f32 %v830, %v1022
    %v1024 = vpop.f32.mrf.mxu0
    %v1025 = vadd.f32 %v832, %v1024
    %v1026 = vpop.f32.mrf.mxu0
    %v1027 = vadd.f32 %v834, %v1026
    %1028 = vmatprep.mubr.bf16.mxu0 0
    %1029 = vmatmul.mubr.bf16.gmra.mxu0 %v644
    %v1030 = vpop.f32.mrf.mxu0
    %v1031 = vadd.f32 %v838, %v1030
    %v1032 = vpop.f32.mrf.mxu0
    %v1033 = vadd.f32 %v840, %v1032
    %v1034 = vpop.f32.mrf.mxu0
    %v1035 = vadd.f32 %v842, %v1034
    %v1036 = vpop.f32.mrf.mxu0
    %v1037 = vadd.f32 %v844, %v1036
    %1038 = vdwg.mxu0
    %v1039 = vld [vmem:[#allocation3] sm:$0xff]
    %v1040 = vld [vmem:[#allocation3 + $0x8] sm:$0xff]
    %v1041 = vld [vmem:[#allocation3 + $0x10] sm:$0xff]
    %v1042 = vld [vmem:[#allocation3 + $0x18] sm:$0xff]
    %v1047 = vcombine.low %v1039, %v1040
    %v1048 = vcombine.high %v1039, %v1040
    %v1050 = vunpack.c.l.s4 1966171168
    %v1051 = vunpack.c.0.s8 %v1050
    %v1052 = vlaneseq
    %v1053 = vshrl.u32 %v1052, 7
    %v1054 = vsub.s32 %v1051, %v1053
    %v1055 = vrot.slane %v1047, %v1054
    %v1057 = vunpack.c.l.s4 1966171168
    %v1058 = vunpack.c.0.s8 %v1057
    %v1059 = vlaneseq
    %v1060 = vshrl.u32 %v1059, 7
    %v1061 = vsub.s32 %v1058, %v1060
    %v1062 = vrot.slane %v1048, %v1061
    %v1063 = vcombine.high %v1055, %v1055
    %v1064 = vcombine.high %v1062, %v1062
    %v1066 = vunpack.c.l.s4 1966171168
    %v1067 = vunpack.c.0.s8 %v1066
    %v1068 = vlaneseq
    %v1069 = vshrl.u32 %v1068, 7
    %v1070 = vsub.s32 %v1067, %v1069
    %v1071 = vrot.slane %v1055, %v1070
    %v1073 = vunpack.c.l.s4 1966171168
    %v1074 = vunpack.c.0.s8 %v1073
    %v1075 = vlaneseq
    %v1076 = vshrl.u32 %v1075, 7
    %v1077 = vsub.s32 %v1074, %v1076
    %v1078 = vrot.slane %v1062, %v1077
    %v1080 = vunpack.c.l.s4 1966171168
    %v1081 = vunpack.c.0.s8 %v1080
    %v1082 = vlaneseq
    %v1083 = vshrl.u32 %v1082, 7
    %v1084 = vsub.s32 %v1081, %v1083
    %v1085 = vrot.slane %v1063, %v1084
    %v1087 = vunpack.c.l.s4 1966171168
    %v1088 = vunpack.c.0.s8 %v1087
    %v1089 = vlaneseq
    %v1090 = vshrl.u32 %v1089, 7
    %v1091 = vsub.s32 %v1088, %v1090
    %v1092 = vrot.slane %v1064, %v1091
    %v1093 = vcombine.high %v1071, %v1071
    %v1094 = vcombine.high %v1078, %v1078
    %v1095 = vcombine.high %v1085, %v1085
    %v1096 = vcombine.high %v1092, %v1092
    %v1097 = vcombine.low %v1041, %v1042
    %v1098 = vcombine.high %v1041, %v1042
    %v1100 = vunpack.c.l.s4 1966171168
    %v1101 = vunpack.c.0.s8 %v1100
    %v1102 = vlaneseq
    %v1103 = vshrl.u32 %v1102, 7
    %v1104 = vsub.s32 %v1101, %v1103
    %v1105 = vrot.slane %v1097, %v1104
    %v1107 = vunpack.c.l.s4 1966171168
    %v1108 = vunpack.c.0.s8 %v1107
    %v1109 = vlaneseq
    %v1110 = vshrl.u32 %v1109, 7
    %v1111 = vsub.s32 %v1108, %v1110
    %v1112 = vrot.slane %v1098, %v1111
    %v1113 = vcombine.high %v1105, %v1105
    %v1114 = vcombine.high %v1112, %v1112
    %v1116 = vunpack.c.l.s4 1966171168
    %v1117 = vunpack.c.0.s8 %v1116
    %v1118 = vlaneseq
    %v1119 = vshrl.u32 %v1118, 7
    %v1120 = vsub.s32 %v1117, %v1119
    %v1121 = vrot.slane %v1105, %v1120
    %v1123 = vunpack.c.l.s4 1966171168
    %v1124 = vunpack.c.0.s8 %v1123
    %v1125 = vlaneseq
    %v1126 = vshrl.u32 %v1125, 7
    %v1127 = vsub.s32 %v1124, %v1126
    %v1128 = vrot.slane %v1112, %v1127
    %v1130 = vunpack.c.l.s4 1966171168
    %v1131 = vunpack.c.0.s8 %v1130
    %v1132 = vlaneseq
    %v1133 = vshrl.u32 %v1132, 7
    %v1134 = vsub.s32 %v1131, %v1133
    %v1135 = vrot.slane %v1113, %v1134
    %v1137 = vunpack.c.l.s4 1966171168
    %v1138 = vunpack.c.0.s8 %v1137
    %v1139 = vlaneseq
    %v1140 = vshrl.u32 %v1139, 7
    %v1141 = vsub.s32 %v1138, %v1140
    %v1142 = vrot.slane %v1114, %v1141
    %v1143 = vcombine.high %v1121, %v1121
    %v1144 = vcombine.high %v1128, %v1128
    %v1145 = vcombine.high %v1135, %v1135
    %v1146 = vcombine.high %v1142, %v1142
    %v1147 = vlaneseq
    %v1148 = vshrl.u32 %v1147, 7
    %v1149 = vsub.s32 0, %v1148
    %v1150 = vrot.slane %v1071, %v1149
    %v1151 = vlaneseq
    %v1152 = vshrl.u32 %v1151, 7
    %v1153 = vsub.s32 1, %v1152
    %v1154 = vrot.slane %v1071, %v1153
    %v1155 = vlaneseq
    %v1156 = vshrl.u32 %v1155, 7
    %v1157 = vsub.s32 0, %v1156
    %v1158 = vrot.slane %v1085, %v1157
    %v1159 = vlaneseq
    %v1160 = vshrl.u32 %v1159, 7
    %v1161 = vsub.s32 1, %v1160
    %v1162 = vrot.slane %v1085, %v1161
    %v1163 = vlaneseq
    %v1164 = vshrl.u32 %v1163, 7
    %v1165 = vsub.s32 0, %v1164
    %v1166 = vrot.slane %v1093, %v1165
    %v1167 = vlaneseq
    %v1168 = vshrl.u32 %v1167, 7
    %v1169 = vsub.s32 1, %v1168
    %v1170 = vrot.slane %v1093, %v1169
    %v1171 = vlaneseq
    %v1172 = vshrl.u32 %v1171, 7
    %v1173 = vsub.s32 0, %v1172
    %v1174 = vrot.slane %v1095, %v1173
    %v1175 = vlaneseq
    %v1176 = vshrl.u32 %v1175, 7
    %v1177 = vsub.s32 1, %v1176
    %v1178 = vrot.slane %v1095, %v1177
    %v1179 = vlaneseq
    %v1180 = vshrl.u32 %v1179, 7
    %v1181 = vsub.s32 0, %v1180
    %v1182 = vrot.slane %v1078, %v1181
    %v1183 = vlaneseq
    %v1184 = vshrl.u32 %v1183, 7
    %v1185 = vsub.s32 1, %v1184
    %v1186 = vrot.slane %v1078, %v1185
    %v1187 = vlaneseq
    %v1188 = vshrl.u32 %v1187, 7
    %v1189 = vsub.s32 0, %v1188
    %v1190 = vrot.slane %v1092, %v1189
    %v1191 = vlaneseq
    %v1192 = vshrl.u32 %v1191, 7
    %v1193 = vsub.s32 1, %v1192
    %v1194 = vrot.slane %v1092, %v1193
    %v1195 = vlaneseq
    %v1196 = vshrl.u32 %v1195, 7
    %v1197 = vsub.s32 0, %v1196
    %v1198 = vrot.slane %v1094, %v1197
    %v1199 = vlaneseq
    %v1200 = vshrl.u32 %v1199, 7
    %v1201 = vsub.s32 1, %v1200
    %v1202 = vrot.slane %v1094, %v1201
    %v1203 = vlaneseq
    %v1204 = vshrl.u32 %v1203, 7
    %v1205 = vsub.s32 0, %v1204
    %v1206 = vrot.slane %v1096, %v1205
    %v1207 = vlaneseq
    %v1208 = vshrl.u32 %v1207, 7
    %v1209 = vsub.s32 1, %v1208
    %v1210 = vrot.slane %v1096, %v1209
    %v1211 = vlaneseq
    %v1212 = vshrl.u32 %v1211, 7
    %v1213 = vsub.s32 0, %v1212
    %v1214 = vrot.slane %v1121, %v1213
    %v1215 = vlaneseq
    %v1216 = vshrl.u32 %v1215, 7
    %v1217 = vsub.s32 1, %v1216
    %v1218 = vrot.slane %v1121, %v1217
    %v1219 = vlaneseq
    %v1220 = vshrl.u32 %v1219, 7
    %v1221 = vsub.s32 0, %v1220
    %v1222 = vrot.slane %v1135, %v1221
    %v1223 = vlaneseq
    %v1224 = vshrl.u32 %v1223, 7
    %v1225 = vsub.s32 1, %v1224
    %v1226 = vrot.slane %v1135, %v1225
    %v1227 = vlaneseq
    %v1228 = vshrl.u32 %v1227, 7
    %v1229 = vsub.s32 0, %v1228
    %v1230 = vrot.slane %v1143, %v1229
    %v1231 = vlaneseq
    %v1232 = vshrl.u32 %v1231, 7
    %v1233 = vsub.s32 1, %v1232
    %v1234 = vrot.slane %v1143, %v1233
    %v1235 = vlaneseq
    %v1236 = vshrl.u32 %v1235, 7
    %v1237 = vsub.s32 0, %v1236
    %v1238 = vrot.slane %v1145, %v1237
    %v1239 = vlaneseq
    %v1240 = vshrl.u32 %v1239, 7
    %v1241 = vsub.s32 1, %v1240
    %v1242 = vrot.slane %v1145, %v1241
    %v1243 = vlaneseq
    %v1244 = vshrl.u32 %v1243, 7
    %v1245 = vsub.s32 0, %v1244
    %v1246 = vrot.slane %v1128, %v1245
    %v1247 = vlaneseq
    %v1248 = vshrl.u32 %v1247, 7
    %v1249 = vsub.s32 1, %v1248
    %v1250 = vrot.slane %v1128, %v1249
    %v1251 = vlaneseq
    %v1252 = vshrl.u32 %v1251, 7
    %v1253 = vsub.s32 0, %v1252
    %v1254 = vrot.slane %v1142, %v1253
    %v1255 = vlaneseq
    %v1256 = vshrl.u32 %v1255, 7
    %v1257 = vsub.s32 1, %v1256
    %v1258 = vrot.slane %v1142, %v1257
    %v1259 = vlaneseq
    %v1260 = vshrl.u32 %v1259, 7
    %v1261 = vsub.s32 0, %v1260
    %v1262 = vrot.slane %v1144, %v1261
    %v1263 = vlaneseq
    %v1264 = vshrl.u32 %v1263, 7
    %v1265 = vsub.s32 1, %v1264
    %v1266 = vrot.slane %v1144, %v1265
    %v1267 = vlaneseq
    %v1268 = vshrl.u32 %v1267, 7
    %v1269 = vsub.s32 0, %v1268
    %v1270 = vrot.slane %v1146, %v1269
    %v1271 = vlaneseq
    %v1272 = vshrl.u32 %v1271, 7
    %v1273 = vsub.s32 1, %v1272
    %v1274 = vrot.slane %v1146, %v1273
    %v1307 = vadd.f32 %v881, %v1150
    %v1308 = vadd.f32 %v883, %v1154
    %v1309 = vadd.f32 %v885, %v1150
    %v1310 = vadd.f32 %v887, %v1154
    %v1311 = vadd.f32 %v891, %v1158
    %v1312 = vadd.f32 %v893, %v1162
    %v1313 = vadd.f32 %v895, %v1158
    %v1314 = vadd.f32 %v897, %v1162
    %v1315 = vadd.f32 %v901, %v1166
    %v1316 = vadd.f32 %v903, %v1170
    %v1317 = vadd.f32 %v905, %v1166
    %v1318 = vadd.f32 %v907, %v1170
    %v1319 = vadd.f32 %v911, %v1174
    %v1320 = vadd.f32 %v913, %v1178
    %v1321 = vadd.f32 %v915, %v1174
    %v1322 = vadd.f32 %v917, %v1178
    %v1323 = vadd.f32 %v921, %v1182
    %v1324 = vadd.f32 %v923, %v1186
    %v1325 = vadd.f32 %v925, %v1182
    %v1326 = vadd.f32 %v927, %v1186
    %v1327 = vadd.f32 %v931, %v1190
    %v1328 = vadd.f32 %v933, %v1194
    %v1329 = vadd.f32 %v935, %v1190
    %v1330 = vadd.f32 %v937, %v1194
    %v1331 = vadd.f32 %v941, %v1198
    %v1332 = vadd.f32 %v943, %v1202
    %v1333 = vadd.f32 %v945, %v1198
    %v1334 = vadd.f32 %v947, %v1202
    %v1335 = vadd.f32 %v951, %v1206
    %v1336 = vadd.f32 %v953, %v1210
    %v1337 = vadd.f32 %v955, %v1206
    %v1338 = vadd.f32 %v957, %v1210
    %v1339 = vadd.f32 %v961, %v1214
    %v1340 = vadd.f32 %v963, %v1218
    %v1341 = vadd.f32 %v965, %v1214
    %v1342 = vadd.f32 %v967, %v1218
    %v1343 = vadd.f32 %v971, %v1222
    %v1344 = vadd.f32 %v973, %v1226
    %v1345 = vadd.f32 %v975, %v1222
    %v1346 = vadd.f32 %v977, %v1226
    %v1347 = vadd.f32 %v981, %v1230
    %v1348 = vadd.f32 %v983, %v1234
    %v1349 = vadd.f32 %v985, %v1230
    %v1350 = vadd.f32 %v987, %v1234
    %v1351 = vadd.f32 %v991, %v1238
    %v1352 = vadd.f32 %v993, %v1242
    %v1353 = vadd.f32 %v995, %v1238
    %v1354 = vadd.f32 %v997, %v1242
    %v1355 = vadd.f32 %v1001, %v1246
    %v1356 = vadd.f32 %v1003, %v1250
    %v1357 = vadd.f32 %v1005, %v1246
    %v1358 = vadd.f32 %v1007, %v1250
    %v1359 = vadd.f32 %v1011, %v1254
    %v1360 = vadd.f32 %v1013, %v1258
    %v1361 = vadd.f32 %v1015, %v1254
    %v1362 = vadd.f32 %v1017, %v1258
    %v1363 = vadd.f32 %v1021, %v1262
    %v1364 = vadd.f32 %v1023, %v1266
    %v1365 = vadd.f32 %v1025, %v1262
    %v1366 = vadd.f32 %v1027, %v1266
    %v1367 = vadd.f32 %v1031, %v1270
    %v1368 = vadd.f32 %v1033, %v1274
    %v1369 = vadd.f32 %v1035, %v1270
    %v1370 = vadd.f32 %v1037, %v1274
    %v1371 = vld [vmem:[#allocation6] sm:$0xff]
    %v1372 = vld [vmem:[#allocation6 + $0x8] sm:$0xff]
    %v1373 = vld [vmem:[#allocation6 + $0x10] sm:$0xff]
    %v1374 = vld [vmem:[#allocation6 + $0x18] sm:$0xff]
    %v1375 = vadd.f32 %v1307, %v1371
    %v1376 = vadd.f32 %v1308, %v1372
    %v1377 = vadd.f32 %v1309, %v1373
    %v1378 = vadd.f32 %v1310, %v1374
    %v1379 = vadd.f32 %v1311, %v1371
    %v1380 = vadd.f32 %v1312, %v1372
    %v1381 = vadd.f32 %v1313, %v1373
    %v1382 = vadd.f32 %v1314, %v1374
    %v1383 = vadd.f32 %v1315, %v1371
    %v1384 = vadd.f32 %v1316, %v1372
    %v1385 = vadd.f32 %v1317, %v1373
    %v1386 = vadd.f32 %v1318, %v1374
    %v1387 = vadd.f32 %v1319, %v1371
    %v1388 = vadd.f32 %v1320, %v1372
    %v1389 = vadd.f32 %v1321, %v1373
    %v1390 = vadd.f32 %v1322, %v1374
    %v1391 = vadd.f32 %v1323, %v1371
    %v1392 = vadd.f32 %v1324, %v1372
    %v1393 = vadd.f32 %v1325, %v1373
    %v1394 = vadd.f32 %v1326, %v1374
    %v1395 = vadd.f32 %v1327, %v1371
    %v1396 = vadd.f32 %v1328, %v1372
    %v1397 = vadd.f32 %v1329, %v1373
    %v1398 = vadd.f32 %v1330, %v1374
    %v1399 = vadd.f32 %v1331, %v1371
    %v1400 = vadd.f32 %v1332, %v1372
    %v1401 = vadd.f32 %v1333, %v1373
    %v1402 = vadd.f32 %v1334, %v1374
    %v1403 = vadd.f32 %v1335, %v1371
    %v1404 = vadd.f32 %v1336, %v1372
    %v1405 = vadd.f32 %v1337, %v1373
    %v1406 = vadd.f32 %v1338, %v1374
    %v1407 = vadd.f32 %v1339, %v1371
    %v1408 = vadd.f32 %v1340, %v1372
    %v1409 = vadd.f32 %v1341, %v1373
    %v1410 = vadd.f32 %v1342, %v1374
    %v1411 = vadd.f32 %v1343, %v1371
    %v1412 = vadd.f32 %v1344, %v1372
    %v1413 = vadd.f32 %v1345, %v1373
    %v1414 = vadd.f32 %v1346, %v1374
    %v1415 = vadd.f32 %v1347, %v1371
    %v1416 = vadd.f32 %v1348, %v1372
    %v1417 = vadd.f32 %v1349, %v1373
    %v1418 = vadd.f32 %v1350, %v1374
    %v1419 = vadd.f32 %v1351, %v1371
    %v1420 = vadd.f32 %v1352, %v1372
    %v1421 = vadd.f32 %v1353, %v1373
    %v1422 = vadd.f32 %v1354, %v1374
    %v1423 = vadd.f32 %v1355, %v1371
    %v1424 = vadd.f32 %v1356, %v1372
    %v1425 = vadd.f32 %v1357, %v1373
    %v1426 = vadd.f32 %v1358, %v1374
    %v1427 = vadd.f32 %v1359, %v1371
    %v1428 = vadd.f32 %v1360, %v1372
    %v1429 = vadd.f32 %v1361, %v1373
    %v1430 = vadd.f32 %v1362, %v1374
    %v1431 = vadd.f32 %v1363, %v1371
    %v1432 = vadd.f32 %v1364, %v1372
    %v1433 = vadd.f32 %v1365, %v1373
    %v1434 = vadd.f32 %v1366, %v1374
    %v1435 = vadd.f32 %v1367, %v1371
    %v1436 = vadd.f32 %v1368, %v1372
    %v1437 = vadd.f32 %v1369, %v1373
    %v1438 = vadd.f32 %v1370, %v1374
    %v1439 = vmax.f32 %v1375, 0.0
    %v1440 = vmax.f32 %v1376, 0.0
    %v1441 = vmax.f32 %v1377, 0.0
    %v1442 = vmax.f32 %v1378, 0.0
    %v1443 = vmax.f32 %v1379, 0.0
    %v1444 = vmax.f32 %v1380, 0.0
    %v1445 = vmax.f32 %v1381, 0.0
    %v1446 = vmax.f32 %v1382, 0.0
    %v1447 = vmax.f32 %v1383, 0.0
    %v1448 = vmax.f32 %v1384, 0.0
    %v1449 = vmax.f32 %v1385, 0.0
    %v1450 = vmax.f32 %v1386, 0.0
    %v1451 = vmax.f32 %v1387, 0.0
    %v1452 = vmax.f32 %v1388, 0.0
    %v1453 = vmax.f32 %v1389, 0.0
    %v1454 = vmax.f32 %v1390, 0.0
    %v1455 = vmax.f32 %v1391, 0.0
    %v1456 = vmax.f32 %v1392, 0.0
    %v1457 = vmax.f32 %v1393, 0.0
    %v1458 = vmax.f32 %v1394, 0.0
    %v1459 = vmax.f32 %v1395, 0.0
    %v1460 = vmax.f32 %v1396, 0.0
    %v1461 = vmax.f32 %v1397, 0.0
    %v1462 = vmax.f32 %v1398, 0.0
    %v1463 = vmax.f32 %v1399, 0.0
    %v1464 = vmax.f32 %v1400, 0.0
    %v1465 = vmax.f32 %v1401, 0.0
    %v1466 = vmax.f32 %v1402, 0.0
    %v1467 = vmax.f32 %v1403, 0.0
    %v1468 = vmax.f32 %v1404, 0.0
    %v1469 = vmax.f32 %v1405, 0.0
    %v1470 = vmax.f32 %v1406, 0.0
    %v1471 = vmax.f32 %v1407, 0.0
    %v1472 = vmax.f32 %v1408, 0.0
    %v1473 = vmax.f32 %v1409, 0.0
    %v1474 = vmax.f32 %v1410, 0.0
    %v1475 = vmax.f32 %v1411, 0.0
    %v1476 = vmax.f32 %v1412, 0.0
    %v1477 = vmax.f32 %v1413, 0.0
    %v1478 = vmax.f32 %v1414, 0.0
    %v1479 = vmax.f32 %v1415, 0.0
    %v1480 = vmax.f32 %v1416, 0.0
    %v1481 = vmax.f32 %v1417, 0.0
    %v1482 = vmax.f32 %v1418, 0.0
    %v1483 = vmax.f32 %v1419, 0.0
    %v1484 = vmax.f32 %v1420, 0.0
    %v1485 = vmax.f32 %v1421, 0.0
    %v1486 = vmax.f32 %v1422, 0.0
    %v1487 = vmax.f32 %v1423, 0.0
    %v1488 = vmax.f32 %v1424, 0.0
    %v1489 = vmax.f32 %v1425, 0.0
    %v1490 = vmax.f32 %v1426, 0.0
    %v1491 = vmax.f32 %v1427, 0.0
    %v1492 = vmax.f32 %v1428, 0.0
    %v1493 = vmax.f32 %v1429, 0.0
    %v1494 = vmax.f32 %v1430, 0.0
    %v1495 = vmax.f32 %v1431, 0.0
    %v1496 = vmax.f32 %v1432, 0.0
    %v1497 = vmax.f32 %v1433, 0.0
    %v1498 = vmax.f32 %v1434, 0.0
    %v1499 = vmax.f32 %v1435, 0.0
    %v1500 = vmax.f32 %v1436, 0.0
    %v1501 = vmax.f32 %v1437, 0.0
    %v1502 = vmax.f32 %v1438, 0.0
    %v1503 = vpack.c.bf16 %v1441, %v1439
    %v1504 = vpack.c.bf16 %v1442, %v1440
    %v1505 = vpack.c.bf16 %v1445, %v1443
    %v1506 = vpack.c.bf16 %v1446, %v1444
    %v1507 = vpack.c.bf16 %v1449, %v1447
    %v1508 = vpack.c.bf16 %v1450, %v1448
    %v1509 = vpack.c.bf16 %v1453, %v1451
    %v1510 = vpack.c.bf16 %v1454, %v1452
    %v1511 = vpack.c.bf16 %v1457, %v1455
    %v1512 = vpack.c.bf16 %v1458, %v1456
    %v1513 = vpack.c.bf16 %v1461, %v1459
    %v1514 = vpack.c.bf16 %v1462, %v1460
    %v1515 = vpack.c.bf16 %v1465, %v1463
    %v1516 = vpack.c.bf16 %v1466, %v1464
    %v1517 = vpack.c.bf16 %v1469, %v1467
    %v1518 = vpack.c.bf16 %v1470, %v1468
    %v1519 = vpack.c.bf16 %v1473, %v1471
    %v1520 = vpack.c.bf16 %v1474, %v1472
    %v1521 = vpack.c.bf16 %v1477, %v1475
    %v1522 = vpack.c.bf16 %v1478, %v1476
    %v1523 = vpack.c.bf16 %v1481, %v1479
    %v1524 = vpack.c.bf16 %v1482, %v1480
    %v1525 = vpack.c.bf16 %v1485, %v1483
    %v1526 = vpack.c.bf16 %v1486, %v1484
    %v1527 = vpack.c.bf16 %v1489, %v1487
    %v1528 = vpack.c.bf16 %v1490, %v1488
    %v1529 = vpack.c.bf16 %v1493, %v1491
    %v1530 = vpack.c.bf16 %v1494, %v1492
    %v1531 = vpack.c.bf16 %v1497, %v1495
    %v1532 = vpack.c.bf16 %v1498, %v1496
    %v1533 = vpack.c.bf16 %v1501, %v1499
    %v1534 = vpack.c.bf16 %v1502, %v1500
    %v1535 = vld [vmem:[%s4] sm:$0xff]
    %v1536 = vld [vmem:[%s4 + $0x8] sm:$0xff]
    %v1537 = vld [vmem:[%s4 + $0x10] sm:$0xff]
    %v1538 = vld [vmem:[%s4 + $0x18] sm:$0xff]
    %v1539 = vld [vmem:[%s4 + $0x20] sm:$0xff]
    %v1540 = vld [vmem:[%s4 + $0x28] sm:$0xff]
    %v1541 = vld [vmem:[%s4 + $0x30] sm:$0xff]
    %v1542 = vld [vmem:[%s4 + $0x38] sm:$0xff]
    %v1543 = vld [vmem:[%s4 + $0x40] sm:$0xff]
    %v1544 = vld [vmem:[%s4 + $0x48] sm:$0xff]
    %v1545 = vld [vmem:[%s4 + $0x50] sm:$0xff]
    %v1546 = vld [vmem:[%s4 + $0x58] sm:$0xff]
    %v1547 = vld [vmem:[%s4 + $0x60] sm:$0xff]
    %v1548 = vld [vmem:[%s4 + $0x68] sm:$0xff]
    %v1549 = vld [vmem:[%s4 + $0x70] sm:$0xff]
    %v1550 = vld [vmem:[%s4 + $0x78] sm:$0xff]
    %v1551 = vld [vmem:[%s4 + $0x80] sm:$0xff]
    %v1552 = vld [vmem:[%s4 + $0x88] sm:$0xff]
    %v1553 = vld [vmem:[%s4 + $0x90] sm:$0xff]
    %v1554 = vld [vmem:[%s4 + $0x98] sm:$0xff]
    %v1555 = vld [vmem:[%s4 + $0xa0] sm:$0xff]
    %v1556 = vld [vmem:[%s4 + $0xa8] sm:$0xff]
    %v1557 = vld [vmem:[%s4 + $0xb0] sm:$0xff]
    %v1558 = vld [vmem:[%s4 + $0xb8] sm:$0xff]
    %v1559 = vld [vmem:[%s4 + $0xc0] sm:$0xff]
    %v1560 = vld [vmem:[%s4 + $0xc8] sm:$0xff]
    %v1561 = vld [vmem:[%s4 + $0xd0] sm:$0xff]
    %v1562 = vld [vmem:[%s4 + $0xd8] sm:$0xff]
    %v1563 = vld [vmem:[%s4 + $0xe0] sm:$0xff]
    %v1564 = vld [vmem:[%s4 + $0xe8] sm:$0xff]
    %v1565 = vld [vmem:[%s4 + $0xf0] sm:$0xff]
    %v1566 = vld [vmem:[%s4 + $0xf8] sm:$0xff]
    %v1567 = vld [vmem:[%s5] sm:$0x3]
    %v1569 = vlaneseq
    %v1570 = vshrl.u32 %v1569, 7
    %v1571 = vsub.s32 0, %v1570
    %v1572 = vrot.slane %v1567, %v1571
    %v1573 = vlaneseq
    %v1574 = vshrl.u32 %v1573, 7
    %v1575 = vsub.s32 1, %v1574
    %v1576 = vrot.slane %v1567, %v1575
    %v1611 = vunpack.c.l.b16 %v1535
    %v1612 = vunpack.c.h.b16 %v1535
    %v1613 = vunpack.c.l.b16 %v1536
    %v1614 = vunpack.c.h.b16 %v1536
    %v1615 = vunpack.c.l.b16 %v1537
    %v1616 = vunpack.c.h.b16 %v1537
    %v1617 = vunpack.c.l.b16 %v1538
    %v1618 = vunpack.c.h.b16 %v1538
    %v1619 = vunpack.c.l.b16 %v1539
    %v1620 = vunpack.c.h.b16 %v1539
    %v1621 = vunpack.c.l.b16 %v1540
    %v1622 = vunpack.c.h.b16 %v1540
    %v1623 = vunpack.c.l.b16 %v1541
    %v1624 = vunpack.c.h.b16 %v1541
    %v1625 = vunpack.c.l.b16 %v1542
    %v1626 = vunpack.c.h.b16 %v1542
    %v1627 = vunpack.c.l.b16 %v1543
    %v1628 = vunpack.c.h.b16 %v1543
    %v1629 = vunpack.c.l.b16 %v1544
    %v1630 = vunpack.c.h.b16 %v1544
    %v1631 = vunpack.c.l.b16 %v1545
    %v1632 = vunpack.c.h.b16 %v1545
    %v1633 = vunpack.c.l.b16 %v1546
    %v1634 = vunpack.c.h.b16 %v1546
    %v1635 = vunpack.c.l.b16 %v1547
    %v1636 = vunpack.c.h.b16 %v1547
    %v1637 = vunpack.c.l.b16 %v1548
    %v1638 = vunpack.c.h.b16 %v1548
    %v1639 = vunpack.c.l.b16 %v1549
    %v1640 = vunpack.c.h.b16 %v1549
    %v1641 = vunpack.c.l.b16 %v1550
    %v1642 = vunpack.c.h.b16 %v1550
    %v1643 = vunpack.c.l.b16 %v1551
    %v1644 = vunpack.c.h.b16 %v1551
    %v1645 = vunpack.c.l.b16 %v1552
    %v1646 = vunpack.c.h.b16 %v1552
    %v1647 = vunpack.c.l.b16 %v1553
    %v1648 = vunpack.c.h.b16 %v1553
    %v1649 = vunpack.c.l.b16 %v1554
    %v1650 = vunpack.c.h.b16 %v1554
    %v1651 = vunpack.c.l.b16 %v1555
    %v1652 = vunpack.c.h.b16 %v1555
    %v1653 = vunpack.c.l.b16 %v1556
    %v1654 = vunpack.c.h.b16 %v1556
    %v1655 = vunpack.c.l.b16 %v1557
    %v1656 = vunpack.c.h.b16 %v1557
    %v1657 = vunpack.c.l.b16 %v1558
    %v1658 = vunpack.c.h.b16 %v1558
    %v1659 = vunpack.c.l.b16 %v1559
    %v1660 = vunpack.c.h.b16 %v1559
    %v1661 = vunpack.c.l.b16 %v1560
    %v1662 = vunpack.c.h.b16 %v1560
    %v1663 = vunpack.c.l.b16 %v1561
    %v1664 = vunpack.c.h.b16 %v1561
    %v1665 = vunpack.c.l.b16 %v1562
    %v1666 = vunpack.c.h.b16 %v1562
    %v1667 = vunpack.c.l.b16 %v1563
    %v1668 = vunpack.c.h.b16 %v1563
    %v1669 = vunpack.c.l.b16 %v1564
    %v1670 = vunpack.c.h.b16 %v1564
    %v1671 = vunpack.c.l.b16 %v1565
    %v1672 = vunpack.c.h.b16 %v1565
    %v1673 = vunpack.c.l.b16 %v1566
    %v1674 = vunpack.c.h.b16 %v1566
    %v1675 = vpack.c.b16 %v1613, %v1611
    %v1676 = vpack.c.b16 %v1614, %v1612
    %v1677 = vpack.c.b16 %v1617, %v1615
    %v1678 = vpack.c.b16 %v1618, %v1616
    %v1679 = vpack.c.b16 %v1621, %v1619
    %v1680 = vpack.c.b16 %v1622, %v1620
    %v1681 = vpack.c.b16 %v1625, %v1623
    %v1682 = vpack.c.b16 %v1626, %v1624
    %v1683 = vpack.c.b16 %v1629, %v1627
    %v1684 = vpack.c.b16 %v1630, %v1628
    %v1685 = vpack.c.b16 %v1633, %v1631
    %v1686 = vpack.c.b16 %v1634, %v1632
    %v1687 = vpack.c.b16 %v1637, %v1635
    %v1688 = vpack.c.b16 %v1638, %v1636
    %v1689 = vpack.c.b16 %v1641, %v1639
    %v1690 = vpack.c.b16 %v1642, %v1640
    %v1691 = vpack.c.b16 %v1645, %v1643
    %v1692 = vpack.c.b16 %v1646, %v1644
    %v1693 = vpack.c.b16 %v1649, %v1647
    %v1694 = vpack.c.b16 %v1650, %v1648
    %v1695 = vpack.c.b16 %v1653, %v1651
    %v1696 = vpack.c.b16 %v1654, %v1652
    %v1697 = vpack.c.b16 %v1657, %v1655
    %v1698 = vpack.c.b16 %v1658, %v1656
    %v1699 = vpack.c.b16 %v1661, %v1659
    %v1700 = vpack.c.b16 %v1662, %v1660
    %v1701 = vpack.c.b16 %v1665, %v1663
    %v1702 = vpack.c.b16 %v1666, %v1664
    %v1703 = vpack.c.b16 %v1669, %v1667
    %v1704 = vpack.c.b16 %v1670, %v1668
    %v1705 = vpack.c.b16 %v1673, %v1671
    %v1706 = vpack.c.b16 %v1674, %v1672
    %1739 = vmatprep.subr.bf16.mxu0 %v1690
    %1740 = vmatpush1.bf16.msra.mxu0 %v1689
    %1741 = vmatprep.subr.bf16.mxu0 %v1688
    %1742 = vmatpush1.bf16.msra.mxu0 %v1687
    %1743 = vmatprep.subr.bf16.mxu0 %v1686
    %1744 = vmatpush1.bf16.msra.mxu0 %v1685
    %1745 = vmatprep.subr.bf16.mxu0 %v1684
    %1746 = vmatpush1.bf16.msra.mxu0 %v1683
    %1747 = vmatprep.subr.bf16.mxu0 %v1682
    %1748 = vmatpush1.bf16.msra.mxu0 %v1681
    %1749 = vmatprep.subr.bf16.mxu0 %v1680
    %1750 = vmatpush1.bf16.msra.mxu0 %v1679
    %1751 = vmatprep.subr.bf16.mxu0 %v1678
    %1752 = vmatpush1.bf16.msra.mxu0 %v1677
    %1753 = vmatprep.subr.bf16.mxu0 %v1676
    %1754 = vmatpush1.bf16.msra.mxu0 %v1675
    %1755 = vmatprep.subr.bf16.mxu0 %v1706
    %1756 = vmatpush2.bf16.msra.mxu0 %v1705
    %1757 = vmatprep.subr.bf16.mxu0 %v1704
    %1758 = vmatpush2.bf16.msra.mxu0 %v1703
    %1759 = vmatprep.subr.bf16.mxu0 %v1702
    %1760 = vmatpush2.bf16.msra.mxu0 %v1701
    %1761 = vmatprep.subr.bf16.mxu0 %v1700
    %1762 = vmatpush2.bf16.msra.mxu0 %v1699
    %1763 = vmatprep.subr.bf16.mxu0 %v1698
    %1764 = vmatpush2.bf16.msra.mxu0 %v1697
    %1765 = vmatprep.subr.bf16.mxu0 %v1696
    %1766 = vmatpush2.bf16.msra.mxu0 %v1695
    %1767 = vmatprep.subr.bf16.mxu0 %v1694
    %1768 = vmatpush2.bf16.msra.mxu0 %v1693
    %1769 = vmatprep.subr.bf16.mxu0 %v1692
    %1770 = vmatpush2.bf16.msra.mxu0 %v1691
    %1771 = vmatprep.mubr.bf16.mxu0 %v1504
    %1772 = vmatmul.mubr.bf16.gmra.mxu0 %v1503
    %v1773 = vpop.f32.mrf.mxu0
    %v1774 = vadd.f32 %v1572, %v1773
    %v1775 = vpop.f32.mrf.mxu0
    %v1776 = vadd.f32 %v1576, %v1775
    %v1777 = vpop.f32.mrf.mxu0
    %v1778 = vadd.f32 %v1572, %v1777
    %v1779 = vpop.f32.mrf.mxu0
    %v1780 = vadd.f32 %v1576, %v1779
    %1781 = vmatprep.mubr.bf16.mxu0 %v1506
    %1782 = vmatmul.mubr.bf16.gmra.mxu0 %v1505
    %v1783 = vpop.f32.mrf.mxu0
    %v1784 = vadd.f32 %v1572, %v1783
    %v1785 = vpop.f32.mrf.mxu0
    %v1786 = vadd.f32 %v1576, %v1785
    %v1787 = vpop.f32.mrf.mxu0
    %v1788 = vadd.f32 %v1572, %v1787
    %v1789 = vpop.f32.mrf.mxu0
    %v1790 = vadd.f32 %v1576, %v1789
    %1791 = vmatprep.mubr.bf16.mxu0 %v1508
    %1792 = vmatmul.mubr.bf16.gmra.mxu0 %v1507
    %v1793 = vpop.f32.mrf.mxu0
    %v1794 = vadd.f32 %v1572, %v1793
    %v1795 = vpop.f32.mrf.mxu0
    %v1796 = vadd.f32 %v1576, %v1795
    %v1797 = vpop.f32.mrf.mxu0
    %v1798 = vadd.f32 %v1572, %v1797
    %v1799 = vpop.f32.mrf.mxu0
    %v1800 = vadd.f32 %v1576, %v1799
    %1801 = vmatprep.mubr.bf16.mxu0 %v1510
    %1802 = vmatmul.mubr.bf16.gmra.mxu0 %v1509
    %v1803 = vpop.f32.mrf.mxu0
    %v1804 = vadd.f32 %v1572, %v1803
    %v1805 = vpop.f32.mrf.mxu0
    %v1806 = vadd.f32 %v1576, %v1805
    %v1807 = vpop.f32.mrf.mxu0
    %v1808 = vadd.f32 %v1572, %v1807
    %v1809 = vpop.f32.mrf.mxu0
    %v1810 = vadd.f32 %v1576, %v1809
    %1811 = vmatprep.mubr.bf16.mxu0 %v1512
    %1812 = vmatmul.mubr.bf16.gmra.mxu0 %v1511
    %v1813 = vpop.f32.mrf.mxu0
    %v1814 = vadd.f32 %v1572, %v1813
    %v1815 = vpop.f32.mrf.mxu0
    %v1816 = vadd.f32 %v1576, %v1815
    %v1817 = vpop.f32.mrf.mxu0
    %v1818 = vadd.f32 %v1572, %v1817
    %v1819 = vpop.f32.mrf.mxu0
    %v1820 = vadd.f32 %v1576, %v1819
    %1821 = vmatprep.mubr.bf16.mxu0 %v1514
    %1822 = vmatmul.mubr.bf16.gmra.mxu0 %v1513
    %v1823 = vpop.f32.mrf.mxu0
    %v1824 = vadd.f32 %v1572, %v1823
    %v1825 = vpop.f32.mrf.mxu0
    %v1826 = vadd.f32 %v1576, %v1825
    %v1827 = vpop.f32.mrf.mxu0
    %v1828 = vadd.f32 %v1572, %v1827
    %v1829 = vpop.f32.mrf.mxu0
    %v1830 = vadd.f32 %v1576, %v1829
    %1831 = vmatprep.mubr.bf16.mxu0 %v1516
    %1832 = vmatmul.mubr.bf16.gmra.mxu0 %v1515
    %v1833 = vpop.f32.mrf.mxu0
    %v1834 = vadd.f32 %v1572, %v1833
    %v1835 = vpop.f32.mrf.mxu0
    %v1836 = vadd.f32 %v1576, %v1835
    %v1837 = vpop.f32.mrf.mxu0
    %v1838 = vadd.f32 %v1572, %v1837
    %v1839 = vpop.f32.mrf.mxu0
    %v1840 = vadd.f32 %v1576, %v1839
    %1841 = vmatprep.mubr.bf16.mxu0 %v1518
    %1842 = vmatmul.mubr.bf16.gmra.mxu0 %v1517
    %v1843 = vpop.f32.mrf.mxu0
    %v1844 = vadd.f32 %v1572, %v1843
    %v1845 = vpop.f32.mrf.mxu0
    %v1846 = vadd.f32 %v1576, %v1845
    %v1847 = vpop.f32.mrf.mxu0
    %v1848 = vadd.f32 %v1572, %v1847
    %v1849 = vpop.f32.mrf.mxu0
    %v1850 = vadd.f32 %v1576, %v1849
    %1851 = vmatprep.mubr.bf16.mxu0 %v1520
    %1852 = vmatmul.mubr.bf16.gmra.mxu0 %v1519
    %v1853 = vpop.f32.mrf.mxu0
    %v1854 = vadd.f32 %v1572, %v1853
    %v1855 = vpop.f32.mrf.mxu0
    %v1856 = vadd.f32 %v1576, %v1855
    %v1857 = vpop.f32.mrf.mxu0
    %v1858 = vadd.f32 %v1572, %v1857
    %v1859 = vpop.f32.mrf.mxu0
    %v1860 = vadd.f32 %v1576, %v1859
    %1861 = vmatprep.mubr.bf16.mxu0 %v1522
    %1862 = vmatmul.mubr.bf16.gmra.mxu0 %v1521
    %v1863 = vpop.f32.mrf.mxu0
    %v1864 = vadd.f32 %v1572, %v1863
    %v1865 = vpop.f32.mrf.mxu0
    %v1866 = vadd.f32 %v1576, %v1865
    %v1867 = vpop.f32.mrf.mxu0
    %v1868 = vadd.f32 %v1572, %v1867
    %v1869 = vpop.f32.mrf.mxu0
    %v1870 = vadd.f32 %v1576, %v1869
    %1871 = vmatprep.mubr.bf16.mxu0 %v1524
    %1872 = vmatmul.mubr.bf16.gmra.mxu0 %v1523
    %v1873 = vpop.f32.mrf.mxu0
    %v1874 = vadd.f32 %v1572, %v1873
    %v1875 = vpop.f32.mrf.mxu0
    %v1876 = vadd.f32 %v1576, %v1875
    %v1877 = vpop.f32.mrf.mxu0
    %v1878 = vadd.f32 %v1572, %v1877
    %v1879 = vpop.f32.mrf.mxu0
    %v1880 = vadd.f32 %v1576, %v1879
    %1881 = vmatprep.mubr.bf16.mxu0 %v1526
    %1882 = vmatmul.mubr.bf16.gmra.mxu0 %v1525
    %v1883 = vpop.f32.mrf.mxu0
    %v1884 = vadd.f32 %v1572, %v1883
    %v1885 = vpop.f32.mrf.mxu0
    %v1886 = vadd.f32 %v1576, %v1885
    %v1887 = vpop.f32.mrf.mxu0
    %v1888 = vadd.f32 %v1572, %v1887
    %v1889 = vpop.f32.mrf.mxu0
    %v1890 = vadd.f32 %v1576, %v1889
    %1891 = vmatprep.mubr.bf16.mxu0 %v1528
    %1892 = vmatmul.mubr.bf16.gmra.mxu0 %v1527
    %v1893 = vpop.f32.mrf.mxu0
    %v1894 = vadd.f32 %v1572, %v1893
    %v1895 = vpop.f32.mrf.mxu0
    %v1896 = vadd.f32 %v1576, %v1895
    %v1897 = vpop.f32.mrf.mxu0
    %v1898 = vadd.f32 %v1572, %v1897
    %v1899 = vpop.f32.mrf.mxu0
    %v1900 = vadd.f32 %v1576, %v1899
    %1901 = vmatprep.mubr.bf16.mxu0 %v1530
    %1902 = vmatmul.mubr.bf16.gmra.mxu0 %v1529
    %v1903 = vpop.f32.mrf.mxu0
    %v1904 = vadd.f32 %v1572, %v1903
    %v1905 = vpop.f32.mrf.mxu0
    %v1906 = vadd.f32 %v1576, %v1905
    %v1907 = vpop.f32.mrf.mxu0
    %v1908 = vadd.f32 %v1572, %v1907
    %v1909 = vpop.f32.mrf.mxu0
    %v1910 = vadd.f32 %v1576, %v1909
    %1911 = vmatprep.mubr.bf16.mxu0 %v1532
    %1912 = vmatmul.mubr.bf16.gmra.mxu0 %v1531
    %v1913 = vpop.f32.mrf.mxu0
    %v1914 = vadd.f32 %v1572, %v1913
    %v1915 = vpop.f32.mrf.mxu0
    %v1916 = vadd.f32 %v1576, %v1915
    %v1917 = vpop.f32.mrf.mxu0
    %v1918 = vadd.f32 %v1572, %v1917
    %v1919 = vpop.f32.mrf.mxu0
    %v1920 = vadd.f32 %v1576, %v1919
    %1921 = vmatprep.mubr.bf16.mxu0 %v1534
    %1922 = vmatmul.mubr.bf16.gmra.mxu0 %v1533
    %v1923 = vpop.f32.mrf.mxu0
    %v1924 = vadd.f32 %v1572, %v1923
    %v1925 = vpop.f32.mrf.mxu0
    %v1926 = vadd.f32 %v1576, %v1925
    %v1927 = vpop.f32.mrf.mxu0
    %v1928 = vadd.f32 %v1572, %v1927
    %v1929 = vpop.f32.mrf.mxu0
    %v1930 = vadd.f32 %v1576, %v1929
    %1931 = vdwg.mxu0
    %v1932 = vmax.f32 %v1774, 0.0
    %v1933 = vmax.f32 %v1776, 0.0
    %v1934 = vmax.f32 %v1778, 0.0
    %v1935 = vmax.f32 %v1780, 0.0
    %v1936 = vmax.f32 %v1784, 0.0
    %v1937 = vmax.f32 %v1786, 0.0
    %v1938 = vmax.f32 %v1788, 0.0
    %v1939 = vmax.f32 %v1790, 0.0
    %v1940 = vmax.f32 %v1794, 0.0
    %v1941 = vmax.f32 %v1796, 0.0
    %v1942 = vmax.f32 %v1798, 0.0
    %v1943 = vmax.f32 %v1800, 0.0
    %v1944 = vmax.f32 %v1804, 0.0
    %v1945 = vmax.f32 %v1806, 0.0
    %v1946 = vmax.f32 %v1808, 0.0
    %v1947 = vmax.f32 %v1810, 0.0
    %v1948 = vmax.f32 %v1814, 0.0
    %v1949 = vmax.f32 %v1816, 0.0
    %v1950 = vmax.f32 %v1818, 0.0
    %v1951 = vmax.f32 %v1820, 0.0
    %v1952 = vmax.f32 %v1824, 0.0
    %v1953 = vmax.f32 %v1826, 0.0
    %v1954 = vmax.f32 %v1828, 0.0
    %v1955 = vmax.f32 %v1830, 0.0
    %v1956 = vmax.f32 %v1834, 0.0
    %v1957 = vmax.f32 %v1836, 0.0
    %v1958 = vmax.f32 %v1838, 0.0
    %v1959 = vmax.f32 %v1840, 0.0
    %v1960 = vmax.f32 %v1844, 0.0
    %v1961 = vmax.f32 %v1846, 0.0
    %v1962 = vmax.f32 %v1848, 0.0
    %v1963 = vmax.f32 %v1850, 0.0
    %v1964 = vmax.f32 %v1854, 0.0
    %v1965 = vmax.f32 %v1856, 0.0
    %v1966 = vmax.f32 %v1858, 0.0
    %v1967 = vmax.f32 %v1860, 0.0
    %v1968 = vmax.f32 %v1864, 0.0
    %v1969 = vmax.f32 %v1866, 0.0
    %v1970 = vmax.f32 %v1868, 0.0
    %v1971 = vmax.f32 %v1870, 0.0
    %v1972 = vmax.f32 %v1874, 0.0
    %v1973 = vmax.f32 %v1876, 0.0
    %v1974 = vmax.f32 %v1878, 0.0
    %v1975 = vmax.f32 %v1880, 0.0
    %v1976 = vmax.f32 %v1884, 0.0
    %v1977 = vmax.f32 %v1886, 0.0
    %v1978 = vmax.f32 %v1888, 0.0
    %v1979 = vmax.f32 %v1890, 0.0
    %v1980 = vmax.f32 %v1894, 0.0
    %v1981 = vmax.f32 %v1896, 0.0
    %v1982 = vmax.f32 %v1898, 0.0
    %v1983 = vmax.f32 %v1900, 0.0
    %v1984 = vmax.f32 %v1904, 0.0
    %v1985 = vmax.f32 %v1906, 0.0
    %v1986 = vmax.f32 %v1908, 0.0
    %v1987 = vmax.f32 %v1910, 0.0
    %v1988 = vmax.f32 %v1914, 0.0
    %v1989 = vmax.f32 %v1916, 0.0
    %v1990 = vmax.f32 %v1918, 0.0
    %v1991 = vmax.f32 %v1920, 0.0
    %v1992 = vmax.f32 %v1924, 0.0
    %v1993 = vmax.f32 %v1926, 0.0
    %v1994 = vmax.f32 %v1928, 0.0
    %v1995 = vmax.f32 %v1930, 0.0
    %v1996 = vpack.c.bf16 %v1934, %v1932
    %v1997 = vpack.c.bf16 %v1935, %v1933
    %v1998 = vpack.c.bf16 %v1938, %v1936
    %v1999 = vpack.c.bf16 %v1939, %v1937
    %v2000 = vpack.c.bf16 %v1942, %v1940
    %v2001 = vpack.c.bf16 %v1943, %v1941
    %v2002 = vpack.c.bf16 %v1946, %v1944
    %v2003 = vpack.c.bf16 %v1947, %v1945
    %v2004 = vpack.c.bf16 %v1950, %v1948
    %v2005 = vpack.c.bf16 %v1951, %v1949
    %v2006 = vpack.c.bf16 %v1954, %v1952
    %v2007 = vpack.c.bf16 %v1955, %v1953
    %v2008 = vpack.c.bf16 %v1958, %v1956
    %v2009 = vpack.c.bf16 %v1959, %v1957
    %v2010 = vpack.c.bf16 %v1962, %v1960
    %v2011 = vpack.c.bf16 %v1963, %v1961
    %v2012 = vpack.c.bf16 %v1966, %v1964
    %v2013 = vpack.c.bf16 %v1967, %v1965
    %v2014 = vpack.c.bf16 %v1970, %v1968
    %v2015 = vpack.c.bf16 %v1971, %v1969
    %v2016 = vpack.c.bf16 %v1974, %v1972
    %v2017 = vpack.c.bf16 %v1975, %v1973
    %v2018 = vpack.c.bf16 %v1978, %v1976
    %v2019 = vpack.c.bf16 %v1979, %v1977
    %v2020 = vpack.c.bf16 %v1982, %v1980
    %v2021 = vpack.c.bf16 %v1983, %v1981
    %v2022 = vpack.c.bf16 %v1986, %v1984
    %v2023 = vpack.c.bf16 %v1987, %v1985
    %v2024 = vpack.c.bf16 %v1990, %v1988
    %v2025 = vpack.c.bf16 %v1991, %v1989
    %v2026 = vpack.c.bf16 %v1994, %v1992
    %v2027 = vpack.c.bf16 %v1995, %v1993
    %v2028 = vld [vmem:[%s6] sm:$0xf]
    %v2029 = vld [vmem:[%s6 + $0x4] sm:$0xf]
    %v2030 = vld [vmem:[%s6 + $0x8] sm:$0xf]
    %v2031 = vld [vmem:[%s6 + $0xc] sm:$0xf]
    %v2032 = vld [vmem:[%s6 + $0x10] sm:$0xf]
    %v2033 = vld [vmem:[%s6 + $0x14] sm:$0xf]
    %v2034 = vld [vmem:[%s6 + $0x18] sm:$0xf]
    %v2035 = vld [vmem:[%s6 + $0x1c] sm:$0xf]
    %v2036 = vld [vmem:[%s6 + $0x20] sm:$0xf]
    %v2037 = vld [vmem:[%s6 + $0x24] sm:$0xf]
    %v2038 = vld [vmem:[%s6 + $0x28] sm:$0xf]
    %v2039 = vld [vmem:[%s6 + $0x2c] sm:$0xf]
    %v2040 = vld [vmem:[%s6 + $0x30] sm:$0xf]
    %v2041 = vld [vmem:[%s6 + $0x34] sm:$0xf]
    %v2042 = vld [vmem:[%s6 + $0x38] sm:$0xf]
    %v2043 = vld [vmem:[%s6 + $0x3c] sm:$0xf]
    %v2044 = vld [vmem:[%s6 + $0x40] sm:$0xf]
    %v2045 = vld [vmem:[%s6 + $0x44] sm:$0xf]
    %v2046 = vld [vmem:[%s6 + $0x48] sm:$0xf]
    %v2047 = vld [vmem:[%s6 + $0x4c] sm:$0xf]
    %v2048 = vld [vmem:[%s6 + $0x50] sm:$0xf]
    %v2049 = vld [vmem:[%s6 + $0x54] sm:$0xf]
    %v2050 = vld [vmem:[%s6 + $0x58] sm:$0xf]
    %v2051 = vld [vmem:[%s6 + $0x5c] sm:$0xf]
    %v2052 = vld [vmem:[%s6 + $0x60] sm:$0xf]
    %v2053 = vld [vmem:[%s6 + $0x64] sm:$0xf]
    %v2054 = vld [vmem:[%s6 + $0x68] sm:$0xf]
    %v2055 = vld [vmem:[%s6 + $0x6c] sm:$0xf]
    %v2056 = vld [vmem:[%s6 + $0x70] sm:$0xf]
    %v2057 = vld [vmem:[%s6 + $0x74] sm:$0xf]
    %v2058 = vld [vmem:[%s6 + $0x78] sm:$0xf]
    %v2059 = vld [vmem:[%s6 + $0x7c] sm:$0xf]
    %v2060 = vld [vmem:[%s7] sm:$0x1]
    %v2062 = vlaneseq
    %v2063 = vshrl.u32 %v2062, 7
    %v2064 = vsub.s32 0, %v2063
    %v2065 = vrot.slane %v2060, %v2064
    %v2099 = vunpack.c.l.b16 %v2028
    %v2100 = vunpack.c.l.b16 %v2029
    %v2101 = vunpack.c.l.b16 %v2030
    %v2102 = vunpack.c.l.b16 %v2031
    %v2103 = vunpack.c.l.b16 %v2032
    %v2104 = vunpack.c.l.b16 %v2033
    %v2105 = vunpack.c.l.b16 %v2034
    %v2106 = vunpack.c.l.b16 %v2035
    %v2107 = vunpack.c.l.b16 %v2036
    %v2108 = vunpack.c.l.b16 %v2037
    %v2109 = vunpack.c.l.b16 %v2038
    %v2110 = vunpack.c.l.b16 %v2039
    %v2111 = vunpack.c.l.b16 %v2040
    %v2112 = vunpack.c.l.b16 %v2041
    %v2113 = vunpack.c.l.b16 %v2042
    %v2114 = vunpack.c.l.b16 %v2043
    %v2115 = vunpack.c.l.b16 %v2044
    %v2116 = vunpack.c.l.b16 %v2045
    %v2117 = vunpack.c.l.b16 %v2046
    %v2118 = vunpack.c.l.b16 %v2047
    %v2119 = vunpack.c.l.b16 %v2048
    %v2120 = vunpack.c.l.b16 %v2049
    %v2121 = vunpack.c.l.b16 %v2050
    %v2122 = vunpack.c.l.b16 %v2051
    %v2123 = vunpack.c.l.b16 %v2052
    %v2124 = vunpack.c.l.b16 %v2053
    %v2125 = vunpack.c.l.b16 %v2054
    %v2126 = vunpack.c.l.b16 %v2055
    %v2127 = vunpack.c.l.b16 %v2056
    %v2128 = vunpack.c.l.b16 %v2057
    %v2129 = vunpack.c.l.b16 %v2058
    %v2130 = vunpack.c.l.b16 %v2059
    %v2131 = vpack.c.b16 %v2100, %v2099
    %v2132 = vpack.c.b16 %v2102, %v2101
    %v2133 = vpack.c.b16 %v2104, %v2103
    %v2134 = vpack.c.b16 %v2106, %v2105
    %v2135 = vpack.c.b16 %v2108, %v2107
    %v2136 = vpack.c.b16 %v2110, %v2109
    %v2137 = vpack.c.b16 %v2112, %v2111
    %v2138 = vpack.c.b16 %v2114, %v2113
    %v2139 = vpack.c.b16 %v2116, %v2115
    %v2140 = vpack.c.b16 %v2118, %v2117
    %v2141 = vpack.c.b16 %v2120, %v2119
    %v2142 = vpack.c.b16 %v2122, %v2121
    %v2143 = vpack.c.b16 %v2124, %v2123
    %v2144 = vpack.c.b16 %v2126, %v2125
    %v2145 = vpack.c.b16 %v2128, %v2127
    %v2146 = vpack.c.b16 %v2130, %v2129
    %2163 = vmatprep.subr.bf16.mxu0 0
    %2164 = vmatpush1.bf16.msra.mxu0 %v2138
    %2165 = vmatprep.subr.bf16.mxu0 0
    %2166 = vmatpush1.bf16.msra.mxu0 %v2137
    %2167 = vmatprep.subr.bf16.mxu0 0
    %2168 = vmatpush1.bf16.msra.mxu0 %v2136
    %2169 = vmatprep.subr.bf16.mxu0 0
    %2170 = vmatpush1.bf16.msra.mxu0 %v2135
    %2171 = vmatprep.subr.bf16.mxu0 0
    %2172 = vmatpush1.bf16.msra.mxu0 %v2134
    %2173 = vmatprep.subr.bf16.mxu0 0
    %2174 = vmatpush1.bf16.msra.mxu0 %v2133
    %2175 = vmatprep.subr.bf16.mxu0 0
    %2176 = vmatpush1.bf16.msra.mxu0 %v2132
    %2177 = vmatprep.subr.bf16.mxu0 0
    %2178 = vmatpush1.bf16.msra.mxu0 %v2131
    %2179 = vmatprep.subr.bf16.mxu0 0
    %2180 = vmatpush2.bf16.msra.mxu0 %v2146
    %2181 = vmatprep.subr.bf16.mxu0 0
    %2182 = vmatpush2.bf16.msra.mxu0 %v2145
    %2183 = vmatprep.subr.bf16.mxu0 0
    %2184 = vmatpush2.bf16.msra.mxu0 %v2144
    %2185 = vmatprep.subr.bf16.mxu0 0
    %2186 = vmatpush2.bf16.msra.mxu0 %v2143
    %2187 = vmatprep.subr.bf16.mxu0 0
    %2188 = vmatpush2.bf16.msra.mxu0 %v2142
    %2189 = vmatprep.subr.bf16.mxu0 0
    %2190 = vmatpush2.bf16.msra.mxu0 %v2141
    %2191 = vmatprep.subr.bf16.mxu0 0
    %2192 = vmatpush2.bf16.msra.mxu0 %v2140
    %2193 = vmatprep.subr.bf16.mxu0 0
    %2194 = vmatpush2.bf16.msra.mxu0 %v2139
    %2195 = vmatprep.mubr.bf16.mxu0 %v1997
    %2196 = vmatmul.mubr.bf16.gmra.mxu0 %v1996
    %v2197 = vpop.f32.mrf.mxu0
    %v2198 = vadd.f32 %v2065, %v2197
    %v2199 = vpop.f32.mrf.mxu0
    %v2200 = vpop.f32.mrf.mxu0
    %v2201 = vadd.f32 %v2065, %v2200
    %v2202 = vpop.f32.mrf.mxu0
    %2203 = vmatprep.mubr.bf16.mxu0 %v1999
    %2204 = vmatmul.mubr.bf16.gmra.mxu0 %v1998
    %v2205 = vpop.f32.mrf.mxu0
    %v2206 = vadd.f32 %v2065, %v2205
    %v2207 = vpop.f32.mrf.mxu0
    %v2208 = vpop.f32.mrf.mxu0
    %v2209 = vadd.f32 %v2065, %v2208
    %v2210 = vpop.f32.mrf.mxu0
    %2211 = vmatprep.mubr.bf16.mxu0 %v2001
    %2212 = vmatmul.mubr.bf16.gmra.mxu0 %v2000
    %v2213 = vpop.f32.mrf.mxu0
    %v2214 = vadd.f32 %v2065, %v2213
    %v2215 = vpop.f32.mrf.mxu0
    %v2216 = vpop.f32.mrf.mxu0
    %v2217 = vadd.f32 %v2065, %v2216
    %v2218 = vpop.f32.mrf.mxu0
    %2219 = vmatprep.mubr.bf16.mxu0 %v2003
    %2220 = vmatmul.mubr.bf16.gmra.mxu0 %v2002
    %v2221 = vpop.f32.mrf.mxu0
    %v2222 = vadd.f32 %v2065, %v2221
    %v2223 = vpop.f32.mrf.mxu0
    %v2224 = vpop.f32.mrf.mxu0
    %v2225 = vadd.f32 %v2065, %v2224
    %v2226 = vpop.f32.mrf.mxu0
    %2227 = vmatprep.mubr.bf16.mxu0 %v2005
    %2228 = vmatmul.mubr.bf16.gmra.mxu0 %v2004
    %v2229 = vpop.f32.mrf.mxu0
    %v2230 = vadd.f32 %v2065, %v2229
    %v2231 = vpop.f32.mrf.mxu0
    %v2232 = vpop.f32.mrf.mxu0
    %v2233 = vadd.f32 %v2065, %v2232
    %v2234 = vpop.f32.mrf.mxu0
    %2235 = vmatprep.mubr.bf16.mxu0 %v2007
    %2236 = vmatmul.mubr.bf16.gmra.mxu0 %v2006
    %v2237 = vpop.f32.mrf.mxu0
    %v2238 = vadd.f32 %v2065, %v2237
    %v2239 = vpop.f32.mrf.mxu0
    %v2240 = vpop.f32.mrf.mxu0
    %v2241 = vadd.f32 %v2065, %v2240
    %v2242 = vpop.f32.mrf.mxu0
    %2243 = vmatprep.mubr.bf16.mxu0 %v2009
    %2244 = vmatmul.mubr.bf16.gmra.mxu0 %v2008
    %v2245 = vpop.f32.mrf.mxu0
    %v2246 = vadd.f32 %v2065, %v2245
    %v2247 = vpop.f32.mrf.mxu0
    %v2248 = vpop.f32.mrf.mxu0
    %v2249 = vadd.f32 %v2065, %v2248
    %v2250 = vpop.f32.mrf.mxu0
    %2251 = vmatprep.mubr.bf16.mxu0 %v2011
    %2252 = vmatmul.mubr.bf16.gmra.mxu0 %v2010
    %v2253 = vpop.f32.mrf.mxu0
    %v2254 = vadd.f32 %v2065, %v2253
    %v2255 = vpop.f32.mrf.mxu0
    %v2256 = vpop.f32.mrf.mxu0
    %v2257 = vadd.f32 %v2065, %v2256
    %v2258 = vpop.f32.mrf.mxu0
    %2259 = vmatprep.mubr.bf16.mxu0 %v2013
    %2260 = vmatmul.mubr.bf16.gmra.mxu0 %v2012
    %v2261 = vpop.f32.mrf.mxu0
    %v2262 = vadd.f32 %v2065, %v2261
    %v2263 = vpop.f32.mrf.mxu0
    %v2264 = vpop.f32.mrf.mxu0
    %v2265 = vadd.f32 %v2065, %v2264
    %v2266 = vpop.f32.mrf.mxu0
    %2267 = vmatprep.mubr.bf16.mxu0 %v2015
    %2268 = vmatmul.mubr.bf16.gmra.mxu0 %v2014
    %v2269 = vpop.f32.mrf.mxu0
    %v2270 = vadd.f32 %v2065, %v2269
    %v2271 = vpop.f32.mrf.mxu0
    %v2272 = vpop.f32.mrf.mxu0
    %v2273 = vadd.f32 %v2065, %v2272
    %v2274 = vpop.f32.mrf.mxu0
    %2275 = vmatprep.mubr.bf16.mxu0 %v2017
    %2276 = vmatmul.mubr.bf16.gmra.mxu0 %v2016
    %v2277 = vpop.f32.mrf.mxu0
    %v2278 = vadd.f32 %v2065, %v2277
    %v2279 = vpop.f32.mrf.mxu0
    %v2280 = vpop.f32.mrf.mxu0
    %v2281 = vadd.f32 %v2065, %v2280
    %v2282 = vpop.f32.mrf.mxu0
    %2283 = vmatprep.mubr.bf16.mxu0 %v2019
    %2284 = vmatmul.mubr.bf16.gmra.mxu0 %v2018
    %v2285 = vpop.f32.mrf.mxu0
    %v2286 = vadd.f32 %v2065, %v2285
    %v2287 = vpop.f32.mrf.mxu0
    %v2288 = vpop.f32.mrf.mxu0
    %v2289 = vadd.f32 %v2065, %v2288
    %v2290 = vpop.f32.mrf.mxu0
    %2291 = vmatprep.mubr.bf16.mxu0 %v2021
    %2292 = vmatmul.mubr.bf16.gmra.mxu0 %v2020
    %v2293 = vpop.f32.mrf.mxu0
    %v2294 = vadd.f32 %v2065, %v2293
    %v2295 = vpop.f32.mrf.mxu0
    %v2296 = vpop.f32.mrf.mxu0
    %v2297 = vadd.f32 %v2065, %v2296
    %v2298 = vpop.f32.mrf.mxu0
    %2299 = vmatprep.mubr.bf16.mxu0 %v2023
    %2300 = vmatmul.mubr.bf16.gmra.mxu0 %v2022
    %v2301 = vpop.f32.mrf.mxu0
    %v2302 = vadd.f32 %v2065, %v2301
    %v2303 = vpop.f32.mrf.mxu0
    %v2304 = vpop.f32.mrf.mxu0
    %v2305 = vadd.f32 %v2065, %v2304
    %v2306 = vpop.f32.mrf.mxu0
    %2307 = vmatprep.mubr.bf16.mxu0 %v2025
    %2308 = vmatmul.mubr.bf16.gmra.mxu0 %v2024
    %v2309 = vpop.f32.mrf.mxu0
    %v2310 = vadd.f32 %v2065, %v2309
    %v2311 = vpop.f32.mrf.mxu0
    %v2312 = vpop.f32.mrf.mxu0
    %v2313 = vadd.f32 %v2065, %v2312
    %v2314 = vpop.f32.mrf.mxu0
    %2315 = vmatprep.mubr.bf16.mxu0 %v2027
    %2316 = vmatmul.mubr.bf16.gmra.mxu0 %v2026
    %v2317 = vpop.f32.mrf.mxu0
    %v2318 = vadd.f32 %v2065, %v2317
    %v2319 = vpop.f32.mrf.mxu0
    %v2320 = vpop.f32.mrf.mxu0
    %v2321 = vadd.f32 %v2065, %v2320
    %v2322 = vpop.f32.mrf.mxu0
    %2323 = vdwg.mxu0
    %v2324 = vmax.f32 %v2198, 0.0
    %v2325 = vmax.f32 %v2201, 0.0
    %v2326 = vmax.f32 %v2206, 0.0
    %v2327 = vmax.f32 %v2209, 0.0
    %v2328 = vmax.f32 %v2214, 0.0
    %v2329 = vmax.f32 %v2217, 0.0
    %v2330 = vmax.f32 %v2222, 0.0
    %v2331 = vmax.f32 %v2225, 0.0
    %v2332 = vmax.f32 %v2230, 0.0
    %v2333 = vmax.f32 %v2233, 0.0
    %v2334 = vmax.f32 %v2238, 0.0
    %v2335 = vmax.f32 %v2241, 0.0
    %v2336 = vmax.f32 %v2246, 0.0
    %v2337 = vmax.f32 %v2249, 0.0
    %v2338 = vmax.f32 %v2254, 0.0
    %v2339 = vmax.f32 %v2257, 0.0
    %v2340 = vmax.f32 %v2262, 0.0
    %v2341 = vmax.f32 %v2265, 0.0
    %v2342 = vmax.f32 %v2270, 0.0
    %v2343 = vmax.f32 %v2273, 0.0
    %v2344 = vmax.f32 %v2278, 0.0
    %v2345 = vmax.f32 %v2281, 0.0
    %v2346 = vmax.f32 %v2286, 0.0
    %v2347 = vmax.f32 %v2289, 0.0
    %v2348 = vmax.f32 %v2294, 0.0
    %v2349 = vmax.f32 %v2297, 0.0
    %v2350 = vmax.f32 %v2302, 0.0
    %v2351 = vmax.f32 %v2305, 0.0
    %v2352 = vmax.f32 %v2310, 0.0
    %v2353 = vmax.f32 %v2313, 0.0
    %v2354 = vmax.f32 %v2318, 0.0
    %v2355 = vmax.f32 %v2321, 0.0
    %v2356 = vld [vmem:[%s8] sm:$0x1]
    %v2358 = vlaneseq
    %v2359 = vshrl.u32 %v2358, 7
    %v2360 = vsub.s32 0, %v2359
    %v2361 = vrot.slane %v2356, %v2360
    %v2363 = vmul.f32 %v2324, %v2361
    %v2364 = vmul.f32 %v2325, %v2361
    %v2365 = vmul.f32 %v2326, %v2361
    %v2366 = vmul.f32 %v2327, %v2361
    %v2367 = vmul.f32 %v2328, %v2361
    %v2368 = vmul.f32 %v2329, %v2361
    %v2369 = vmul.f32 %v2330, %v2361
    %v2370 = vmul.f32 %v2331, %v2361
    %v2371 = vmul.f32 %v2332, %v2361
    %v2372 = vmul.f32 %v2333, %v2361
    %v2373 = vmul.f32 %v2334, %v2361
    %v2374 = vmul.f32 %v2335, %v2361
    %v2375 = vmul.f32 %v2336, %v2361
    %v2376 = vmul.f32 %v2337, %v2361
    %v2377 = vmul.f32 %v2338, %v2361
    %v2378 = vmul.f32 %v2339, %v2361
    %v2379 = vmul.f32 %v2340, %v2361
    %v2380 = vmul.f32 %v2341, %v2361
    %v2381 = vmul.f32 %v2342, %v2361
    %v2382 = vmul.f32 %v2343, %v2361
    %v2383 = vmul.f32 %v2344, %v2361
    %v2384 = vmul.f32 %v2345, %v2361
    %v2385 = vmul.f32 %v2346, %v2361
    %v2386 = vmul.f32 %v2347, %v2361
    %v2387 = vmul.f32 %v2348, %v2361
    %v2388 = vmul.f32 %v2349, %v2361
    %v2389 = vmul.f32 %v2350, %v2361
    %v2390 = vmul.f32 %v2351, %v2361
    %v2391 = vmul.f32 %v2352, %v2361
    %v2392 = vmul.f32 %v2353, %v2361
    %v2393 = vmul.f32 %v2354, %v2361
    %v2394 = vmul.f32 %v2355, %v2361
    %2395 = vadd.xlane.f32.xlu0 %v2363
    %v2396 = vpop.xlane.xlu0 %2395
    %2397 = vadd.xlane.f32.xlu0 %v2364
    %v2398 = vpop.xlane.xlu0 %2397
    %2399 = vadd.xlane.f32.xlu0 %v2365
    %v2400 = vpop.xlane.xlu0 %2399
    %2401 = vadd.xlane.f32.xlu0 %v2366
    %v2402 = vpop.xlane.xlu0 %2401
    %2403 = vadd.xlane.f32.xlu0 %v2367
    %v2404 = vpop.xlane.xlu0 %2403
    %2405 = vadd.xlane.f32.xlu0 %v2368
    %v2406 = vpop.xlane.xlu0 %2405
    %2407 = vadd.xlane.f32.xlu0 %v2369
    %v2408 = vpop.xlane.xlu0 %2407
    %2409 = vadd.xlane.f32.xlu0 %v2370
    %v2410 = vpop.xlane.xlu0 %2409
    %2411 = vadd.xlane.f32.xlu0 %v2371
    %v2412 = vpop.xlane.xlu0 %2411
    %2413 = vadd.xlane.f32.xlu0 %v2372
    %v2414 = vpop.xlane.xlu0 %2413
    %2415 = vadd.xlane.f32.xlu0 %v2373
    %v2416 = vpop.xlane.xlu0 %2415
    %2417 = vadd.xlane.f32.xlu0 %v2374
    %v2418 = vpop.xlane.xlu0 %2417
    %2419 = vadd.xlane.f32.xlu0 %v2375
    %v2420 = vpop.xlane.xlu0 %2419
    %2421 = vadd.xlane.f32.xlu0 %v2376
    %v2422 = vpop.xlane.xlu0 %2421
    %2423 = vadd.xlane.f32.xlu0 %v2377
    %v2424 = vpop.xlane.xlu0 %2423
    %2425 = vadd.xlane.f32.xlu0 %v2378
    %v2426 = vpop.xlane.xlu0 %2425
    %2427 = vadd.xlane.f32.xlu0 %v2379
    %v2428 = vpop.xlane.xlu0 %2427
    %2429 = vadd.xlane.f32.xlu0 %v2380
    %v2430 = vpop.xlane.xlu0 %2429
    %2431 = vadd.xlane.f32.xlu0 %v2381
    %v2432 = vpop.xlane.xlu0 %2431
    %2433 = vadd.xlane.f32.xlu0 %v2382
    %v2434 = vpop.xlane.xlu0 %2433
    %2435 = vadd.xlane.f32.xlu0 %v2383
    %v2436 = vpop.xlane.xlu0 %2435
    %2437 = vadd.xlane.f32.xlu0 %v2384
    %v2438 = vpop.xlane.xlu0 %2437
    %2439 = vadd.xlane.f32.xlu0 %v2385
    %v2440 = vpop.xlane.xlu0 %2439
    %2441 = vadd.xlane.f32.xlu0 %v2386
    %v2442 = vpop.xlane.xlu0 %2441
    %2443 = vadd.xlane.f32.xlu0 %v2387
    %v2444 = vpop.xlane.xlu0 %2443
    %2445 = vadd.xlane.f32.xlu0 %v2388
    %v2446 = vpop.xlane.xlu0 %2445
    %2447 = vadd.xlane.f32.xlu0 %v2389
    %v2448 = vpop.xlane.xlu0 %2447
    %2449 = vadd.xlane.f32.xlu0 %v2390
    %v2450 = vpop.xlane.xlu0 %2449
    %2451 = vadd.xlane.f32.xlu0 %v2391
    %v2452 = vpop.xlane.xlu0 %2451
    %2453 = vadd.xlane.f32.xlu0 %v2392
    %v2454 = vpop.xlane.xlu0 %2453
    %2455 = vadd.xlane.f32.xlu0 %v2393
    %v2456 = vpop.xlane.xlu0 %2455
    %2457 = vadd.xlane.f32.xlu0 %v2394
    %v2458 = vpop.xlane.xlu0 %2457
    %v2459 = vld [vmem:[#allocation2] sm:$0x1]
    %v2461 = vlaneseq
    %v2462 = vshrl.u32 %v2461, 7
    %v2463 = vsub.s32 0, %v2462
    %v2464 = vrot.slane %v2459, %v2463
    %2465 = vset.pattern.permute.xlu0 0
    %2466 = vperm.xlu0 %2465, %v2464
    %v2467 = vpop.permute.xlu0 %2466
    %v2469 = vadd.f32 %v2396, %v2467
    %v2470 = vadd.f32 %v2398, %v2467
    %v2471 = vadd.f32 %v2400, %v2467
    %v2472 = vadd.f32 %v2402, %v2467
    %v2473 = vadd.f32 %v2404, %v2467
    %v2474 = vadd.f32 %v2406, %v2467
    %v2475 = vadd.f32 %v2408, %v2467
    %v2476 = vadd.f32 %v2410, %v2467
    %v2477 = vadd.f32 %v2412, %v2467
    %v2478 = vadd.f32 %v2414, %v2467
    %v2479 = vadd.f32 %v2416, %v2467
    %v2480 = vadd.f32 %v2418, %v2467
    %v2481 = vadd.f32 %v2420, %v2467
    %v2482 = vadd.f32 %v2422, %v2467
    %v2483 = vadd.f32 %v2424, %v2467
    %v2484 = vadd.f32 %v2426, %v2467
    %v2485 = vadd.f32 %v2428, %v2467
    %v2486 = vadd.f32 %v2430, %v2467
    %v2487 = vadd.f32 %v2432, %v2467
    %v2488 = vadd.f32 %v2434, %v2467
    %v2489 = vadd.f32 %v2436, %v2467
    %v2490 = vadd.f32 %v2438, %v2467
    %v2491 = vadd.f32 %v2440, %v2467
    %v2492 = vadd.f32 %v2442, %v2467
    %v2493 = vadd.f32 %v2444, %v2467
    %v2494 = vadd.f32 %v2446, %v2467
    %v2495 = vadd.f32 %v2448, %v2467
    %v2496 = vadd.f32 %v2450, %v2467
    %v2497 = vadd.f32 %v2452, %v2467
    %v2498 = vadd.f32 %v2454, %v2467
    %v2499 = vadd.f32 %v2456, %v2467
    %v2500 = vadd.f32 %v2458, %v2467
    %v2533 = vlaneseq
    %v2534 = vand.u32 %v2533, 127
    %v2535 = vlaneseq
    %v2536 = vshrl.u32 %v2535, 7
    %v2537 = vsub.s32 %v2534, %v2536
    %v2538 = vrot.slane %v2469, %v2537
    %v2539 = vadd.s32 %v2534, 4294967288
    %v2540 = vlaneseq
    %v2541 = vshrl.u32 %v2540, 7
    %v2542 = vsub.s32 %v2539, %v2541
    %v2543 = vrot.slane %v2470, %v2542
    %vm2544 = vcmask 130112
    %v2545 = vsel %vm2544, %v2543, %v2538
    %v2546 = vlaneseq
    %v2547 = vshrl.u32 %v2546, 7
    %v2548 = vsub.s32 %v2534, %v2547
    %v2549 = vrot.slane %v2471, %v2548
    %v2550 = vlaneseq
    %v2551 = vshrl.u32 %v2550, 7
    %v2552 = vsub.s32 %v2539, %v2551
    %v2553 = vrot.slane %v2472, %v2552
    %v2554 = vsel %vm2544, %v2553, %v2549
    %v2555 = vlaneseq
    %v2556 = vshrl.u32 %v2555, 7
    %v2557 = vsub.s32 %v2534, %v2556
    %v2558 = vrot.slane %v2473, %v2557
    %v2559 = vlaneseq
    %v2560 = vshrl.u32 %v2559, 7
    %v2561 = vsub.s32 %v2539, %v2560
    %v2562 = vrot.slane %v2474, %v2561
    %v2563 = vsel %vm2544, %v2562, %v2558
    %v2564 = vlaneseq
    %v2565 = vshrl.u32 %v2564, 7
    %v2566 = vsub.s32 %v2534, %v2565
    %v2567 = vrot.slane %v2475, %v2566
    %v2568 = vlaneseq
    %v2569 = vshrl.u32 %v2568, 7
    %v2570 = vsub.s32 %v2539, %v2569
    %v2571 = vrot.slane %v2476, %v2570
    %v2572 = vsel %vm2544, %v2571, %v2567
    %v2573 = vlaneseq
    %v2574 = vshrl.u32 %v2573, 7
    %v2575 = vsub.s32 %v2534, %v2574
    %v2576 = vrot.slane %v2477, %v2575
    %v2577 = vlaneseq
    %v2578 = vshrl.u32 %v2577, 7
    %v2579 = vsub.s32 %v2539, %v2578
    %v2580 = vrot.slane %v2478, %v2579
    %v2581 = vsel %vm2544, %v2580, %v2576
    %v2582 = vlaneseq
    %v2583 = vshrl.u32 %v2582, 7
    %v2584 = vsub.s32 %v2534, %v2583
    %v2585 = vrot.slane %v2479, %v2584
    %v2586 = vlaneseq
    %v2587 = vshrl.u32 %v2586, 7
    %v2588 = vsub.s32 %v2539, %v2587
    %v2589 = vrot.slane %v2480, %v2588
    %v2590 = vsel %vm2544, %v2589, %v2585
    %v2591 = vlaneseq
    %v2592 = vshrl.u32 %v2591, 7
    %v2593 = vsub.s32 %v2534, %v2592
    %v2594 = vrot.slane %v2481, %v2593
    %v2595 = vlaneseq
    %v2596 = vshrl.u32 %v2595, 7
    %v2597 = vsub.s32 %v2539, %v2596
    %v2598 = vrot.slane %v2482, %v2597
    %v2599 = vsel %vm2544, %v2598, %v2594
    %v2600 = vlaneseq
    %v2601 = vshrl.u32 %v2600, 7
    %v2602 = vsub.s32 %v2534, %v2601
    %v2603 = vrot.slane %v2483, %v2602
    %v2604 = vlaneseq
    %v2605 = vshrl.u32 %v2604, 7
    %v2606 = vsub.s32 %v2539, %v2605
    %v2607 = vrot.slane %v2484, %v2606
    %v2608 = vsel %vm2544, %v2607, %v2603
    %v2609 = vlaneseq
    %v2610 = vshrl.u32 %v2609, 7
    %v2611 = vsub.s32 %v2534, %v2610
    %v2612 = vrot.slane %v2485, %v2611
    %v2613 = vlaneseq
    %v2614 = vshrl.u32 %v2613, 7
    %v2615 = vsub.s32 %v2539, %v2614
    %v2616 = vrot.slane %v2486, %v2615
    %v2617 = vsel %vm2544, %v2616, %v2612
    %v2618 = vlaneseq
    %v2619 = vshrl.u32 %v2618, 7
    %v2620 = vsub.s32 %v2534, %v2619
    %v2621 = vrot.slane %v2487, %v2620
    %v2622 = vlaneseq
    %v2623 = vshrl.u32 %v2622, 7
    %v2624 = vsub.s32 %v2539, %v2623
    %v2625 = vrot.slane %v2488, %v2624
    %v2626 = vsel %vm2544, %v2625, %v2621
    %v2627 = vlaneseq
    %v2628 = vshrl.u32 %v2627, 7
    %v2629 = vsub.s32 %v2534, %v2628
    %v2630 = vrot.slane %v2489, %v2629
    %v2631 = vlaneseq
    %v2632 = vshrl.u32 %v2631, 7
    %v2633 = vsub.s32 %v2539, %v2632
    %v2634 = vrot.slane %v2490, %v2633
    %v2635 = vsel %vm2544, %v2634, %v2630
    %v2636 = vlaneseq
    %v2637 = vshrl.u32 %v2636, 7
    %v2638 = vsub.s32 %v2534, %v2637
    %v2639 = vrot.slane %v2491, %v2638
    %v2640 = vlaneseq
    %v2641 = vshrl.u32 %v2640, 7
    %v2642 = vsub.s32 %v2539, %v2641
    %v2643 = vrot.slane %v2492, %v2642
    %v2644 = vsel %vm2544, %v2643, %v2639
    %v2645 = vlaneseq
    %v2646 = vshrl.u32 %v2645, 7
    %v2647 = vsub.s32 %v2534, %v2646
    %v2648 = vrot.slane %v2493, %v2647
    %v2649 = vlaneseq
    %v2650 = vshrl.u32 %v2649, 7
    %v2651 = vsub.s32 %v2539, %v2650
    %v2652 = vrot.slane %v2494, %v2651
    %v2653 = vsel %vm2544, %v2652, %v2648
    %v2654 = vlaneseq
    %v2655 = vshrl.u32 %v2654, 7
    %v2656 = vsub.s32 %v2534, %v2655
    %v2657 = vrot.slane %v2495, %v2656
    %v2658 = vlaneseq
    %v2659 = vshrl.u32 %v2658, 7
    %v2660 = vsub.s32 %v2539, %v2659
    %v2661 = vrot.slane %v2496, %v2660
    %v2662 = vsel %vm2544, %v2661, %v2657
    %v2663 = vlaneseq
    %v2664 = vshrl.u32 %v2663, 7
    %v2665 = vsub.s32 %v2534, %v2664
    %v2666 = vrot.slane %v2497, %v2665
    %v2667 = vlaneseq
    %v2668 = vshrl.u32 %v2667, 7
    %v2669 = vsub.s32 %v2539, %v2668
    %v2670 = vrot.slane %v2498, %v2669
    %v2671 = vsel %vm2544, %v2670, %v2666
    %v2672 = vlaneseq
    %v2673 = vshrl.u32 %v2672, 7
    %v2674 = vsub.s32 %v2534, %v2673
    %v2675 = vrot.slane %v2499, %v2674
    %v2676 = vlaneseq
    %v2677 = vshrl.u32 %v2676, 7
    %v2678 = vsub.s32 %v2539, %v2677
    %v2679 = vrot.slane %v2500, %v2678
    %v2680 = vsel %vm2544, %v2679, %v2675
    %vm2681 = vcmask 1041409
    %v2682 = vsel %vm2681, %v2554, %v2545
    %vm2683 = vcmask 1042434
    %v2684 = vsel %vm2683, %v2563, %v2682
    %vm2685 = vcmask 1043459
    %v2686 = vsel %vm2685, %v2572, %v2684
    %vm2687 = vcmask 1044484
    %v2688 = vsel %vm2687, %v2581, %v2686
    %vm2689 = vcmask 1045509
    %v2690 = vsel %vm2689, %v2590, %v2688
    %vm2691 = vcmask 1046534
    %v2692 = vsel %vm2691, %v2599, %v2690
    %vm2693 = vcmask 1047559
    %v2694 = vsel %vm2693, %v2608, %v2692
    %v2695 = vsel %vm2681, %v2626, %v2617
    %v2696 = vsel %vm2683, %v2635, %v2695
    %v2697 = vsel %vm2685, %v2644, %v2696
    %v2698 = vsel %vm2687, %v2653, %v2697
    %v2699 = vsel %vm2689, %v2662, %v2698
    %v2700 = vsel %vm2691, %v2671, %v2699
    %v2701 = vsel %vm2693, %v2680, %v2700
    %vm2704 = vcmask 130048
    %v2705 = vsel %vm2704, %v2694, -inf
    %2706 = vmax.xlane.f32.xlu0 %v2705
    %v2707 = vpop.xlane.xlu0 %2706
    %v2708 = vsel %vm2704, %v2701, -inf
    %2709 = vmax.xlane.f32.xlu0 %v2708
    %v2710 = vpop.xlane.xlu0 %2709
    %v2713 = vlaneseq
    %v2714 = vshrl.u32 %v2713, 7
    %v2715 = vsub.s32 0, %v2714
    %v2716 = vrot.slane %v2707, %v2715
    %v2717 = vlaneseq
    %v2718 = vshrl.u32 %v2717, 7
    %v2719 = vsub.s32 1, %v2718
    %v2720 = vrot.slane %v2707, %v2719
    %v2721 = vlaneseq
    %v2722 = vshrl.u32 %v2721, 7
    %v2723 = vsub.s32 2, %v2722
    %v2724 = vrot.slane %v2707, %v2723
    %v2725 = vlaneseq
    %v2726 = vshrl.u32 %v2725, 7
    %v2727 = vsub.s32 3, %v2726
    %v2728 = vrot.slane %v2707, %v2727
    %v2729 = vlaneseq
    %v2730 = vshrl.u32 %v2729, 7
    %v2731 = vsub.s32 4, %v2730
    %v2732 = vrot.slane %v2707, %v2731
    %v2733 = vlaneseq
    %v2734 = vshrl.u32 %v2733, 7
    %v2735 = vsub.s32 5, %v2734
    %v2736 = vrot.slane %v2707, %v2735
    %v2737 = vlaneseq
    %v2738 = vshrl.u32 %v2737, 7
    %v2739 = vsub.s32 6, %v2738
    %v2740 = vrot.slane %v2707, %v2739
    %v2741 = vlaneseq
    %v2742 = vshrl.u32 %v2741, 7
    %v2743 = vsub.s32 7, %v2742
    %v2744 = vrot.slane %v2707, %v2743
    %v2745 = vlaneseq
    %v2746 = vshrl.u32 %v2745, 7
    %v2747 = vsub.s32 0, %v2746
    %v2748 = vrot.slane %v2710, %v2747
    %v2749 = vlaneseq
    %v2750 = vshrl.u32 %v2749, 7
    %v2751 = vsub.s32 1, %v2750
    %v2752 = vrot.slane %v2710, %v2751
    %v2753 = vlaneseq
    %v2754 = vshrl.u32 %v2753, 7
    %v2755 = vsub.s32 2, %v2754
    %v2756 = vrot.slane %v2710, %v2755
    %v2757 = vlaneseq
    %v2758 = vshrl.u32 %v2757, 7
    %v2759 = vsub.s32 3, %v2758
    %v2760 = vrot.slane %v2710, %v2759
    %v2761 = vlaneseq
    %v2762 = vshrl.u32 %v2761, 7
    %v2763 = vsub.s32 4, %v2762
    %v2764 = vrot.slane %v2710, %v2763
    %v2765 = vlaneseq
    %v2766 = vshrl.u32 %v2765, 7
    %v2767 = vsub.s32 5, %v2766
    %v2768 = vrot.slane %v2710, %v2767
    %v2769 = vlaneseq
    %v2770 = vshrl.u32 %v2769, 7
    %v2771 = vsub.s32 6, %v2770
    %v2772 = vrot.slane %v2710, %v2771
    %v2773 = vlaneseq
    %v2774 = vshrl.u32 %v2773, 7
    %v2775 = vsub.s32 7, %v2774
    %v2776 = vrot.slane %v2710, %v2775
    %v2793 = vsub.f32 %v2469, %v2716
    %v2794 = vsub.f32 %v2470, %v2716
    %v2795 = vsub.f32 %v2471, %v2720
    %v2796 = vsub.f32 %v2472, %v2720
    %v2797 = vsub.f32 %v2473, %v2724
    %v2798 = vsub.f32 %v2474, %v2724
    %v2799 = vsub.f32 %v2475, %v2728
    %v2800 = vsub.f32 %v2476, %v2728
    %v2801 = vsub.f32 %v2477, %v2732
    %v2802 = vsub.f32 %v2478, %v2732
    %v2803 = vsub.f32 %v2479, %v2736
    %v2804 = vsub.f32 %v2480, %v2736
    %v2805 = vsub.f32 %v2481, %v2740
    %v2806 = vsub.f32 %v2482, %v2740
    %v2807 = vsub.f32 %v2483, %v2744
    %v2808 = vsub.f32 %v2484, %v2744
    %v2809 = vsub.f32 %v2485, %v2748
    %v2810 = vsub.f32 %v2486, %v2748
    %v2811 = vsub.f32 %v2487, %v2752
    %v2812 = vsub.f32 %v2488, %v2752
    %v2813 = vsub.f32 %v2489, %v2756
    %v2814 = vsub.f32 %v2490, %v2756
    %v2815 = vsub.f32 %v2491, %v2760
    %v2816 = vsub.f32 %v2492, %v2760
    %v2817 = vsub.f32 %v2493, %v2764
    %v2818 = vsub.f32 %v2494, %v2764
    %v2819 = vsub.f32 %v2495, %v2768
    %v2820 = vsub.f32 %v2496, %v2768
    %v2821 = vsub.f32 %v2497, %v2772
    %v2822 = vsub.f32 %v2498, %v2772
    %v2823 = vsub.f32 %v2499, %v2776
    %v2824 = vsub.f32 %v2500, %v2776
    %v2825 = vmul.f32 %v2793, 1.442695
    %v2826 = vpow.pop %v2825
    %v2827 = vmul.f32 %v2794, 1.442695
    %v2828 = vpow.pop %v2827
    %v2829 = vmul.f32 %v2795, 1.442695
    %v2830 = vpow.pop %v2829
    %v2831 = vmul.f32 %v2796, 1.442695
    %v2832 = vpow.pop %v2831
    %v2833 = vmul.f32 %v2797, 1.442695
    %v2834 = vpow.pop %v2833
    %v2835 = vmul.f32 %v2798, 1.442695
    %v2836 = vpow.pop %v2835
    %v2837 = vmul.f32 %v2799, 1.442695
    %v2838 = vpow.pop %v2837
    %v2839 = vmul.f32 %v2800, 1.442695
    %v2840 = vpow.pop %v2839
    %v2841 = vmul.f32 %v2801, 1.442695
    %v2842 = vpow.pop %v2841
    %v2843 = vmul.f32 %v2802, 1.442695
    %v2844 = vpow.pop %v2843
    %v2845 = vmul.f32 %v2803, 1.442695
    %v2846 = vpow.pop %v2845
    %v2847 = vmul.f32 %v2804, 1.442695
    %v2848 = vpow.pop %v2847
    %v2849 = vmul.f32 %v2805, 1.442695
    %v2850 = vpow.pop %v2849
    %v2851 = vmul.f32 %v2806, 1.442695
    %v2852 = vpow.pop %v2851
    %v2853 = vmul.f32 %v2807, 1.442695
    %v2854 = vpow.pop %v2853
    %v2855 = vmul.f32 %v2808, 1.442695
    %v2856 = vpow.pop %v2855
    %v2857 = vmul.f32 %v2809, 1.442695
    %v2858 = vpow.pop %v2857
    %v2859 = vmul.f32 %v2810, 1.442695
    %v2860 = vpow.pop %v2859
    %v2861 = vmul.f32 %v2811, 1.442695
    %v2862 = vpow.pop %v2861
    %v2863 = vmul.f32 %v2812, 1.442695
    %v2864 = vpow.pop %v2863
    %v2865 = vmul.f32 %v2813, 1.442695
    %v2866 = vpow.pop %v2865
    %v2867 = vmul.f32 %v2814, 1.442695
    %v2868 = vpow.pop %v2867
    %v2869 = vmul.f32 %v2815, 1.442695
    %v2870 = vpow.pop %v2869
    %v2871 = vmul.f32 %v2816, 1.442695
    %v2872 = vpow.pop %v2871
    %v2873 = vmul.f32 %v2817, 1.442695
    %v2874 = vpow.pop %v2873
    %v2875 = vmul.f32 %v2818, 1.442695
    %v2876 = vpow.pop %v2875
    %v2877 = vmul.f32 %v2819, 1.442695
    %v2878 = vpow.pop %v2877
    %v2879 = vmul.f32 %v2820, 1.442695
    %v2880 = vpow.pop %v2879
    %v2881 = vmul.f32 %v2821, 1.442695
    %v2882 = vpow.pop %v2881
    %v2883 = vmul.f32 %v2822, 1.442695
    %v2884 = vpow.pop %v2883
    %v2885 = vmul.f32 %v2823, 1.442695
    %v2886 = vpow.pop %v2885
    %v2887 = vmul.f32 %v2824, 1.442695
    %v2888 = vpow.pop %v2887
    %2921 = vset.pattern.permute.xlu0 0
    %2922 = vperm.xlu0 %2921, %v2826
    %v2923 = vpop.permute.xlu0 %2922
    %2924 = vset.pattern.permute.xlu0 0
    %2925 = vperm.xlu0 %2924, %v2828
    %v2926 = vpop.permute.xlu0 %2925
    %2927 = vset.pattern.permute.xlu0 0
    %2928 = vperm.xlu0 %2927, %v2830
    %v2929 = vpop.permute.xlu0 %2928
    %2930 = vset.pattern.permute.xlu0 0
    %2931 = vperm.xlu0 %2930, %v2832
    %v2932 = vpop.permute.xlu0 %2931
    %2933 = vset.pattern.permute.xlu0 0
    %2934 = vperm.xlu0 %2933, %v2834
    %v2935 = vpop.permute.xlu0 %2934
    %2936 = vset.pattern.permute.xlu0 0
    %2937 = vperm.xlu0 %2936, %v2836
    %v2938 = vpop.permute.xlu0 %2937
    %2939 = vset.pattern.permute.xlu0 0
    %2940 = vperm.xlu0 %2939, %v2838
    %v2941 = vpop.permute.xlu0 %2940
    %2942 = vset.pattern.permute.xlu0 0
    %2943 = vperm.xlu0 %2942, %v2840
    %v2944 = vpop.permute.xlu0 %2943
    %2945 = vset.pattern.permute.xlu0 0
    %2946 = vperm.xlu0 %2945, %v2842
    %v2947 = vpop.permute.xlu0 %2946
    %2948 = vset.pattern.permute.xlu0 0
    %2949 = vperm.xlu0 %2948, %v2844
    %v2950 = vpop.permute.xlu0 %2949
    %2951 = vset.pattern.permute.xlu0 0
    %2952 = vperm.xlu0 %2951, %v2846
    %v2953 = vpop.permute.xlu0 %2952
    %2954 = vset.pattern.permute.xlu0 0
    %2955 = vperm.xlu0 %2954, %v2848
    %v2956 = vpop.permute.xlu0 %2955
    %2957 = vset.pattern.permute.xlu0 0
    %2958 = vperm.xlu0 %2957, %v2850
    %v2959 = vpop.permute.xlu0 %2958
    %2960 = vset.pattern.permute.xlu0 0
    %2961 = vperm.xlu0 %2960, %v2852
    %v2962 = vpop.permute.xlu0 %2961
    %2963 = vset.pattern.permute.xlu0 0
    %2964 = vperm.xlu0 %2963, %v2854
    %v2965 = vpop.permute.xlu0 %2964
    %2966 = vset.pattern.permute.xlu0 0
    %2967 = vperm.xlu0 %2966, %v2856
    %v2968 = vpop.permute.xlu0 %2967
    %2969 = vset.pattern.permute.xlu0 0
    %2970 = vperm.xlu0 %2969, %v2858
    %v2971 = vpop.permute.xlu0 %2970
    %2972 = vset.pattern.permute.xlu0 0
    %2973 = vperm.xlu0 %2972, %v2860
    %v2974 = vpop.permute.xlu0 %2973
    %2975 = vset.pattern.permute.xlu0 0
    %2976 = vperm.xlu0 %2975, %v2862
    %v2977 = vpop.permute.xlu0 %2976
    %2978 = vset.pattern.permute.xlu0 0
    %2979 = vperm.xlu0 %2978, %v2864
    %v2980 = vpop.permute.xlu0 %2979
    %2981 = vset.pattern.permute.xlu0 0
    %2982 = vperm.xlu0 %2981, %v2866
    %v2983 = vpop.permute.xlu0 %2982
    %2984 = vset.pattern.permute.xlu0 0
    %2985 = vperm.xlu0 %2984, %v2868
    %v2986 = vpop.permute.xlu0 %2985
    %2987 = vset.pattern.permute.xlu0 0
    %2988 = vperm.xlu0 %2987, %v2870
    %v2989 = vpop.permute.xlu0 %2988
    %2990 = vset.pattern.permute.xlu0 0
    %2991 = vperm.xlu0 %2990, %v2872
    %v2992 = vpop.permute.xlu0 %2991
    %2993 = vset.pattern.permute.xlu0 0
    %2994 = vperm.xlu0 %2993, %v2874
    %v2995 = vpop.permute.xlu0 %2994
    %2996 = vset.pattern.permute.xlu0 0
    %2997 = vperm.xlu0 %2996, %v2876
    %v2998 = vpop.permute.xlu0 %2997
    %2999 = vset.pattern.permute.xlu0 0
    %3000 = vperm.xlu0 %2999, %v2878
    %v3001 = vpop.permute.xlu0 %3000
    %3002 = vset.pattern.permute.xlu0 0
    %3003 = vperm.xlu0 %3002, %v2880
    %v3004 = vpop.permute.xlu0 %3003
    %3005 = vset.pattern.permute.xlu0 0
    %3006 = vperm.xlu0 %3005, %v2882
    %v3007 = vpop.permute.xlu0 %3006
    %3008 = vset.pattern.permute.xlu0 0
    %3009 = vperm.xlu0 %3008, %v2884
    %v3010 = vpop.permute.xlu0 %3009
    %3011 = vset.pattern.permute.xlu0 0
    %3012 = vperm.xlu0 %3011, %v2886
    %v3013 = vpop.permute.xlu0 %3012
    %3014 = vset.pattern.permute.xlu0 0
    %3015 = vperm.xlu0 %3014, %v2888
    %v3016 = vpop.permute.xlu0 %3015
    %v3017 = vlaneseq
    %v3018 = vshrl.u32 %v3017, 7
    %v3019 = vsub.s32 %v2534, %v3018
    %v3020 = vrot.slane %v2923, %v3019
    %v3021 = vlaneseq
    %v3022 = vshrl.u32 %v3021, 7
    %v3023 = vsub.s32 %v2539, %v3022
    %v3024 = vrot.slane %v2926, %v3023
    %v3025 = vsel %vm2544, %v3024, %v3020
    %v3026 = vlaneseq
    %v3027 = vshrl.u32 %v3026, 7
    %v3028 = vsub.s32 %v2534, %v3027
    %v3029 = vrot.slane %v2929, %v3028
    %v3030 = vlaneseq
    %v3031 = vshrl.u32 %v3030, 7
    %v3032 = vsub.s32 %v2539, %v3031
    %v3033 = vrot.slane %v2932, %v3032
    %v3034 = vsel %vm2544, %v3033, %v3029
    %v3035 = vlaneseq
    %v3036 = vshrl.u32 %v3035, 7
    %v3037 = vsub.s32 %v2534, %v3036
    %v3038 = vrot.slane %v2935, %v3037
    %v3039 = vlaneseq
    %v3040 = vshrl.u32 %v3039, 7
    %v3041 = vsub.s32 %v2539, %v3040
    %v3042 = vrot.slane %v2938, %v3041
    %v3043 = vsel %vm2544, %v3042, %v3038
    %v3044 = vlaneseq
    %v3045 = vshrl.u32 %v3044, 7
    %v3046 = vsub.s32 %v2534, %v3045
    %v3047 = vrot.slane %v2941, %v3046
    %v3048 = vlaneseq
    %v3049 = vshrl.u32 %v3048, 7
    %v3050 = vsub.s32 %v2539, %v3049
    %v3051 = vrot.slane %v2944, %v3050
    %v3052 = vsel %vm2544, %v3051, %v3047
    %v3053 = vlaneseq
    %v3054 = vshrl.u32 %v3053, 7
    %v3055 = vsub.s32 %v2534, %v3054
    %v3056 = vrot.slane %v2947, %v3055
    %v3057 = vlaneseq
    %v3058 = vshrl.u32 %v3057, 7
    %v3059 = vsub.s32 %v2539, %v3058
    %v3060 = vrot.slane %v2950, %v3059
    %v3061 = vsel %vm2544, %v3060, %v3056
    %v3062 = vlaneseq
    %v3063 = vshrl.u32 %v3062, 7
    %v3064 = vsub.s32 %v2534, %v3063
    %v3065 = vrot.slane %v2953, %v3064
    %v3066 = vlaneseq
    %v3067 = vshrl.u32 %v3066, 7
    %v3068 = vsub.s32 %v2539, %v3067
    %v3069 = vrot.slane %v2956, %v3068
    %v3070 = vsel %vm2544, %v3069, %v3065
    %v3071 = vlaneseq
    %v3072 = vshrl.u32 %v3071, 7
    %v3073 = vsub.s32 %v2534, %v3072
    %v3074 = vrot.slane %v2959, %v3073
    %v3075 = vlaneseq
    %v3076 = vshrl.u32 %v3075, 7
    %v3077 = vsub.s32 %v2539, %v3076
    %v3078 = vrot.slane %v2962, %v3077
    %v3079 = vsel %vm2544, %v3078, %v3074
    %v3080 = vlaneseq
    %v3081 = vshrl.u32 %v3080, 7
    %v3082 = vsub.s32 %v2534, %v3081
    %v3083 = vrot.slane %v2965, %v3082
    %v3084 = vlaneseq
    %v3085 = vshrl.u32 %v3084, 7
    %v3086 = vsub.s32 %v2539, %v3085
    %v3087 = vrot.slane %v2968, %v3086
    %v3088 = vsel %vm2544, %v3087, %v3083
    %v3089 = vlaneseq
    %v3090 = vshrl.u32 %v3089, 7
    %v3091 = vsub.s32 %v2534, %v3090
    %v3092 = vrot.slane %v2971, %v3091
    %v3093 = vlaneseq
    %v3094 = vshrl.u32 %v3093, 7
    %v3095 = vsub.s32 %v2539, %v3094
    %v3096 = vrot.slane %v2974, %v3095
    %v3097 = vsel %vm2544, %v3096, %v3092
    %v3098 = vlaneseq
    %v3099 = vshrl.u32 %v3098, 7
    %v3100 = vsub.s32 %v2534, %v3099
    %v3101 = vrot.slane %v2977, %v3100
    %v3102 = vlaneseq
    %v3103 = vshrl.u32 %v3102, 7
    %v3104 = vsub.s32 %v2539, %v3103
    %v3105 = vrot.slane %v2980, %v3104
    %v3106 = vsel %vm2544, %v3105, %v3101
    %v3107 = vlaneseq
    %v3108 = vshrl.u32 %v3107, 7
    %v3109 = vsub.s32 %v2534, %v3108
    %v3110 = vrot.slane %v2983, %v3109
    %v3111 = vlaneseq
    %v3112 = vshrl.u32 %v3111, 7
    %v3113 = vsub.s32 %v2539, %v3112
    %v3114 = vrot.slane %v2986, %v3113
    %v3115 = vsel %vm2544, %v3114, %v3110
    %v3116 = vlaneseq
    %v3117 = vshrl.u32 %v3116, 7
    %v3118 = vsub.s32 %v2534, %v3117
    %v3119 = vrot.slane %v2989, %v3118
    %v3120 = vlaneseq
    %v3121 = vshrl.u32 %v3120, 7
    %v3122 = vsub.s32 %v2539, %v3121
    %v3123 = vrot.slane %v2992, %v3122
    %v3124 = vsel %vm2544, %v3123, %v3119
    %v3125 = vlaneseq
    %v3126 = vshrl.u32 %v3125, 7
    %v3127 = vsub.s32 %v2534, %v3126
    %v3128 = vrot.slane %v2995, %v3127
    %v3129 = vlaneseq
    %v3130 = vshrl.u32 %v3129, 7
    %v3131 = vsub.s32 %v2539, %v3130
    %v3132 = vrot.slane %v2998, %v3131
    %v3133 = vsel %vm2544, %v3132, %v3128
    %v3134 = vlaneseq
    %v3135 = vshrl.u32 %v3134, 7
    %v3136 = vsub.s32 %v2534, %v3135
    %v3137 = vrot.slane %v3001, %v3136
    %v3138 = vlaneseq
    %v3139 = vshrl.u32 %v3138, 7
    %v3140 = vsub.s32 %v2539, %v3139
    %v3141 = vrot.slane %v3004, %v3140
    %v3142 = vsel %vm2544, %v3141, %v3137
    %v3143 = vlaneseq
    %v3144 = vshrl.u32 %v3143, 7
    %v3145 = vsub.s32 %v2534, %v3144
    %v3146 = vrot.slane %v3007, %v3145
    %v3147 = vlaneseq
    %v3148 = vshrl.u32 %v3147, 7
    %v3149 = vsub.s32 %v2539, %v3148
    %v3150 = vrot.slane %v3010, %v3149
    %v3151 = vsel %vm2544, %v3150, %v3146
    %v3152 = vlaneseq
    %v3153 = vshrl.u32 %v3152, 7
    %v3154 = vsub.s32 %v2534, %v3153
    %v3155 = vrot.slane %v3013, %v3154
    %v3156 = vlaneseq
    %v3157 = vshrl.u32 %v3156, 7
    %v3158 = vsub.s32 %v2539, %v3157
    %v3159 = vrot.slane %v3016, %v3158
    %v3160 = vsel %vm2544, %v3159, %v3155
    %v3161 = vsel %vm2681, %v3034, %v3025
    %v3162 = vsel %vm2683, %v3043, %v3161
    %v3163 = vsel %vm2685, %v3052, %v3162
    %v3164 = vsel %vm2687, %v3061, %v3163
    %v3165 = vsel %vm2689, %v3070, %v3164
    %v3166 = vsel %vm2691, %v3079, %v3165
    %v3167 = vsel %vm2693, %v3088, %v3166
    %v3168 = vsel %vm2681, %v3106, %v3097
    %v3169 = vsel %vm2683, %v3115, %v3168
    %v3170 = vsel %vm2685, %v3124, %v3169
    %v3171 = vsel %vm2687, %v3133, %v3170
    %v3172 = vsel %vm2689, %v3142, %v3171
    %v3173 = vsel %vm2691, %v3151, %v3172
    %v3174 = vsel %vm2693, %v3160, %v3173
    %v3177 = vsel %vm2704, %v3167, 0.0
    %3178 = vadd.xlane.f32.xlu0 %v3177
    %v3179 = vpop.xlane.xlu0 %3178
    %v3180 = vsel %vm2704, %v3174, 0.0
    %3181 = vadd.xlane.f32.xlu0 %v3180
    %v3182 = vpop.xlane.xlu0 %3181
    %v3183 = vlog2.pop %v3179
    %v3184 = vmul.f32 %v3183, 0.6931472
    %v3185 = vlog2.pop %v3182
    %v3186 = vmul.f32 %v3185, 0.6931472
    %v3187 = vadd.f32 %v3184, %v2707
    %v3188 = vadd.f32 %v3186, %v2710
    %v3191 = vlaneseq
    %v3192 = vshrl.u32 %v3191, 7
    %v3193 = vsub.s32 0, %v3192
    %v3194 = vrot.slane %v3187, %v3193
    %v3195 = vlaneseq
    %v3196 = vshrl.u32 %v3195, 7
    %v3197 = vsub.s32 1, %v3196
    %v3198 = vrot.slane %v3187, %v3197
    %v3199 = vlaneseq
    %v3200 = vshrl.u32 %v3199, 7
    %v3201 = vsub.s32 2, %v3200
    %v3202 = vrot.slane %v3187, %v3201
    %v3203 = vlaneseq
    %v3204 = vshrl.u32 %v3203, 7
    %v3205 = vsub.s32 3, %v3204
    %v3206 = vrot.slane %v3187, %v3205
    %v3207 = vlaneseq
    %v3208 = vshrl.u32 %v3207, 7
    %v3209 = vsub.s32 4, %v3208
    %v3210 = vrot.slane %v3187, %v3209
    %v3211 = vlaneseq
    %v3212 = vshrl.u32 %v3211, 7
    %v3213 = vsub.s32 5, %v3212
    %v3214 = vrot.slane %v3187, %v3213
    %v3215 = vlaneseq
    %v3216 = vshrl.u32 %v3215, 7
    %v3217 = vsub.s32 6, %v3216
    %v3218 = vrot.slane %v3187, %v3217
    %v3219 = vlaneseq
    %v3220 = vshrl.u32 %v3219, 7
    %v3221 = vsub.s32 7, %v3220
    %v3222 = vrot.slane %v3187, %v3221
    %v3223 = vlaneseq
    %v3224 = vshrl.u32 %v3223, 7
    %v3225 = vsub.s32 0, %v3224
    %v3226 = vrot.slane %v3188, %v3225
    %v3227 = vlaneseq
    %v3228 = vshrl.u32 %v3227, 7
    %v3229 = vsub.s32 1, %v3228
    %v3230 = vrot.slane %v3188, %v3229
    %v3231 = vlaneseq
    %v3232 = vshrl.u32 %v3231, 7
    %v3233 = vsub.s32 2, %v3232
    %v3234 = vrot.slane %v3188, %v3233
    %v3235 = vlaneseq
    %v3236 = vshrl.u32 %v3235, 7
    %v3237 = vsub.s32 3, %v3236
    %v3238 = vrot.slane %v3188, %v3237
    %v3239 = vlaneseq
    %v3240 = vshrl.u32 %v3239, 7
    %v3241 = vsub.s32 4, %v3240
    %v3242 = vrot.slane %v3188, %v3241
    %v3243 = vlaneseq
    %v3244 = vshrl.u32 %v3243, 7
    %v3245 = vsub.s32 5, %v3244
    %v3246 = vrot.slane %v3188, %v3245
    %v3247 = vlaneseq
    %v3248 = vshrl.u32 %v3247, 7
    %v3249 = vsub.s32 6, %v3248
    %v3250 = vrot.slane %v3188, %v3249
    %v3251 = vlaneseq
    %v3252 = vshrl.u32 %v3251, 7
    %v3253 = vsub.s32 7, %v3252
    %v3254 = vrot.slane %v3188, %v3253
    %v3271 = vsub.f32 %v2469, %v3194
    %v3272 = vsub.f32 %v2470, %v3194
    %v3273 = vsub.f32 %v2471, %v3198
    %v3274 = vsub.f32 %v2472, %v3198
    %v3275 = vsub.f32 %v2473, %v3202
    %v3276 = vsub.f32 %v2474, %v3202
    %v3277 = vsub.f32 %v2475, %v3206
    %v3278 = vsub.f32 %v2476, %v3206
    %v3279 = vsub.f32 %v2477, %v3210
    %v3280 = vsub.f32 %v2478, %v3210
    %v3281 = vsub.f32 %v2479, %v3214
    %v3282 = vsub.f32 %v2480, %v3214
    %v3283 = vsub.f32 %v2481, %v3218
    %v3284 = vsub.f32 %v2482, %v3218
    %v3285 = vsub.f32 %v2483, %v3222
    %v3286 = vsub.f32 %v2484, %v3222
    %v3287 = vsub.f32 %v2485, %v3226
    %v3288 = vsub.f32 %v2486, %v3226
    %v3289 = vsub.f32 %v2487, %v3230
    %v3290 = vsub.f32 %v2488, %v3230
    %v3291 = vsub.f32 %v2489, %v3234
    %v3292 = vsub.f32 %v2490, %v3234
    %v3293 = vsub.f32 %v2491, %v3238
    %v3294 = vsub.f32 %v2492, %v3238
    %v3295 = vsub.f32 %v2493, %v3242
    %v3296 = vsub.f32 %v2494, %v3242
    %v3297 = vsub.f32 %v2495, %v3246
    %v3298 = vsub.f32 %v2496, %v3246
    %v3299 = vsub.f32 %v2497, %v3250
    %v3300 = vsub.f32 %v2498, %v3250
    %v3301 = vsub.f32 %v2499, %v3254
    %v3302 = vsub.f32 %v2500, %v3254
    %3335 = vset.pattern.permute.xlu0 0
    %3336 = vperm.xlu0 %3335, %v3271
    %v3337 = vpop.permute.xlu0 %3336
    %3338 = vset.pattern.permute.xlu0 0
    %3339 = vperm.xlu0 %3338, %v3272
    %v3340 = vpop.permute.xlu0 %3339
    %3341 = vset.pattern.permute.xlu0 0
    %3342 = vperm.xlu0 %3341, %v3273
    %v3343 = vpop.permute.xlu0 %3342
    %3344 = vset.pattern.permute.xlu0 0
    %3345 = vperm.xlu0 %3344, %v3274
    %v3346 = vpop.permute.xlu0 %3345
    %3347 = vset.pattern.permute.xlu0 0
    %3348 = vperm.xlu0 %3347, %v3275
    %v3349 = vpop.permute.xlu0 %3348
    %3350 = vset.pattern.permute.xlu0 0
    %3351 = vperm.xlu0 %3350, %v3276
    %v3352 = vpop.permute.xlu0 %3351
    %3353 = vset.pattern.permute.xlu0 0
    %3354 = vperm.xlu0 %3353, %v3277
    %v3355 = vpop.permute.xlu0 %3354
    %3356 = vset.pattern.permute.xlu0 0
    %3357 = vperm.xlu0 %3356, %v3278
    %v3358 = vpop.permute.xlu0 %3357
    %3359 = vset.pattern.permute.xlu0 0
    %3360 = vperm.xlu0 %3359, %v3279
    %v3361 = vpop.permute.xlu0 %3360
    %3362 = vset.pattern.permute.xlu0 0
    %3363 = vperm.xlu0 %3362, %v3280
    %v3364 = vpop.permute.xlu0 %3363
    %3365 = vset.pattern.permute.xlu0 0
    %3366 = vperm.xlu0 %3365, %v3281
    %v3367 = vpop.permute.xlu0 %3366
    %3368 = vset.pattern.permute.xlu0 0
    %3369 = vperm.xlu0 %3368, %v3282
    %v3370 = vpop.permute.xlu0 %3369
    %3371 = vset.pattern.permute.xlu0 0
    %3372 = vperm.xlu0 %3371, %v3283
    %v3373 = vpop.permute.xlu0 %3372
    %3374 = vset.pattern.permute.xlu0 0
    %3375 = vperm.xlu0 %3374, %v3284
    %v3376 = vpop.permute.xlu0 %3375
    %3377 = vset.pattern.permute.xlu0 0
    %3378 = vperm.xlu0 %3377, %v3285
    %v3379 = vpop.permute.xlu0 %3378
    %3380 = vset.pattern.permute.xlu0 0
    %3381 = vperm.xlu0 %3380, %v3286
    %v3382 = vpop.permute.xlu0 %3381
    %3383 = vset.pattern.permute.xlu0 0
    %3384 = vperm.xlu0 %3383, %v3287
    %v3385 = vpop.permute.xlu0 %3384
    %3386 = vset.pattern.permute.xlu0 0
    %3387 = vperm.xlu0 %3386, %v3288
    %v3388 = vpop.permute.xlu0 %3387
    %3389 = vset.pattern.permute.xlu0 0
    %3390 = vperm.xlu0 %3389, %v3289
    %v3391 = vpop.permute.xlu0 %3390
    %3392 = vset.pattern.permute.xlu0 0
    %3393 = vperm.xlu0 %3392, %v3290
    %v3394 = vpop.permute.xlu0 %3393
    %3395 = vset.pattern.permute.xlu0 0
    %3396 = vperm.xlu0 %3395, %v3291
    %v3397 = vpop.permute.xlu0 %3396
    %3398 = vset.pattern.permute.xlu0 0
    %3399 = vperm.xlu0 %3398, %v3292
    %v3400 = vpop.permute.xlu0 %3399
    %3401 = vset.pattern.permute.xlu0 0
    %3402 = vperm.xlu0 %3401, %v3293
    %v3403 = vpop.permute.xlu0 %3402
    %3404 = vset.pattern.permute.xlu0 0
    %3405 = vperm.xlu0 %3404, %v3294
    %v3406 = vpop.permute.xlu0 %3405
    %3407 = vset.pattern.permute.xlu0 0
    %3408 = vperm.xlu0 %3407, %v3295
    %v3409 = vpop.permute.xlu0 %3408
    %3410 = vset.pattern.permute.xlu0 0
    %3411 = vperm.xlu0 %3410, %v3296
    %v3412 = vpop.permute.xlu0 %3411
    %3413 = vset.pattern.permute.xlu0 0
    %3414 = vperm.xlu0 %3413, %v3297
    %v3415 = vpop.permute.xlu0 %3414
    %3416 = vset.pattern.permute.xlu0 0
    %3417 = vperm.xlu0 %3416, %v3298
    %v3418 = vpop.permute.xlu0 %3417
    %3419 = vset.pattern.permute.xlu0 0
    %3420 = vperm.xlu0 %3419, %v3299
    %v3421 = vpop.permute.xlu0 %3420
    %3422 = vset.pattern.permute.xlu0 0
    %3423 = vperm.xlu0 %3422, %v3300
    %v3424 = vpop.permute.xlu0 %3423
    %3425 = vset.pattern.permute.xlu0 0
    %3426 = vperm.xlu0 %3425, %v3301
    %v3427 = vpop.permute.xlu0 %3426
    %3428 = vset.pattern.permute.xlu0 0
    %3429 = vperm.xlu0 %3428, %v3302
    %v3430 = vpop.permute.xlu0 %3429
    %v3431 = vlaneseq
    %v3432 = vshrl.u32 %v3431, 7
    %v3433 = vsub.s32 %v2534, %v3432
    %v3434 = vrot.slane %v3337, %v3433
    %v3435 = vlaneseq
    %v3436 = vshrl.u32 %v3435, 7
    %v3437 = vsub.s32 %v2539, %v3436
    %v3438 = vrot.slane %v3340, %v3437
    %v3439 = vsel %vm2544, %v3438, %v3434
    %v3440 = vlaneseq
    %v3441 = vshrl.u32 %v3440, 7
    %v3442 = vsub.s32 %v2534, %v3441
    %v3443 = vrot.slane %v3343, %v3442
    %v3444 = vlaneseq
    %v3445 = vshrl.u32 %v3444, 7
    %v3446 = vsub.s32 %v2539, %v3445
    %v3447 = vrot.slane %v3346, %v3446
    %v3448 = vsel %vm2544, %v3447, %v3443
    %v3449 = vlaneseq
    %v3450 = vshrl.u32 %v3449, 7
    %v3451 = vsub.s32 %v2534, %v3450
    %v3452 = vrot.slane %v3349, %v3451
    %v3453 = vlaneseq
    %v3454 = vshrl.u32 %v3453, 7
    %v3455 = vsub.s32 %v2539, %v3454
    %v3456 = vrot.slane %v3352, %v3455
    %v3457 = vsel %vm2544, %v3456, %v3452
    %v3458 = vlaneseq
    %v3459 = vshrl.u32 %v3458, 7
    %v3460 = vsub.s32 %v2534, %v3459
    %v3461 = vrot.slane %v3355, %v3460
    %v3462 = vlaneseq
    %v3463 = vshrl.u32 %v3462, 7
    %v3464 = vsub.s32 %v2539, %v3463
    %v3465 = vrot.slane %v3358, %v3464
    %v3466 = vsel %vm2544, %v3465, %v3461
    %v3467 = vlaneseq
    %v3468 = vshrl.u32 %v3467, 7
    %v3469 = vsub.s32 %v2534, %v3468
    %v3470 = vrot.slane %v3361, %v3469
    %v3471 = vlaneseq
    %v3472 = vshrl.u32 %v3471, 7
    %v3473 = vsub.s32 %v2539, %v3472
    %v3474 = vrot.slane %v3364, %v3473
    %v3475 = vsel %vm2544, %v3474, %v3470
    %v3476 = vlaneseq
    %v3477 = vshrl.u32 %v3476, 7
    %v3478 = vsub.s32 %v2534, %v3477
    %v3479 = vrot.slane %v3367, %v3478
    %v3480 = vlaneseq
    %v3481 = vshrl.u32 %v3480, 7
    %v3482 = vsub.s32 %v2539, %v3481
    %v3483 = vrot.slane %v3370, %v3482
    %v3484 = vsel %vm2544, %v3483, %v3479
    %v3485 = vlaneseq
    %v3486 = vshrl.u32 %v3485, 7
    %v3487 = vsub.s32 %v2534, %v3486
    %v3488 = vrot.slane %v3373, %v3487
    %v3489 = vlaneseq
    %v3490 = vshrl.u32 %v3489, 7
    %v3491 = vsub.s32 %v2539, %v3490
    %v3492 = vrot.slane %v3376, %v3491
    %v3493 = vsel %vm2544, %v3492, %v3488
    %v3494 = vlaneseq
    %v3495 = vshrl.u32 %v3494, 7
    %v3496 = vsub.s32 %v2534, %v3495
    %v3497 = vrot.slane %v3379, %v3496
    %v3498 = vlaneseq
    %v3499 = vshrl.u32 %v3498, 7
    %v3500 = vsub.s32 %v2539, %v3499
    %v3501 = vrot.slane %v3382, %v3500
    %v3502 = vsel %vm2544, %v3501, %v3497
    %v3503 = vlaneseq
    %v3504 = vshrl.u32 %v3503, 7
    %v3505 = vsub.s32 %v2534, %v3504
    %v3506 = vrot.slane %v3385, %v3505
    %v3507 = vlaneseq
    %v3508 = vshrl.u32 %v3507, 7
    %v3509 = vsub.s32 %v2539, %v3508
    %v3510 = vrot.slane %v3388, %v3509
    %v3511 = vsel %vm2544, %v3510, %v3506
    %v3512 = vlaneseq
    %v3513 = vshrl.u32 %v3512, 7
    %v3514 = vsub.s32 %v2534, %v3513
    %v3515 = vrot.slane %v3391, %v3514
    %v3516 = vlaneseq
    %v3517 = vshrl.u32 %v3516, 7
    %v3518 = vsub.s32 %v2539, %v3517
    %v3519 = vrot.slane %v3394, %v3518
    %v3520 = vsel %vm2544, %v3519, %v3515
    %v3521 = vlaneseq
    %v3522 = vshrl.u32 %v3521, 7
    %v3523 = vsub.s32 %v2534, %v3522
    %v3524 = vrot.slane %v3397, %v3523
    %v3525 = vlaneseq
    %v3526 = vshrl.u32 %v3525, 7
    %v3527 = vsub.s32 %v2539, %v3526
    %v3528 = vrot.slane %v3400, %v3527
    %v3529 = vsel %vm2544, %v3528, %v3524
    %v3530 = vlaneseq
    %v3531 = vshrl.u32 %v3530, 7
    %v3532 = vsub.s32 %v2534, %v3531
    %v3533 = vrot.slane %v3403, %v3532
    %v3534 = vlaneseq
    %v3535 = vshrl.u32 %v3534, 7
    %v3536 = vsub.s32 %v2539, %v3535
    %v3537 = vrot.slane %v3406, %v3536
    %v3538 = vsel %vm2544, %v3537, %v3533
    %v3539 = vlaneseq
    %v3540 = vshrl.u32 %v3539, 7
    %v3541 = vsub.s32 %v2534, %v3540
    %v3542 = vrot.slane %v3409, %v3541
    %v3543 = vlaneseq
    %v3544 = vshrl.u32 %v3543, 7
    %v3545 = vsub.s32 %v2539, %v3544
    %v3546 = vrot.slane %v3412, %v3545
    %v3547 = vsel %vm2544, %v3546, %v3542
    %v3548 = vlaneseq
    %v3549 = vshrl.u32 %v3548, 7
    %v3550 = vsub.s32 %v2534, %v3549
    %v3551 = vrot.slane %v3415, %v3550
    %v3552 = vlaneseq
    %v3553 = vshrl.u32 %v3552, 7
    %v3554 = vsub.s32 %v2539, %v3553
    %v3555 = vrot.slane %v3418, %v3554
    %v3556 = vsel %vm2544, %v3555, %v3551
    %v3557 = vlaneseq
    %v3558 = vshrl.u32 %v3557, 7
    %v3559 = vsub.s32 %v2534, %v3558
    %v3560 = vrot.slane %v3421, %v3559
    %v3561 = vlaneseq
    %v3562 = vshrl.u32 %v3561, 7
    %v3563 = vsub.s32 %v2539, %v3562
    %v3564 = vrot.slane %v3424, %v3563
    %v3565 = vsel %vm2544, %v3564, %v3560
    %v3566 = vlaneseq
    %v3567 = vshrl.u32 %v3566, 7
    %v3568 = vsub.s32 %v2534, %v3567
    %v3569 = vrot.slane %v3427, %v3568
    %v3570 = vlaneseq
    %v3571 = vshrl.u32 %v3570, 7
    %v3572 = vsub.s32 %v2539, %v3571
    %v3573 = vrot.slane %v3430, %v3572
    %v3574 = vsel %vm2544, %v3573, %v3569
    %v3575 = vsel %vm2681, %v3448, %v3439
    %v3576 = vsel %vm2683, %v3457, %v3575
    %v3577 = vsel %vm2685, %v3466, %v3576
    %v3578 = vsel %vm2687, %v3475, %v3577
    %v3579 = vsel %vm2689, %v3484, %v3578
    %v3580 = vsel %vm2691, %v3493, %v3579
    %v3581 = vsel %vm2693, %v3502, %v3580
    %v3582 = vsel %vm2681, %v3520, %v3511
    %v3583 = vsel %vm2683, %v3529, %v3582
    %v3584 = vsel %vm2685, %v3538, %v3583
    %v3585 = vsel %vm2687, %v3547, %v3584
    %v3586 = vsel %vm2689, %v3556, %v3585
    %v3587 = vsel %vm2691, %v3565, %v3586
    %v3588 = vsel %vm2693, %v3574, %v3587
    %3591 = vst.msk [vmem:[#allocation8] sm:$0xff] %vm2704, %v3581
    %3592 = vst.msk [vmem:[#allocation8 + $0x8] sm:$0xff] %vm2704, %v3588
    // Predicated region
    $region50: #{tpu_custom_call.1} parent=1 // pred_check
      _
    $region51: #{tpu_custom_call.1} parent=1 // pred_check_branch
      %3594 = sbr.rel (0) target = $region53
    $region52: #{tpu_custom_call.1} parent=1 // pred_region
      %s3596 = ssub.s32 256, 256
      %3597 = vsyncadd [#allocation5], %s3596
      %s3598 = sshll.u32 [#allocation8], 4
      %s3599 = int_to_ptr.vmem [resolvable:$true] %s3598
      %3604 = dma.vmem_to_hbm [thread:$0]  %s3599, 256, %s10, [#allocation5], 128, 128, 8
    $region53: #{tpu_custom_call.1} parent=1 // pred_fallthru
      _
    // Predicated region
    $region54: #{tpu_custom_call.1} parent=1 // pred_check
      _
    $region55: #{tpu_custom_call.1} parent=1 // pred_check_branch
      %3606 = sbr.rel (0) target = $region57
    $region56: #{tpu_custom_call.1} parent=1 // pred_region
      %3607 = dma.done [#allocation5], 256
    $region57: #{tpu_custom_call.1} parent=1 // pred_fallthru
      _
    %3608 = vsyncpa [#allocation4], 1
    %3609 = vsyncpa [#allocation7], 1
    %3610 = vsyncpa [#allocation5], 1

</llo_original>
